<compile_context>
chip_gen: v5e
topology: v5e:2x2
jax: 0.10.0
libtpu: 0.0.40
codegen_flags: <defaults>
</compile_context>

<pallas_src>
import functools

import jax
import jax.numpy as jnp
from jax.experimental import pallas as pl
from jax.experimental.pallas import tpu as pltpu


def _round_up(x, m):
    return (x + m - 1) // m * m


def _pad_gate_matrix(w, rows_pad, h, h_pad):
    """[rows, 4*h] -> [rows_pad, 4*h_pad]; each gate's columns zero-padded to its own
    lane-aligned h_pad slot (keeps PyTorch (i,f,g,o) ordering)."""
    rows = w.shape[0]
    w4 = w.reshape(rows, 4, h)
    w4 = jnp.pad(w4, ((0, rows_pad - rows), (0, 0), (0, h_pad - h)))
    return w4.reshape(rows_pad, 4 * h_pad)


def _sigmoid(x):
    # sigmoid(x) == 0.5 * (tanh(x/2) + 1): 1 EUP push + VPU fma per gate instead of a
    # possible exp + reciprocal lowering (2 EUP pushes). Mathematically exact.
    return 0.5 * (jnp.tanh(0.5 * x) + 1.0)


def _vmem_limit_bytes():
    """~80% of per-core VMEM => ~100 MiB on v5e/v6e (128 MiB), ~51 MiB on v7x (64 MiB)."""
    try:
        cap = int(pltpu.get_tpu_info().vmem_capacity_bytes)
    except Exception:
        cap = 64 * 1024 * 1024          # conservative fallback (fits every generation)
    return min(int(cap * 0.8), 110 * 1024 * 1024)


def _num_tensorcores_per_chip():
    """v7x has 2 TensorCores per chip; use it to decide whether to split the batch."""
    try:
        kind = jax.devices()[0].device_kind.lower()
    except Exception:
        return 1
    return 2 if "v7" in kind else 1


def _pick_t_blk(seq_len, b_tile, e_p, h_p, o_p, vmem_limit, t_blk_max=32):
    """Largest power-of-two time block (<= t_blk_max) whose VMEM footprint fits."""
    # Constant blocks, budgeted at 2 buffers even though we request Buffered(1).
    fixed = 2 * (e_p * 4 * h_p * 2       # W_ih bf16
                 + h_p * 4 * h_p * 2     # W_hh bf16
                 + 4 * h_p * 4           # bias f32
                 + h_p * o_p * 2         # W_fc bf16
                 + o_p * 4)              # b_fc f32
    fixed += 2 * b_tile * o_p * 4        # output block (double-buffered)
    fixed += 2 * b_tile * h_p * 4        # h / c scratch
    budget = int(vmem_limit * 0.85) - fixed
    t_blk = t_blk_max
    while t_blk > 1:
        per_block = (2 * t_blk * b_tile * e_p * 2       # emb block, double-buffered bf16
                     + t_blk * b_tile * 4 * h_p * 4)    # gates_x scratch f32
        if per_block <= budget:
            break
        t_blk //= 2
    # Don't make the time block (much) longer than the sequence itself.
    return max(1, min(t_blk, _round_up(seq_len, 8)))


# ----------------------------------------------------------------------------------
# Fused kernel: per grid step = t_blk timesteps for one batch tile.
#   1. Hoisted block input projection (one MXU matmul, no serial dependency).
#   2. Serial LSTM recurrence on VMEM-carried f32 h/c.
#   3. Final FC on the last time block.
# ----------------------------------------------------------------------------------
def _lstm_fused_kernel(emb_ref, wih_ref, whh_ref, b_ref, wfc_ref, bfc_ref,
                       out_ref, h_sc, c_sc, gx_sc,
                       *, seq_len, t_blk, b_tile, h_pad, unroll):
    """
    emb_ref : [1, t_blk*b_tile, E_p] bf16   embedded tokens (time-major rows)
    wih_ref : [E_p, 4H_p] bf16              input->gates   (constant across grid)
    whh_ref : [H_p, 4H_p] bf16              hidden->gates  (constant)
    b_ref   : [1, 4H_p]  f32                b_ih + b_hh    (constant)
    wfc_ref : [H_p, O_p] bf16               final linear   (constant)
    bfc_ref : [1, O_p]   f32                final bias     (constant)
    out_ref : [b_tile, O_p] f32             written on the last time block only
    h_sc/c_sc : VMEM f32 [b_tile, H_p]      LSTM state, persists across time blocks
    gx_sc   : VMEM f32 [t_blk*b_tile, 4H_p] block input projection
    """
    tb = pl.program_id(1)
    n_tb = pl.num_programs(1)
    H = h_pad

    @pl.when(tb == 0)
    def _():
        h_sc[...] = jnp.zeros_like(h_sc)
        c_sc[...] = jnp.zeros_like(c_sc)

    # (1) Input projection for the whole block: one MXU matmul, M = t_blk * b_tile rows.
    gx_sc[...] = (
        jnp.dot(emb_ref[0], wih_ref[...], preferred_element_type=jnp.float32)
        + b_ref[...])

    # (2) Serial recurrence over the block.
    def run_block(masked):
        def step(i, carry):
            h, c = carry                                         # f32 [b_tile, H]
            row = pl.multiple_of(i * b_tile, 8)
            gx_t = gx_sc[pl.ds(row, b_tile), :]
            gates = gx_t + jnp.dot(h.astype(jnp.bfloat16), whh_ref[...],
                                   preferred_element_type=jnp.float32)
            i_g = _sigmoid(gates[:, 0 * H:1 * H])
            f_g = _sigmoid(gates[:, 1 * H:2 * H])
            g_g = jnp.tanh(gates[:, 2 * H:3 * H])
            o_g = _sigmoid(gates[:, 3 * H:4 * H])
            c_new = f_g * c + i_g * g_g
            h_new = o_g * jnp.tanh(c_new)
            if masked:                                           # tail block only
                valid = (tb * t_blk + i) < seq_len
                h_new = jnp.where(valid, h_new, h)
                c_new = jnp.where(valid, c_new, c)
            return h_new, c_new

        h, c = jax.lax.fori_loop(0, t_blk, step, (h_sc[...], c_sc[...]),
                                 unroll=unroll)
        h_sc[...] = h
        c_sc[...] = c

    if seq_len % t_blk == 0:
        run_block(False)                  # static: no per-step masking anywhere
    else:
        @pl.when(tb != n_tb - 1)
        def _():
            run_block(False)

        @pl.when(tb == n_tb - 1)
        def _():
            run_block(True)

    # (3) Final linear layer on the last hidden state.
    @pl.when(tb == n_tb - 1)
    def _():
        out_ref[...] = (
            jnp.dot(h_sc[...].astype(jnp.bfloat16), wfc_ref[...],
                    preferred_element_type=jnp.float32)
            + bfc_ref[...]).astype(out_ref.dtype)


def rnn_forward(text, params, *, t_blk=None):
    """text: int32 [seq_len, batch]. Returns [batch, output_dim] float32."""
    emb = params["embedding"]                     # [V, E] f32
    w_ih = params["w_ih"]                         # [E, 4H] f32
    w_hh = params["w_hh"]                         # [H, 4H] f32
    b = params["b"]                               # [1, 4H] f32 (b_ih + b_hh)
    w_fc = params["w_fc"]                         # [H, O] f32
    b_fc = params["b_fc"]                         # [1, O] f32

    S, B = text.shape
    E = emb.shape[1]
    H = w_hh.shape[0]
    O = w_fc.shape[1]

    # ---- TPU-friendly padded sizes -------------------------------------------------
    E_p = _round_up(E, 128)
    H_p = _round_up(H, 128)
    O_p = _round_up(O, 128)

    B_p = _round_up(B, 8)
    if B_p > 128:
        B_p = _round_up(B_p, 128)
        b_tile = 128                              # many batch tiles -> "parallel" axis
    elif _num_tensorcores_per_chip() > 1 and B_p >= 16:
        b_tile = _round_up(B_p // 2, 8)           # 2 tiles: feed both v7x TensorCores
        B_p = 2 * b_tile
    else:
        b_tile = B_p
    n_bt = B_p // b_tile

    vmem_limit = _vmem_limit_bytes()
    if t_blk is None:
        t_blk = _pick_t_blk(S, b_tile, E_p, H_p, O_p, vmem_limit)
    t_blk = max(1, min(t_blk, _round_up(S, 8)))
    S_p = _round_up(S, t_blk)

    # Fully unroll the in-block recurrence only while the per-step gates tensor
    # ([b_tile, 4H_p] f32) stays within vreg budget; otherwise partial unroll.
    unroll = True if b_tile * 4 * H_p * 4 <= 256 * 1024 else 2

    # ---- weights: bf16 (MXU native), per-gate zero padding --------------------------
    emb_p = jnp.pad(emb, ((0, 0), (0, E_p - E))).astype(jnp.bfloat16)
    w_ih_p = _pad_gate_matrix(w_ih, E_p, H, H_p).astype(jnp.bfloat16)
    w_hh_p = _pad_gate_matrix(w_hh, H_p, H, H_p).astype(jnp.bfloat16)
    b_p = _pad_gate_matrix(b, 1, H, H_p).astype(jnp.float32)
    w_fc_p = jnp.pad(w_fc, ((0, H_p - H), (0, O_p - O))).astype(jnp.bfloat16)
    b_fc_p = jnp.pad(b_fc, ((0, 0), (0, O_p - O))).astype(jnp.float32)

    # ---- embedding gather (plain-JAX glue) -------------------------------------------
    # TODO(synk): fuse this gather into the kernel (scalar-prefetched token ids + manual
    # DMA gather, or a one-hot MXU matmul for tiny vocabs) to avoid the `embedded` HBM
    # round trip.
    embedded = jnp.take(emb_p, text, axis=0)                       # [S, B, E_p] bf16
    embedded = jnp.pad(embedded, ((0, S_p - S), (0, B_p - B), (0, 0)))
    # Lay out as [n_bt, S_p*b_tile, E_p] (time-major rows within each batch tile) so the
    # kernel can feed the MXU without any in-kernel reshape/relayout.
    embedded = embedded.reshape(S_p, n_bt, b_tile, E_p).transpose(1, 0, 2, 3)
    embedded = embedded.reshape(n_bt, S_p * b_tile, E_p)

    kernel = functools.partial(_lstm_fused_kernel, seq_len=S, t_blk=t_blk,
                               b_tile=b_tile, h_pad=H_p, unroll=unroll)

    def run(single_buffer_weights):
        def const_spec(shape):
            if single_buffer_weights:
                return pl.BlockSpec(shape, lambda bt, tt: (0, 0),
                                    pipeline_mode=pl.Buffered(1))
            return pl.BlockSpec(shape, lambda bt, tt: (0, 0))

        return pl.pallas_call(
            kernel,
            out_shape=jax.ShapeDtypeStruct((B_p, O_p), jnp.float32),
            grid_spec=pltpu.PrefetchScalarGridSpec(
                num_scalar_prefetch=0,
                grid=(n_bt, S_p // t_blk),
                in_specs=[
                    pl.BlockSpec((1, t_blk * b_tile, E_p),
                                 lambda bt, tt: (bt, tt, 0)),       # embedded tokens
                    const_spec((E_p, 4 * H_p)),                     # W_ih
                    const_spec((H_p, 4 * H_p)),                     # W_hh
                    const_spec((1, 4 * H_p)),                       # bias
                    const_spec((H_p, O_p)),                         # W_fc
                    const_spec((1, O_p)),                           # b_fc
                ],
                out_specs=pl.BlockSpec((b_tile, O_p), lambda bt, tt: (bt, 0)),
                scratch_shapes=[
                    pltpu.VMEM((b_tile, H_p), jnp.float32),              # h state
                    pltpu.VMEM((b_tile, H_p), jnp.float32),              # c state
                    pltpu.VMEM((t_blk * b_tile, 4 * H_p), jnp.float32),  # gates_x block
                ],
            ),
            compiler_params=pltpu.CompilerParams(
                dimension_semantics=("parallel", "arbitrary"),
                vmem_limit_bytes=vmem_limit),
        )(embedded, w_ih_p, w_hh_p, b_p, w_fc_p, b_fc_p)

    try:
        out_p = run(True)       # single-buffered constant weights (VMEM headroom)
    except Exception:
        # This jax build rejects pipeline_mode on pallas_call BlockSpecs; default
        # double-buffering is still correct (the VMEM budget already assumed 2 buffers).
        out_p = run(False)

    return out_p[:B, :O]


def rnn_reference(text, params):
    """Pure-JAX f32 reference (PyTorch LSTM semantics) for correctness check."""
    embedded = jnp.take(params["embedding"], text, axis=0)  # [S, B, E]
    H = params["w_hh"].shape[0]
    B = embedded.shape[1]

    def step(carry, x_t):
        h, c = carry
        gates = x_t @ params["w_ih"] + h @ params["w_hh"] + params["b"]
        i_g = jax.nn.sigmoid(gates[:, 0 * H:1 * H])
        f_g = jax.nn.sigmoid(gates[:, 1 * H:2 * H])
        g_g = jnp.tanh(gates[:, 2 * H:3 * H])
        o_g = jax.nn.sigmoid(gates[:, 3 * H:4 * H])
        c_new = f_g * c + i_g * g_g
        h_new = o_g * jnp.tanh(c_new)
        return (h_new, c_new), None

    h0 = jnp.zeros((B, H), jnp.float32)
    c0 = jnp.zeros((B, H), jnp.float32)
    (h_final, _), _ = jax.lax.scan(step, (h0, c0), embedded)
    return h_final @ params["w_fc"] + params["b_fc"]


def make_params(key, input_dim, embedding_dim, hidden_dim, output_dim):
    ks = jax.random.split(key, 7)
    scale = 1.0 / jnp.sqrt(hidden_dim)
    return {
        "embedding": jax.random.normal(ks[0], (input_dim, embedding_dim),
                                       jnp.float32) * 0.1,
        # stored transposed vs PyTorch ([in, 4H]) so kernels do x @ W directly
        "w_ih": jax.random.uniform(ks[1], (embedding_dim, 4 * hidden_dim),
                                   jnp.float32, -scale, scale),
        "w_hh": jax.random.uniform(ks[2], (hidden_dim, 4 * hidden_dim),
                                   jnp.float32, -scale, scale),
        # combined bias b_ih + b_hh
        "b": (jax.random.uniform(ks[3], (1, 4 * hidden_dim), jnp.float32,
                                 -scale, scale)
              + jax.random.uniform(ks[4], (1, 4 * hidden_dim), jnp.float32,
                                   -scale, scale)),
        "w_fc": jax.random.uniform(ks[5], (hidden_dim, output_dim),
                                   jnp.float32, -scale, scale),
        "b_fc": jax.random.uniform(ks[6], (1, output_dim), jnp.float32,
                                   -scale, scale),
    }


if __name__ == "__main__":
    INPUT_DIM = 50       # vocab size
    EMBEDDING_DIM = 32
    HIDDEN_DIM = 32
    OUTPUT_DIM = 8
    SEQ_LEN = 8
    BATCH = 2

    key = jax.random.PRNGKey(0)
    k_param, k_text = jax.random.split(key)
    params = make_params(k_param, INPUT_DIM, EMBEDDING_DIM, HIDDEN_DIM,
                         OUTPUT_DIM)
    text = jax.random.randint(k_text, (SEQ_LEN, BATCH), 0, INPUT_DIM,
                              dtype=jnp.int32)

    out = rnn_forward(text, params)
    out = jax.block_until_ready(out)

    ref = rnn_reference(text, params)
    assert out.shape == (BATCH, OUTPUT_DIM)
    max_diff = float(jnp.max(jnp.abs(out - ref)))
    assert jnp.allclose(out, ref, atol=2e-2, rtol=2e-2), (
        f"mismatch: max abs diff {max_diff}")

    print("KERNEL_OK")
</pallas_src>

<mosaic_0001>
module attributes {stable_mosaic.version = 11 : i64} {
  func.func @_lstm_fused_kernel(%arg0: i32, %arg1: i32, %arg2: memref<1x64x128xbf16, #tpu.memory_space<vmem>>, %arg3: memref<128x512xbf16, #tpu.memory_space<vmem>>, %arg4: memref<128x512xbf16, #tpu.memory_space<vmem>>, %arg5: memref<1x512xf32, #tpu.memory_space<vmem>>, %arg6: memref<128x128xbf16, #tpu.memory_space<vmem>>, %arg7: memref<1x128xf32, #tpu.memory_space<vmem>>, %arg8: memref<8x128xf32, #tpu.memory_space<vmem>>, %arg9: memref<8x128xf32, #tpu.memory_space<vmem>>, %arg10: memref<8x128xf32, #tpu.memory_space<vmem>>, %arg11: memref<64x512xf32, #tpu.memory_space<vmem>>) attributes {dimension_semantics = [#tpu.dimension_semantics<parallel>, #tpu.dimension_semantics<arbitrary>], iteration_bounds = array<i64: 1, 1>, scalar_prefetch = 0 : i64, scratch_operands = 3 : i64, tpu.core_type = #tpu.core_type<tc>, window_params = [{transform_indices = @transform_0, window_bounds = array<i64: 1, 64, 128>}, {pipeline_mode = #tpu.pipeline_mode<synchronous>, transform_indices = @transform_1, window_bounds = array<i64: 128, 512>}, {pipeline_mode = #tpu.pipeline_mode<synchronous>, transform_indices = @transform_2, window_bounds = array<i64: 128, 512>}, {pipeline_mode = #tpu.pipeline_mode<synchronous>, transform_indices = @transform_3, window_bounds = array<i64: 1, 512>}, {pipeline_mode = #tpu.pipeline_mode<synchronous>, transform_indices = @transform_4, window_bounds = array<i64: 128, 128>}, {pipeline_mode = #tpu.pipeline_mode<synchronous>, transform_indices = @transform_5, window_bounds = array<i64: 1, 128>}, {transform_indices = @transform_6, window_bounds = array<i64: 8, 128>}]} {
    %c0_i32 = arith.constant 0 : i32
    %0 = arith.cmpi eq, %arg1, %c0_i32 : i32
    %1 = arith.extui %0 : i1 to i32
    %c0_i32_0 = arith.constant 0 : i32
    %2 = arith.cmpi ne, %1, %c0_i32_0 : i32
    scf.if %2 {
      %cst_132 = arith.constant 0.000000e+00 : f32
      %330 = vector.broadcast %cst_132 : f32 to vector<8x128xf32>
      %c0_133 = arith.constant 0 : index
      %c0_134 = arith.constant 0 : index
      %331 = vector.load %arg9[%c0_133, %c0_134] : memref<8x128xf32, #tpu.memory_space<vmem>>, vector<8x128xf32>
      tpu.vector_store %arg9[%c0_133, %c0_134], %330 {strides = array<i32>} : memref<8x128xf32, #tpu.memory_space<vmem>>, vector<8x128xf32>,
      %cst_135 = arith.constant 0.000000e+00 : f32
      %332 = vector.broadcast %cst_135 : f32 to vector<8x128xf32>
      %c0_136 = arith.constant 0 : index
      %c0_137 = arith.constant 0 : index
      %333 = vector.load %arg10[%c0_136, %c0_137] : memref<8x128xf32, #tpu.memory_space<vmem>>, vector<8x128xf32>
      tpu.vector_store %arg10[%c0_136, %c0_137], %332 {strides = array<i32>} : memref<8x128xf32, #tpu.memory_space<vmem>>, vector<8x128xf32>,
    } else {
    }
    %c0 = arith.constant 0 : index
    %c0_1 = arith.constant 0 : index
    %c0_2 = arith.constant 0 : index
    %3 = vector.load %arg2[%c0, %c0_1, %c0_2] : memref<1x64x128xbf16, #tpu.memory_space<vmem>>, vector<1x64x128xbf16>
    %4 = vector.shape_cast %3 : vector<1x64x128xbf16> to vector<64x128xbf16>
    %c0_3 = arith.constant 0 : index
    %c0_4 = arith.constant 0 : index
    %5 = vector.load %arg3[%c0_3, %c0_4] : memref<128x512xbf16, #tpu.memory_space<vmem>>, vector<128x512xbf16>
    %cst = arith.constant dense<0.000000e+00> : vector<64x512xf32>
    %6 = tpu.matmul %4, %5, %cst {dimension_numbers = #tpu.dot_dimension_numbers<[1], [0], [0], [1], [0, 0, 1, 1], [], []>} : vector<64x128xbf16>, vector<128x512xbf16>, vector<64x512xf32> -> vector<64x512xf32>
    %c0_5 = arith.constant 0 : index
    %c0_6 = arith.constant 0 : index
    %7 = vector.load %arg5[%c0_5, %c0_6] : memref<1x512xf32, #tpu.memory_space<vmem>>, vector<1x512xf32>
    %8 = vector.broadcast %7 : vector<1x512xf32> to vector<64x512xf32>
    %9 = arith.addf %6, %8 : vector<64x512xf32>
    %c0_7 = arith.constant 0 : index
    %c0_8 = arith.constant 0 : index
    %10 = vector.load %arg11[%c0_7, %c0_8] : memref<64x512xf32, #tpu.memory_space<vmem>>, vector<64x512xf32>
    tpu.vector_store %arg11[%c0_7, %c0_8], %9 {strides = array<i32>} : memref<64x512xf32, #tpu.memory_space<vmem>>, vector<64x512xf32>,
    %c0_9 = arith.constant 0 : index
    %c0_10 = arith.constant 0 : index
    %11 = vector.load %arg9[%c0_9, %c0_10] : memref<8x128xf32, #tpu.memory_space<vmem>>, vector<8x128xf32>
    %c0_11 = arith.constant 0 : index
    %c0_12 = arith.constant 0 : index
    %12 = vector.load %arg10[%c0_11, %c0_12] : memref<8x128xf32, #tpu.memory_space<vmem>>, vector<8x128xf32>
    %c0_i32_13 = arith.constant 0 : i32
    %c8_i32 = arith.constant 8 : i32
    %13 = arith.muli %c0_i32_13, %c8_i32 : i32
    %14 = tpu.assume_multiple %13, 8 : i32
    %15 = arith.index_cast %14 : i32 to index
    %c0_14 = arith.constant 0 : index
    %16 = vector.load %arg11[%15, %c0_14] : memref<64x512xf32, #tpu.memory_space<vmem>>, vector<8x512xf32>
    %17 = arith.truncf %11 : vector<8x128xf32> to vector<8x128xbf16>
    %c0_15 = arith.constant 0 : index
    %c0_16 = arith.constant 0 : index
    %18 = vector.load %arg4[%c0_15, %c0_16] : memref<128x512xbf16, #tpu.memory_space<vmem>>, vector<128x512xbf16>
    %cst_17 = arith.constant dense<0.000000e+00> : vector<8x512xf32>
    %19 = tpu.matmul %17, %18, %cst_17 {dimension_numbers = #tpu.dot_dimension_numbers<[1], [0], [0], [1], [0, 0, 1, 1], [], []>} : vector<8x128xbf16>, vector<128x512xbf16>, vector<8x512xf32> -> vector<8x512xf32>
    %20 = arith.addf %16, %19 : vector<8x512xf32>
    %21 = vector.extract_strided_slice %20 {offsets = [0, 0], sizes = [8, 128], strides = [1, 1]} : vector<8x512xf32> to vector<8x128xf32>
    %cst_18 = arith.constant 5.000000e-01 : f32
    %22 = vector.broadcast %cst_18 : f32 to vector<8x128xf32>
    %23 = arith.mulf %22, %21 : vector<8x128xf32>
    %24 = math.tanh %23 : vector<8x128xf32>
    %cst_19 = arith.constant 1.000000e+00 : f32
    %25 = vector.broadcast %cst_19 : f32 to vector<8x128xf32>
    %26 = arith.addf %24, %25 : vector<8x128xf32>
    %cst_20 = arith.constant 5.000000e-01 : f32
    %27 = vector.broadcast %cst_20 : f32 to vector<8x128xf32>
    %28 = arith.mulf %27, %26 : vector<8x128xf32>
    %29 = vector.extract_strided_slice %20 {offsets = [0, 128], sizes = [8, 128], strides = [1, 1]} : vector<8x512xf32> to vector<8x128xf32>
    %cst_21 = arith.constant 5.000000e-01 : f32
    %30 = vector.broadcast %cst_21 : f32 to vector<8x128xf32>
    %31 = arith.mulf %30, %29 : vector<8x128xf32>
    %32 = math.tanh %31 : vector<8x128xf32>
    %cst_22 = arith.constant 1.000000e+00 : f32
    %33 = vector.broadcast %cst_22 : f32 to vector<8x128xf32>
    %34 = arith.addf %32, %33 : vector<8x128xf32>
    %cst_23 = arith.constant 5.000000e-01 : f32
    %35 = vector.broadcast %cst_23 : f32 to vector<8x128xf32>
    %36 = arith.mulf %35, %34 : vector<8x128xf32>
    %37 = vector.extract_strided_slice %20 {offsets = [0, 256], sizes = [8, 128], strides = [1, 1]} : vector<8x512xf32> to vector<8x128xf32>
    %38 = math.tanh %37 : vector<8x128xf32>
    %39 = vector.extract_strided_slice %20 {offsets = [0, 384], sizes = [8, 128], strides = [1, 1]} : vector<8x512xf32> to vector<8x128xf32>
    %cst_24 = arith.constant 5.000000e-01 : f32
    %40 = vector.broadcast %cst_24 : f32 to vector<8x128xf32>
    %41 = arith.mulf %40, %39 : vector<8x128xf32>
    %42 = math.tanh %41 : vector<8x128xf32>
    %cst_25 = arith.constant 1.000000e+00 : f32
    %43 = vector.broadcast %cst_25 : f32 to vector<8x128xf32>
    %44 = arith.addf %42, %43 : vector<8x128xf32>
    %cst_26 = arith.constant 5.000000e-01 : f32
    %45 = vector.broadcast %cst_26 : f32 to vector<8x128xf32>
    %46 = arith.mulf %45, %44 : vector<8x128xf32>
    %47 = arith.mulf %36, %12 : vector<8x128xf32>
    %48 = arith.mulf %28, %38 : vector<8x128xf32>
    %49 = arith.addf %47, %48 : vector<8x128xf32>
    %50 = math.tanh %49 : vector<8x128xf32>
    %51 = arith.mulf %46, %50 : vector<8x128xf32>
    %c1_i32 = arith.constant 1 : i32
    %c8_i32_27 = arith.constant 8 : i32
    %52 = arith.muli %c1_i32, %c8_i32_27 : i32
    %53 = tpu.assume_multiple %52, 8 : i32
    %54 = arith.index_cast %53 : i32 to index
    %c0_28 = arith.constant 0 : index
    %55 = vector.load %arg11[%54, %c0_28] : memref<64x512xf32, #tpu.memory_space<vmem>>, vector<8x512xf32>
    %56 = arith.truncf %51 : vector<8x128xf32> to vector<8x128xbf16>
    %c0_29 = arith.constant 0 : index
    %c0_30 = arith.constant 0 : index
    %57 = vector.load %arg4[%c0_29, %c0_30] : memref<128x512xbf16, #tpu.memory_space<vmem>>, vector<128x512xbf16>
    %cst_31 = arith.constant dense<0.000000e+00> : vector<8x512xf32>
    %58 = tpu.matmul %56, %57, %cst_31 {dimension_numbers = #tpu.dot_dimension_numbers<[1], [0], [0], [1], [0, 0, 1, 1], [], []>} : vector<8x128xbf16>, vector<128x512xbf16>, vector<8x512xf32> -> vector<8x512xf32>
    %59 = arith.addf %55, %58 : vector<8x512xf32>
    %60 = vector.extract_strided_slice %59 {offsets = [0, 0], sizes = [8, 128], strides = [1, 1]} : vector<8x512xf32> to vector<8x128xf32>
    %cst_32 = arith.constant 5.000000e-01 : f32
    %61 = vector.broadcast %cst_32 : f32 to vector<8x128xf32>
    %62 = arith.mulf %61, %60 : vector<8x128xf32>
    %63 = math.tanh %62 : vector<8x128xf32>
    %cst_33 = arith.constant 1.000000e+00 : f32
    %64 = vector.broadcast %cst_33 : f32 to vector<8x128xf32>
    %65 = arith.addf %63, %64 : vector<8x128xf32>
    %cst_34 = arith.constant 5.000000e-01 : f32
    %66 = vector.broadcast %cst_34 : f32 to vector<8x128xf32>
    %67 = arith.mulf %66, %65 : vector<8x128xf32>
    %68 = vector.extract_strided_slice %59 {offsets = [0, 128], sizes = [8, 128], strides = [1, 1]} : vector<8x512xf32> to vector<8x128xf32>
    %cst_35 = arith.constant 5.000000e-01 : f32
    %69 = vector.broadcast %cst_35 : f32 to vector<8x128xf32>
    %70 = arith.mulf %69, %68 : vector<8x128xf32>
    %71 = math.tanh %70 : vector<8x128xf32>
    %cst_36 = arith.constant 1.000000e+00 : f32
    %72 = vector.broadcast %cst_36 : f32 to vector<8x128xf32>
    %73 = arith.addf %71, %72 : vector<8x128xf32>
    %cst_37 = arith.constant 5.000000e-01 : f32
    %74 = vector.broadcast %cst_37 : f32 to vector<8x128xf32>
    %75 = arith.mulf %74, %73 : vector<8x128xf32>
    %76 = vector.extract_strided_slice %59 {offsets = [0, 256], sizes = [8, 128], strides = [1, 1]} : vector<8x512xf32> to vector<8x128xf32>
    %77 = math.tanh %76 : vector<8x128xf32>
    %78 = vector.extract_strided_slice %59 {offsets = [0, 384], sizes = [8, 128], strides = [1, 1]} : vector<8x512xf32> to vector<8x128xf32>
    %cst_38 = arith.constant 5.000000e-01 : f32
    %79 = vector.broadcast %cst_38 : f32 to vector<8x128xf32>
    %80 = arith.mulf %79, %78 : vector<8x128xf32>
    %81 = math.tanh %80 : vector<8x128xf32>
    %cst_39 = arith.constant 1.000000e+00 : f32
    %82 = vector.broadcast %cst_39 : f32 to vector<8x128xf32>
    %83 = arith.addf %81, %82 : vector<8x128xf32>
    %cst_40 = arith.constant 5.000000e-01 : f32
    %84 = vector.broadcast %cst_40 : f32 to vector<8x128xf32>
    %85 = arith.mulf %84, %83 : vector<8x128xf32>
    %86 = arith.mulf %75, %49 : vector<8x128xf32>
    %87 = arith.mulf %67, %77 : vector<8x128xf32>
    %88 = arith.addf %86, %87 : vector<8x128xf32>
    %89 = math.tanh %88 : vector<8x128xf32>
    %90 = arith.mulf %85, %89 : vector<8x128xf32>
    %c2_i32 = arith.constant 2 : i32
    %c8_i32_41 = arith.constant 8 : i32
    %91 = arith.muli %c2_i32, %c8_i32_41 : i32
    %92 = tpu.assume_multiple %91, 8 : i32
    %93 = arith.index_cast %92 : i32 to index
    %c0_42 = arith.constant 0 : index
    %94 = vector.load %arg11[%93, %c0_42] : memref<64x512xf32, #tpu.memory_space<vmem>>, vector<8x512xf32>
    %95 = arith.truncf %90 : vector<8x128xf32> to vector<8x128xbf16>
    %c0_43 = arith.constant 0 : index
    %c0_44 = arith.constant 0 : index
    %96 = vector.load %arg4[%c0_43, %c0_44] : memref<128x512xbf16, #tpu.memory_space<vmem>>, vector<128x512xbf16>
    %cst_45 = arith.constant dense<0.000000e+00> : vector<8x512xf32>
    %97 = tpu.matmul %95, %96, %cst_45 {dimension_numbers = #tpu.dot_dimension_numbers<[1], [0], [0], [1], [0, 0, 1, 1], [], []>} : vector<8x128xbf16>, vector<128x512xbf16>, vector<8x512xf32> -> vector<8x512xf32>
    %98 = arith.addf %94, %97 : vector<8x512xf32>
    %99 = vector.extract_strided_slice %98 {offsets = [0, 0], sizes = [8, 128], strides = [1, 1]} : vector<8x512xf32> to vector<8x128xf32>
    %cst_46 = arith.constant 5.000000e-01 : f32
    %100 = vector.broadcast %cst_46 : f32 to vector<8x128xf32>
    %101 = arith.mulf %100, %99 : vector<8x128xf32>
    %102 = math.tanh %101 : vector<8x128xf32>
    %cst_47 = arith.constant 1.000000e+00 : f32
    %103 = vector.broadcast %cst_47 : f32 to vector<8x128xf32>
    %104 = arith.addf %102, %103 : vector<8x128xf32>
    %cst_48 = arith.constant 5.000000e-01 : f32
    %105 = vector.broadcast %cst_48 : f32 to vector<8x128xf32>
    %106 = arith.mulf %105, %104 : vector<8x128xf32>
    %107 = vector.extract_strided_slice %98 {offsets = [0, 128], sizes = [8, 128], strides = [1, 1]} : vector<8x512xf32> to vector<8x128xf32>
    %cst_49 = arith.constant 5.000000e-01 : f32
    %108 = vector.broadcast %cst_49 : f32 to vector<8x128xf32>
    %109 = arith.mulf %108, %107 : vector<8x128xf32>
    %110 = math.tanh %109 : vector<8x128xf32>
    %cst_50 = arith.constant 1.000000e+00 : f32
    %111 = vector.broadcast %cst_50 : f32 to vector<8x128xf32>
    %112 = arith.addf %110, %111 : vector<8x128xf32>
    %cst_51 = arith.constant 5.000000e-01 : f32
    %113 = vector.broadcast %cst_51 : f32 to vector<8x128xf32>
    %114 = arith.mulf %113, %112 : vector<8x128xf32>
    %115 = vector.extract_strided_slice %98 {offsets = [0, 256], sizes = [8, 128], strides = [1, 1]} : vector<8x512xf32> to vector<8x128xf32>
    %116 = math.tanh %115 : vector<8x128xf32>
    %117 = vector.extract_strided_slice %98 {offsets = [0, 384], sizes = [8, 128], strides = [1, 1]} : vector<8x512xf32> to vector<8x128xf32>
    %cst_52 = arith.constant 5.000000e-01 : f32
    %118 = vector.broadcast %cst_52 : f32 to vector<8x128xf32>
    %119 = arith.mulf %118, %117 : vector<8x128xf32>
    %120 = math.tanh %119 : vector<8x128xf32>
    %cst_53 = arith.constant 1.000000e+00 : f32
    %121 = vector.broadcast %cst_53 : f32 to vector<8x128xf32>
    %122 = arith.addf %120, %121 : vector<8x128xf32>
    %cst_54 = arith.constant 5.000000e-01 : f32
    %123 = vector.broadcast %cst_54 : f32 to vector<8x128xf32>
    %124 = arith.mulf %123, %122 : vector<8x128xf32>
    %125 = arith.mulf %114, %88 : vector<8x128xf32>
    %126 = arith.mulf %106, %116 : vector<8x128xf32>
    %127 = arith.addf %125, %126 : vector<8x128xf32>
    %128 = math.tanh %127 : vector<8x128xf32>
    %129 = arith.mulf %124, %128 : vector<8x128xf32>
    %c3_i32 = arith.constant 3 : i32
    %c8_i32_55 = arith.constant 8 : i32
    %130 = arith.muli %c3_i32, %c8_i32_55 : i32
    %131 = tpu.assume_multiple %130, 8 : i32
    %132 = arith.index_cast %131 : i32 to index
    %c0_56 = arith.constant 0 : index
    %133 = vector.load %arg11[%132, %c0_56] : memref<64x512xf32, #tpu.memory_space<vmem>>, vector<8x512xf32>
    %134 = arith.truncf %129 : vector<8x128xf32> to vector<8x128xbf16>
    %c0_57 = arith.constant 0 : index
    %c0_58 = arith.constant 0 : index
    %135 = vector.load %arg4[%c0_57, %c0_58] : memref<128x512xbf16, #tpu.memory_space<vmem>>, vector<128x512xbf16>
    %cst_59 = arith.constant dense<0.000000e+00> : vector<8x512xf32>
    %136 = tpu.matmul %134, %135, %cst_59 {dimension_numbers = #tpu.dot_dimension_numbers<[1], [0], [0], [1], [0, 0, 1, 1], [], []>} : vector<8x128xbf16>, vector<128x512xbf16>, vector<8x512xf32> -> vector<8x512xf32>
    %137 = arith.addf %133, %136 : vector<8x512xf32>
    %138 = vector.extract_strided_slice %137 {offsets = [0, 0], sizes = [8, 128], strides = [1, 1]} : vector<8x512xf32> to vector<8x128xf32>
    %cst_60 = arith.constant 5.000000e-01 : f32
    %139 = vector.broadcast %cst_60 : f32 to vector<8x128xf32>
    %140 = arith.mulf %139, %138 : vector<8x128xf32>
    %141 = math.tanh %140 : vector<8x128xf32>
    %cst_61 = arith.constant 1.000000e+00 : f32
    %142 = vector.broadcast %cst_61 : f32 to vector<8x128xf32>
    %143 = arith.addf %141, %142 : vector<8x128xf32>
    %cst_62 = arith.constant 5.000000e-01 : f32
    %144 = vector.broadcast %cst_62 : f32 to vector<8x128xf32>
    %145 = arith.mulf %144, %143 : vector<8x128xf32>
    %146 = vector.extract_strided_slice %137 {offsets = [0, 128], sizes = [8, 128], strides = [1, 1]} : vector<8x512xf32> to vector<8x128xf32>
    %cst_63 = arith.constant 5.000000e-01 : f32
    %147 = vector.broadcast %cst_63 : f32 to vector<8x128xf32>
    %148 = arith.mulf %147, %146 : vector<8x128xf32>
    %149 = math.tanh %148 : vector<8x128xf32>
    %cst_64 = arith.constant 1.000000e+00 : f32
    %150 = vector.broadcast %cst_64 : f32 to vector<8x128xf32>
    %151 = arith.addf %149, %150 : vector<8x128xf32>
    %cst_65 = arith.constant 5.000000e-01 : f32
    %152 = vector.broadcast %cst_65 : f32 to vector<8x128xf32>
    %153 = arith.mulf %152, %151 : vector<8x128xf32>
    %154 = vector.extract_strided_slice %137 {offsets = [0, 256], sizes = [8, 128], strides = [1, 1]} : vector<8x512xf32> to vector<8x128xf32>
    %155 = math.tanh %154 : vector<8x128xf32>
    %156 = vector.extract_strided_slice %137 {offsets = [0, 384], sizes = [8, 128], strides = [1, 1]} : vector<8x512xf32> to vector<8x128xf32>
    %cst_66 = arith.constant 5.000000e-01 : f32
    %157 = vector.broadcast %cst_66 : f32 to vector<8x128xf32>
    %158 = arith.mulf %157, %156 : vector<8x128xf32>
    %159 = math.tanh %158 : vector<8x128xf32>
    %cst_67 = arith.constant 1.000000e+00 : f32
    %160 = vector.broadcast %cst_67 : f32 to vector<8x128xf32>
    %161 = arith.addf %159, %160 : vector<8x128xf32>
    %cst_68 = arith.constant 5.000000e-01 : f32
    %162 = vector.broadcast %cst_68 : f32 to vector<8x128xf32>
    %163 = arith.mulf %162, %161 : vector<8x128xf32>
    %164 = arith.mulf %153, %127 : vector<8x128xf32>
    %165 = arith.mulf %145, %155 : vector<8x128xf32>
    %166 = arith.addf %164, %165 : vector<8x128xf32>
    %167 = math.tanh %166 : vector<8x128xf32>
    %168 = arith.mulf %163, %167 : vector<8x128xf32>
    %c4_i32 = arith.constant 4 : i32
    %c8_i32_69 = arith.constant 8 : i32
    %169 = arith.muli %c4_i32, %c8_i32_69 : i32
    %170 = tpu.assume_multiple %169, 8 : i32
    %171 = arith.index_cast %170 : i32 to index
    %c0_70 = arith.constant 0 : index
    %172 = vector.load %arg11[%171, %c0_70] : memref<64x512xf32, #tpu.memory_space<vmem>>, vector<8x512xf32>
    %173 = arith.truncf %168 : vector<8x128xf32> to vector<8x128xbf16>
    %c0_71 = arith.constant 0 : index
    %c0_72 = arith.constant 0 : index
    %174 = vector.load %arg4[%c0_71, %c0_72] : memref<128x512xbf16, #tpu.memory_space<vmem>>, vector<128x512xbf16>
    %cst_73 = arith.constant dense<0.000000e+00> : vector<8x512xf32>
    %175 = tpu.matmul %173, %174, %cst_73 {dimension_numbers = #tpu.dot_dimension_numbers<[1], [0], [0], [1], [0, 0, 1, 1], [], []>} : vector<8x128xbf16>, vector<128x512xbf16>, vector<8x512xf32> -> vector<8x512xf32>
    %176 = arith.addf %172, %175 : vector<8x512xf32>
    %177 = vector.extract_strided_slice %176 {offsets = [0, 0], sizes = [8, 128], strides = [1, 1]} : vector<8x512xf32> to vector<8x128xf32>
    %cst_74 = arith.constant 5.000000e-01 : f32
    %178 = vector.broadcast %cst_74 : f32 to vector<8x128xf32>
    %179 = arith.mulf %178, %177 : vector<8x128xf32>
    %180 = math.tanh %179 : vector<8x128xf32>
    %cst_75 = arith.constant 1.000000e+00 : f32
    %181 = vector.broadcast %cst_75 : f32 to vector<8x128xf32>
    %182 = arith.addf %180, %181 : vector<8x128xf32>
    %cst_76 = arith.constant 5.000000e-01 : f32
    %183 = vector.broadcast %cst_76 : f32 to vector<8x128xf32>
    %184 = arith.mulf %183, %182 : vector<8x128xf32>
    %185 = vector.extract_strided_slice %176 {offsets = [0, 128], sizes = [8, 128], strides = [1, 1]} : vector<8x512xf32> to vector<8x128xf32>
    %cst_77 = arith.constant 5.000000e-01 : f32
    %186 = vector.broadcast %cst_77 : f32 to vector<8x128xf32>
    %187 = arith.mulf %186, %185 : vector<8x128xf32>
    %188 = math.tanh %187 : vector<8x128xf32>
    %cst_78 = arith.constant 1.000000e+00 : f32
    %189 = vector.broadcast %cst_78 : f32 to vector<8x128xf32>
    %190 = arith.addf %188, %189 : vector<8x128xf32>
    %cst_79 = arith.constant 5.000000e-01 : f32
    %191 = vector.broadcast %cst_79 : f32 to vector<8x128xf32>
    %192 = arith.mulf %191, %190 : vector<8x128xf32>
    %193 = vector.extract_strided_slice %176 {offsets = [0, 256], sizes = [8, 128], strides = [1, 1]} : vector<8x512xf32> to vector<8x128xf32>
    %194 = math.tanh %193 : vector<8x128xf32>
    %195 = vector.extract_strided_slice %176 {offsets = [0, 384], sizes = [8, 128], strides = [1, 1]} : vector<8x512xf32> to vector<8x128xf32>
    %cst_80 = arith.constant 5.000000e-01 : f32
    %196 = vector.broadcast %cst_80 : f32 to vector<8x128xf32>
    %197 = arith.mulf %196, %195 : vector<8x128xf32>
    %198 = math.tanh %197 : vector<8x128xf32>
    %cst_81 = arith.constant 1.000000e+00 : f32
    %199 = vector.broadcast %cst_81 : f32 to vector<8x128xf32>
    %200 = arith.addf %198, %199 : vector<8x128xf32>
    %cst_82 = arith.constant 5.000000e-01 : f32
    %201 = vector.broadcast %cst_82 : f32 to vector<8x128xf32>
    %202 = arith.mulf %201, %200 : vector<8x128xf32>
    %203 = arith.mulf %192, %166 : vector<8x128xf32>
    %204 = arith.mulf %184, %194 : vector<8x128xf32>
    %205 = arith.addf %203, %204 : vector<8x128xf32>
    %206 = math.tanh %205 : vector<8x128xf32>
    %207 = arith.mulf %202, %206 : vector<8x128xf32>
    %c5_i32 = arith.constant 5 : i32
    %c8_i32_83 = arith.constant 8 : i32
    %208 = arith.muli %c5_i32, %c8_i32_83 : i32
    %209 = tpu.assume_multiple %208, 8 : i32
    %210 = arith.index_cast %209 : i32 to index
    %c0_84 = arith.constant 0 : index
    %211 = vector.load %arg11[%210, %c0_84] : memref<64x512xf32, #tpu.memory_space<vmem>>, vector<8x512xf32>
    %212 = arith.truncf %207 : vector<8x128xf32> to vector<8x128xbf16>
    %c0_85 = arith.constant 0 : index
    %c0_86 = arith.constant 0 : index
    %213 = vector.load %arg4[%c0_85, %c0_86] : memref<128x512xbf16, #tpu.memory_space<vmem>>, vector<128x512xbf16>
    %cst_87 = arith.constant dense<0.000000e+00> : vector<8x512xf32>
    %214 = tpu.matmul %212, %213, %cst_87 {dimension_numbers = #tpu.dot_dimension_numbers<[1], [0], [0], [1], [0, 0, 1, 1], [], []>} : vector<8x128xbf16>, vector<128x512xbf16>, vector<8x512xf32> -> vector<8x512xf32>
    %215 = arith.addf %211, %214 : vector<8x512xf32>
    %216 = vector.extract_strided_slice %215 {offsets = [0, 0], sizes = [8, 128], strides = [1, 1]} : vector<8x512xf32> to vector<8x128xf32>
    %cst_88 = arith.constant 5.000000e-01 : f32
    %217 = vector.broadcast %cst_88 : f32 to vector<8x128xf32>
    %218 = arith.mulf %217, %216 : vector<8x128xf32>
    %219 = math.tanh %218 : vector<8x128xf32>
    %cst_89 = arith.constant 1.000000e+00 : f32
    %220 = vector.broadcast %cst_89 : f32 to vector<8x128xf32>
    %221 = arith.addf %219, %220 : vector<8x128xf32>
    %cst_90 = arith.constant 5.000000e-01 : f32
    %222 = vector.broadcast %cst_90 : f32 to vector<8x128xf32>
    %223 = arith.mulf %222, %221 : vector<8x128xf32>
    %224 = vector.extract_strided_slice %215 {offsets = [0, 128], sizes = [8, 128], strides = [1, 1]} : vector<8x512xf32> to vector<8x128xf32>
    %cst_91 = arith.constant 5.000000e-01 : f32
    %225 = vector.broadcast %cst_91 : f32 to vector<8x128xf32>
    %226 = arith.mulf %225, %224 : vector<8x128xf32>
    %227 = math.tanh %226 : vector<8x128xf32>
    %cst_92 = arith.constant 1.000000e+00 : f32
    %228 = vector.broadcast %cst_92 : f32 to vector<8x128xf32>
    %229 = arith.addf %227, %228 : vector<8x128xf32>
    %cst_93 = arith.constant 5.000000e-01 : f32
    %230 = vector.broadcast %cst_93 : f32 to vector<8x128xf32>
    %231 = arith.mulf %230, %229 : vector<8x128xf32>
    %232 = vector.extract_strided_slice %215 {offsets = [0, 256], sizes = [8, 128], strides = [1, 1]} : vector<8x512xf32> to vector<8x128xf32>
    %233 = math.tanh %232 : vector<8x128xf32>
    %234 = vector.extract_strided_slice %215 {offsets = [0, 384], sizes = [8, 128], strides = [1, 1]} : vector<8x512xf32> to vector<8x128xf32>
    %cst_94 = arith.constant 5.000000e-01 : f32
    %235 = vector.broadcast %cst_94 : f32 to vector<8x128xf32>
    %236 = arith.mulf %235, %234 : vector<8x128xf32>
    %237 = math.tanh %236 : vector<8x128xf32>
    %cst_95 = arith.constant 1.000000e+00 : f32
    %238 = vector.broadcast %cst_95 : f32 to vector<8x128xf32>
    %239 = arith.addf %237, %238 : vector<8x128xf32>
    %cst_96 = arith.constant 5.000000e-01 : f32
    %240 = vector.broadcast %cst_96 : f32 to vector<8x128xf32>
    %241 = arith.mulf %240, %239 : vector<8x128xf32>
    %242 = arith.mulf %231, %205 : vector<8x128xf32>
    %243 = arith.mulf %223, %233 : vector<8x128xf32>
    %244 = arith.addf %242, %243 : vector<8x128xf32>
    %245 = math.tanh %244 : vector<8x128xf32>
    %246 = arith.mulf %241, %245 : vector<8x128xf32>
    %c6_i32 = arith.constant 6 : i32
    %c8_i32_97 = arith.constant 8 : i32
    %247 = arith.muli %c6_i32, %c8_i32_97 : i32
    %248 = tpu.assume_multiple %247, 8 : i32
    %249 = arith.index_cast %248 : i32 to index
    %c0_98 = arith.constant 0 : index
    %250 = vector.load %arg11[%249, %c0_98] : memref<64x512xf32, #tpu.memory_space<vmem>>, vector<8x512xf32>
    %251 = arith.truncf %246 : vector<8x128xf32> to vector<8x128xbf16>
    %c0_99 = arith.constant 0 : index
    %c0_100 = arith.constant 0 : index
    %252 = vector.load %arg4[%c0_99, %c0_100] : memref<128x512xbf16, #tpu.memory_space<vmem>>, vector<128x512xbf16>
    %cst_101 = arith.constant dense<0.000000e+00> : vector<8x512xf32>
    %253 = tpu.matmul %251, %252, %cst_101 {dimension_numbers = #tpu.dot_dimension_numbers<[1], [0], [0], [1], [0, 0, 1, 1], [], []>} : vector<8x128xbf16>, vector<128x512xbf16>, vector<8x512xf32> -> vector<8x512xf32>
    %254 = arith.addf %250, %253 : vector<8x512xf32>
    %255 = vector.extract_strided_slice %254 {offsets = [0, 0], sizes = [8, 128], strides = [1, 1]} : vector<8x512xf32> to vector<8x128xf32>
    %cst_102 = arith.constant 5.000000e-01 : f32
    %256 = vector.broadcast %cst_102 : f32 to vector<8x128xf32>
    %257 = arith.mulf %256, %255 : vector<8x128xf32>
    %258 = math.tanh %257 : vector<8x128xf32>
    %cst_103 = arith.constant 1.000000e+00 : f32
    %259 = vector.broadcast %cst_103 : f32 to vector<8x128xf32>
    %260 = arith.addf %258, %259 : vector<8x128xf32>
    %cst_104 = arith.constant 5.000000e-01 : f32
    %261 = vector.broadcast %cst_104 : f32 to vector<8x128xf32>
    %262 = arith.mulf %261, %260 : vector<8x128xf32>
    %263 = vector.extract_strided_slice %254 {offsets = [0, 128], sizes = [8, 128], strides = [1, 1]} : vector<8x512xf32> to vector<8x128xf32>
    %cst_105 = arith.constant 5.000000e-01 : f32
    %264 = vector.broadcast %cst_105 : f32 to vector<8x128xf32>
    %265 = arith.mulf %264, %263 : vector<8x128xf32>
    %266 = math.tanh %265 : vector<8x128xf32>
    %cst_106 = arith.constant 1.000000e+00 : f32
    %267 = vector.broadcast %cst_106 : f32 to vector<8x128xf32>
    %268 = arith.addf %266, %267 : vector<8x128xf32>
    %cst_107 = arith.constant 5.000000e-01 : f32
    %269 = vector.broadcast %cst_107 : f32 to vector<8x128xf32>
    %270 = arith.mulf %269, %268 : vector<8x128xf32>
    %271 = vector.extract_strided_slice %254 {offsets = [0, 256], sizes = [8, 128], strides = [1, 1]} : vector<8x512xf32> to vector<8x128xf32>
    %272 = math.tanh %271 : vector<8x128xf32>
    %273 = vector.extract_strided_slice %254 {offsets = [0, 384], sizes = [8, 128], strides = [1, 1]} : vector<8x512xf32> to vector<8x128xf32>
    %cst_108 = arith.constant 5.000000e-01 : f32
    %274 = vector.broadcast %cst_108 : f32 to vector<8x128xf32>
    %275 = arith.mulf %274, %273 : vector<8x128xf32>
    %276 = math.tanh %275 : vector<8x128xf32>
    %cst_109 = arith.constant 1.000000e+00 : f32
    %277 = vector.broadcast %cst_109 : f32 to vector<8x128xf32>
    %278 = arith.addf %276, %277 : vector<8x128xf32>
    %cst_110 = arith.constant 5.000000e-01 : f32
    %279 = vector.broadcast %cst_110 : f32 to vector<8x128xf32>
    %280 = arith.mulf %279, %278 : vector<8x128xf32>
    %281 = arith.mulf %270, %244 : vector<8x128xf32>
    %282 = arith.mulf %262, %272 : vector<8x128xf32>
    %283 = arith.addf %281, %282 : vector<8x128xf32>
    %284 = math.tanh %283 : vector<8x128xf32>
    %285 = arith.mulf %280, %284 : vector<8x128xf32>
    %c7_i32 = arith.constant 7 : i32
    %c8_i32_111 = arith.constant 8 : i32
    %286 = arith.muli %c7_i32, %c8_i32_111 : i32
    %287 = tpu.assume_multiple %286, 8 : i32
    %288 = arith.index_cast %287 : i32 to index
    %c0_112 = arith.constant 0 : index
    %289 = vector.load %arg11[%288, %c0_112] : memref<64x512xf32, #tpu.memory_space<vmem>>, vector<8x512xf32>
    %290 = arith.truncf %285 : vector<8x128xf32> to vector<8x128xbf16>
    %c0_113 = arith.constant 0 : index
    %c0_114 = arith.constant 0 : index
    %291 = vector.load %arg4[%c0_113, %c0_114] : memref<128x512xbf16, #tpu.memory_space<vmem>>, vector<128x512xbf16>
    %cst_115 = arith.constant dense<0.000000e+00> : vector<8x512xf32>
    %292 = tpu.matmul %290, %291, %cst_115 {dimension_numbers = #tpu.dot_dimension_numbers<[1], [0], [0], [1], [0, 0, 1, 1], [], []>} : vector<8x128xbf16>, vector<128x512xbf16>, vector<8x512xf32> -> vector<8x512xf32>
    %293 = arith.addf %289, %292 : vector<8x512xf32>
    %294 = vector.extract_strided_slice %293 {offsets = [0, 0], sizes = [8, 128], strides = [1, 1]} : vector<8x512xf32> to vector<8x128xf32>
    %cst_116 = arith.constant 5.000000e-01 : f32
    %295 = vector.broadcast %cst_116 : f32 to vector<8x128xf32>
    %296 = arith.mulf %295, %294 : vector<8x128xf32>
    %297 = math.tanh %296 : vector<8x128xf32>
    %cst_117 = arith.constant 1.000000e+00 : f32
    %298 = vector.broadcast %cst_117 : f32 to vector<8x128xf32>
    %299 = arith.addf %297, %298 : vector<8x128xf32>
    %cst_118 = arith.constant 5.000000e-01 : f32
    %300 = vector.broadcast %cst_118 : f32 to vector<8x128xf32>
    %301 = arith.mulf %300, %299 : vector<8x128xf32>
    %302 = vector.extract_strided_slice %293 {offsets = [0, 128], sizes = [8, 128], strides = [1, 1]} : vector<8x512xf32> to vector<8x128xf32>
    %cst_119 = arith.constant 5.000000e-01 : f32
    %303 = vector.broadcast %cst_119 : f32 to vector<8x128xf32>
    %304 = arith.mulf %303, %302 : vector<8x128xf32>
    %305 = math.tanh %304 : vector<8x128xf32>
    %cst_120 = arith.constant 1.000000e+00 : f32
    %306 = vector.broadcast %cst_120 : f32 to vector<8x128xf32>
    %307 = arith.addf %305, %306 : vector<8x128xf32>
    %cst_121 = arith.constant 5.000000e-01 : f32
    %308 = vector.broadcast %cst_121 : f32 to vector<8x128xf32>
    %309 = arith.mulf %308, %307 : vector<8x128xf32>
    %310 = vector.extract_strided_slice %293 {offsets = [0, 256], sizes = [8, 128], strides = [1, 1]} : vector<8x512xf32> to vector<8x128xf32>
    %311 = math.tanh %310 : vector<8x128xf32>
    %312 = vector.extract_strided_slice %293 {offsets = [0, 384], sizes = [8, 128], strides = [1, 1]} : vector<8x512xf32> to vector<8x128xf32>
    %cst_122 = arith.constant 5.000000e-01 : f32
    %313 = vector.broadcast %cst_122 : f32 to vector<8x128xf32>
    %314 = arith.mulf %313, %312 : vector<8x128xf32>
    %315 = math.tanh %314 : vector<8x128xf32>
    %cst_123 = arith.constant 1.000000e+00 : f32
    %316 = vector.broadcast %cst_123 : f32 to vector<8x128xf32>
    %317 = arith.addf %315, %316 : vector<8x128xf32>
    %cst_124 = arith.constant 5.000000e-01 : f32
    %318 = vector.broadcast %cst_124 : f32 to vector<8x128xf32>
    %319 = arith.mulf %318, %317 : vector<8x128xf32>
    %320 = arith.mulf %309, %283 : vector<8x128xf32>
    %321 = arith.mulf %301, %311 : vector<8x128xf32>
    %322 = arith.addf %320, %321 : vector<8x128xf32>
    %323 = math.tanh %322 : vector<8x128xf32>
    %324 = arith.mulf %319, %323 : vector<8x128xf32>
    %c8_i32_125 = arith.constant 8 : i32
    %c0_126 = arith.constant 0 : index
    %c0_127 = arith.constant 0 : index
    %325 = vector.load %arg9[%c0_126, %c0_127] : memref<8x128xf32, #tpu.memory_space<vmem>>, vector<8x128xf32>
    tpu.vector_store %arg9[%c0_126, %c0_127], %324 {strides = array<i32>} : memref<8x128xf32, #tpu.memory_space<vmem>>, vector<8x128xf32>,
    %c0_128 = arith.constant 0 : index
    %c0_129 = arith.constant 0 : index
    %326 = vector.load %arg10[%c0_128, %c0_129] : memref<8x128xf32, #tpu.memory_space<vmem>>, vector<8x128xf32>
    tpu.vector_store %arg10[%c0_128, %c0_129], %322 {strides = array<i32>} : memref<8x128xf32, #tpu.memory_space<vmem>>, vector<8x128xf32>,
    %c0_i32_130 = arith.constant 0 : i32
    %327 = arith.cmpi eq, %arg1, %c0_i32_130 : i32
    %328 = arith.extui %327 : i1 to i32
    %c0_i32_131 = arith.constant 0 : i32
    %329 = arith.cmpi ne, %328, %c0_i32_131 : i32
    scf.if %329 {
      %c0_132 = arith.constant 0 : index
      %c0_133 = arith.constant 0 : index
      %330 = vector.load %arg9[%c0_132, %c0_133] : memref<8x128xf32, #tpu.memory_space<vmem>>, vector<8x128xf32>
      %331 = arith.truncf %330 : vector<8x128xf32> to vector<8x128xbf16>
      %c0_134 = arith.constant 0 : index
      %c0_135 = arith.constant 0 : index
      %332 = vector.load %arg6[%c0_134, %c0_135] : memref<128x128xbf16, #tpu.memory_space<vmem>>, vector<128x128xbf16>
      %cst_136 = arith.constant dense<0.000000e+00> : vector<8x128xf32>
      %333 = tpu.matmul %331, %332, %cst_136 {dimension_numbers = #tpu.dot_dimension_numbers<[1], [0], [0], [1], [0, 0, 1, 1], [], []>} : vector<8x128xbf16>, vector<128x128xbf16>, vector<8x128xf32> -> vector<8x128xf32>
      %c0_137 = arith.constant 0 : index
      %c0_138 = arith.constant 0 : index
      %334 = vector.load %arg7[%c0_137, %c0_138] : memref<1x128xf32, #tpu.memory_space<vmem>>, vector<1x128xf32>
      %335 = vector.broadcast %334 : vector<1x128xf32> to vector<8x128xf32>
      %336 = arith.addf %333, %335 : vector<8x128xf32>
      %c0_139 = arith.constant 0 : index
      %c0_140 = arith.constant 0 : index
      %337 = vector.load %arg8[%c0_139, %c0_140] : memref<8x128xf32, #tpu.memory_space<vmem>>, vector<8x128xf32>
      tpu.vector_store %arg8[%c0_139, %c0_140], %336 {strides = array<i32>} : memref<8x128xf32, #tpu.memory_space<vmem>>, vector<8x128xf32>,
    } else {
    }
    return
  }
  func.func @transform_0(%arg0: i32, %arg1: i32) -> (i32, i32, i32) {
    %c0_i32 = arith.constant 0 : i32
    %c0_i32_0 = arith.constant 0 : i32
    return %arg0, %arg1, %c0_i32 : i32, i32, i32
  }
  func.func @transform_1(%arg0: i32, %arg1: i32) -> (i32, i32) {
    %c0_i32 = arith.constant 0 : i32
    %c0_i32_0 = arith.constant 0 : i32
    %c0_i32_1 = arith.constant 0 : i32
    return %c0_i32, %c0_i32_0 : i32, i32
  }
  func.func @transform_2(%arg0: i32, %arg1: i32) -> (i32, i32) {
    %c0_i32 = arith.constant 0 : i32
    %c0_i32_0 = arith.constant 0 : i32
    %c0_i32_1 = arith.constant 0 : i32
    return %c0_i32, %c0_i32_0 : i32, i32
  }
  func.func @transform_3(%arg0: i32, %arg1: i32) -> (i32, i32) {
    %c0_i32 = arith.constant 0 : i32
    %c0_i32_0 = arith.constant 0 : i32
    %c0_i32_1 = arith.constant 0 : i32
    return %c0_i32, %c0_i32_0 : i32, i32
  }
  func.func @transform_4(%arg0: i32, %arg1: i32) -> (i32, i32) {
    %c0_i32 = arith.constant 0 : i32
    %c0_i32_0 = arith.constant 0 : i32
    %c0_i32_1 = arith.constant 0 : i32
    return %c0_i32, %c0_i32_0 : i32, i32
  }
  func.func @transform_5(%arg0: i32, %arg1: i32) -> (i32, i32) {
    %c0_i32 = arith.constant 0 : i32
    %c0_i32_0 = arith.constant 0 : i32
    %c0_i32_1 = arith.constant 0 : i32
    return %c0_i32, %c0_i32_0 : i32, i32
  }
  func.func @transform_6(%arg0: i32, %arg1: i32) -> (i32, i32) {
    %c0_i32 = arith.constant 0 : i32
    %c0_i32_0 = arith.constant 0 : i32
    return %arg0, %c0_i32 : i32, i32
  }
}

module attributes {stable_mosaic.version = 11 : i64} {
  func.func @_lstm_fused_kernel(%arg0: i32, %arg1: i32, %arg2: memref<1x64x128xbf16, #tpu.memory_space<vmem>>, %arg3: memref<128x512xbf16, #tpu.memory_space<vmem>>, %arg4: memref<128x512xbf16, #tpu.memory_space<vmem>>, %arg5: memref<1x512xf32, #tpu.memory_space<vmem>>, %arg6: memref<128x128xbf16, #tpu.memory_space<vmem>>, %arg7: memref<1x128xf32, #tpu.memory_space<vmem>>, %arg8: memref<8x128xf32, #tpu.memory_space<vmem>>, %arg9: memref<8x128xf32, #tpu.memory_space<vmem>>, %arg10: memref<8x128xf32, #tpu.memory_space<vmem>>, %arg11: memref<64x512xf32, #tpu.memory_space<vmem>>) attributes {dimension_semantics = [#tpu.dimension_semantics<parallel>, #tpu.dimension_semantics<arbitrary>], iteration_bounds = array<i64: 1, 1>, scalar_prefetch = 0 : i64, scratch_operands = 3 : i64, tpu.core_type = #tpu.core_type<tc>, window_params = [{transform_indices = @transform_0, window_bounds = array<i64: 1, 64, 128>}, {pipeline_mode = #tpu.pipeline_mode<synchronous>, transform_indices = @transform_1, window_bounds = array<i64: 128, 512>}, {pipeline_mode = #tpu.pipeline_mode<synchronous>, transform_indices = @transform_2, window_bounds = array<i64: 128, 512>}, {pipeline_mode = #tpu.pipeline_mode<synchronous>, transform_indices = @transform_3, window_bounds = array<i64: 1, 512>}, {pipeline_mode = #tpu.pipeline_mode<synchronous>, transform_indices = @transform_4, window_bounds = array<i64: 128, 128>}, {pipeline_mode = #tpu.pipeline_mode<synchronous>, transform_indices = @transform_5, window_bounds = array<i64: 1, 128>}, {transform_indices = @transform_6, window_bounds = array<i64: 8, 128>}]} {
    %c0_i32 = arith.constant 0 : i32
    %0 = arith.cmpi eq, %arg1, %c0_i32 : i32
    %1 = arith.extui %0 : i1 to i32
    %c0_i32_0 = arith.constant 0 : i32
    %2 = arith.cmpi ne, %1, %c0_i32_0 : i32
    scf.if %2 {
      %cst_132 = arith.constant 0.000000e+00 : f32
      %330 = vector.broadcast %cst_132 : f32 to vector<8x128xf32>
      %c0_133 = arith.constant 0 : index
      %c0_134 = arith.constant 0 : index
      %331 = vector.load %arg9[%c0_133, %c0_134] : memref<8x128xf32, #tpu.memory_space<vmem>>, vector<8x128xf32>
      tpu.vector_store %arg9[%c0_133, %c0_134], %330 {strides = array<i32>} : memref<8x128xf32, #tpu.memory_space<vmem>>, vector<8x128xf32>,
      %cst_135 = arith.constant 0.000000e+00 : f32
      %332 = vector.broadcast %cst_135 : f32 to vector<8x128xf32>
      %c0_136 = arith.constant 0 : index
      %c0_137 = arith.constant 0 : index
      %333 = vector.load %arg10[%c0_136, %c0_137] : memref<8x128xf32, #tpu.memory_space<vmem>>, vector<8x128xf32>
      tpu.vector_store %arg10[%c0_136, %c0_137], %332 {strides = array<i32>} : memref<8x128xf32, #tpu.memory_space<vmem>>, vector<8x128xf32>,
    } else {
    }
    %c0 = arith.constant 0 : index
    %c0_1 = arith.constant 0 : index
    %c0_2 = arith.constant 0 : index
    %3 = vector.load %arg2[%c0, %c0_1, %c0_2] : memref<1x64x128xbf16, #tpu.memory_space<vmem>>, vector<1x64x128xbf16>
    %4 = vector.shape_cast %3 : vector<1x64x128xbf16> to vector<64x128xbf16>
    %c0_3 = arith.constant 0 : index
    %c0_4 = arith.constant 0 : index
    %5 = vector.load %arg3[%c0_3, %c0_4] : memref<128x512xbf16, #tpu.memory_space<vmem>>, vector<128x512xbf16>
    %cst = arith.constant dense<0.000000e+00> : vector<64x512xf32>
    %6 = tpu.matmul %4, %5, %cst {dimension_numbers = #tpu.dot_dimension_numbers<[1], [0], [0], [1], [0, 0, 1, 1], [], []>} : vector<64x128xbf16>, vector<128x512xbf16>, vector<64x512xf32> -> vector<64x512xf32>
    %c0_5 = arith.constant 0 : index
    %c0_6 = arith.constant 0 : index
    %7 = vector.load %arg5[%c0_5, %c0_6] : memref<1x512xf32, #tpu.memory_space<vmem>>, vector<1x512xf32>
    %8 = vector.broadcast %7 : vector<1x512xf32> to vector<64x512xf32>
    %9 = arith.addf %6, %8 : vector<64x512xf32>
    %c0_7 = arith.constant 0 : index
    %c0_8 = arith.constant 0 : index
    %10 = vector.load %arg11[%c0_7, %c0_8] : memref<64x512xf32, #tpu.memory_space<vmem>>, vector<64x512xf32>
    tpu.vector_store %arg11[%c0_7, %c0_8], %9 {strides = array<i32>} : memref<64x512xf32, #tpu.memory_space<vmem>>, vector<64x512xf32>,
    %c0_9 = arith.constant 0 : index
    %c0_10 = arith.constant 0 : index
    %11 = vector.load %arg9[%c0_9, %c0_10] : memref<8x128xf32, #tpu.memory_space<vmem>>, vector<8x128xf32>
    %c0_11 = arith.constant 0 : index
    %c0_12 = arith.constant 0 : index
    %12 = vector.load %arg10[%c0_11, %c0_12] : memref<8x128xf32, #tpu.memory_space<vmem>>, vector<8x128xf32>
    %c0_i32_13 = arith.constant 0 : i32
    %c8_i32 = arith.constant 8 : i32
    %13 = arith.muli %c0_i32_13, %c8_i32 : i32
    %14 = tpu.assume_multiple %13, 8 : i32
    %15 = arith.index_cast %14 : i32 to index
    %c0_14 = arith.constant 0 : index
    %16 = vector.load %arg11[%15, %c0_14] : memref<64x512xf32, #tpu.memory_space<vmem>>, vector<8x512xf32>
    %17 = arith.truncf %11 : vector<8x128xf32> to vector<8x128xbf16>
    %c0_15 = arith.constant 0 : index
    %c0_16 = arith.constant 0 : index
    %18 = vector.load %arg4[%c0_15, %c0_16] : memref<128x512xbf16, #tpu.memory_space<vmem>>, vector<128x512xbf16>
    %cst_17 = arith.constant dense<0.000000e+00> : vector<8x512xf32>
    %19 = tpu.matmul %17, %18, %cst_17 {dimension_numbers = #tpu.dot_dimension_numbers<[1], [0], [0], [1], [0, 0, 1, 1], [], []>} : vector<8x128xbf16>, vector<128x512xbf16>, vector<8x512xf32> -> vector<8x512xf32>
    %20 = arith.addf %16, %19 : vector<8x512xf32>
    %21 = vector.extract_strided_slice %20 {offsets = [0, 0], sizes = [8, 128], strides = [1, 1]} : vector<8x512xf32> to vector<8x128xf32>
    %cst_18 = arith.constant 5.000000e-01 : f32
    %22 = vector.broadcast %cst_18 : f32 to vector<8x128xf32>
    %23 = arith.mulf %22, %21 : vector<8x128xf32>
    %24 = math.tanh %23 : vector<8x128xf32>
    %cst_19 = arith.constant 1.000000e+00 : f32
    %25 = vector.broadcast %cst_19 : f32 to vector<8x128xf32>
    %26 = arith.addf %24, %25 : vector<8x128xf32>
    %cst_20 = arith.constant 5.000000e-01 : f32
    %27 = vector.broadcast %cst_20 : f32 to vector<8x128xf32>
    %28 = arith.mulf %27, %26 : vector<8x128xf32>
    %29 = vector.extract_strided_slice %20 {offsets = [0, 128], sizes = [8, 128], strides = [1, 1]} : vector<8x512xf32> to vector<8x128xf32>
    %cst_21 = arith.constant 5.000000e-01 : f32
    %30 = vector.broadcast %cst_21 : f32 to vector<8x128xf32>
    %31 = arith.mulf %30, %29 : vector<8x128xf32>
    %32 = math.tanh %31 : vector<8x128xf32>
    %cst_22 = arith.constant 1.000000e+00 : f32
    %33 = vector.broadcast %cst_22 : f32 to vector<8x128xf32>
    %34 = arith.addf %32, %33 : vector<8x128xf32>
    %cst_23 = arith.constant 5.000000e-01 : f32
    %35 = vector.broadcast %cst_23 : f32 to vector<8x128xf32>
    %36 = arith.mulf %35, %34 : vector<8x128xf32>
    %37 = vector.extract_strided_slice %20 {offsets = [0, 256], sizes = [8, 128], strides = [1, 1]} : vector<8x512xf32> to vector<8x128xf32>
    %38 = math.tanh %37 : vector<8x128xf32>
    %39 = vector.extract_strided_slice %20 {offsets = [0, 384], sizes = [8, 128], strides = [1, 1]} : vector<8x512xf32> to vector<8x128xf32>
    %cst_24 = arith.constant 5.000000e-01 : f32
    %40 = vector.broadcast %cst_24 : f32 to vector<8x128xf32>
    %41 = arith.mulf %40, %39 : vector<8x128xf32>
    %42 = math.tanh %41 : vector<8x128xf32>
    %cst_25 = arith.constant 1.000000e+00 : f32
    %43 = vector.broadcast %cst_25 : f32 to vector<8x128xf32>
    %44 = arith.addf %42, %43 : vector<8x128xf32>
    %cst_26 = arith.constant 5.000000e-01 : f32
    %45 = vector.broadcast %cst_26 : f32 to vector<8x128xf32>
    %46 = arith.mulf %45, %44 : vector<8x128xf32>
    %47 = arith.mulf %36, %12 : vector<8x128xf32>
    %48 = arith.mulf %28, %38 : vector<8x128xf32>
    %49 = arith.addf %47, %48 : vector<8x128xf32>
    %50 = math.tanh %49 : vector<8x128xf32>
    %51 = arith.mulf %46, %50 : vector<8x128xf32>
    %c1_i32 = arith.constant 1 : i32
    %c8_i32_27 = arith.constant 8 : i32
    %52 = arith.muli %c1_i32, %c8_i32_27 : i32
    %53 = tpu.assume_multiple %52, 8 : i32
    %54 = arith.index_cast %53 : i32 to index
    %c0_28 = arith.constant 0 : index
    %55 = vector.load %arg11[%54, %c0_28] : memref<64x512xf32, #tpu.memory_space<vmem>>, vector<8x512xf32>
    %56 = arith.truncf %51 : vector<8x128xf32> to vector<8x128xbf16>
    %c0_29 = arith.constant 0 : index
    %c0_30 = arith.constant 0 : index
    %57 = vector.load %arg4[%c0_29, %c0_30] : memref<128x512xbf16, #tpu.memory_space<vmem>>, vector<128x512xbf16>
    %cst_31 = arith.constant dense<0.000000e+00> : vector<8x512xf32>
    %58 = tpu.matmul %56, %57, %cst_31 {dimension_numbers = #tpu.dot_dimension_numbers<[1], [0], [0], [1], [0, 0, 1, 1], [], []>} : vector<8x128xbf16>, vector<128x512xbf16>, vector<8x512xf32> -> vector<8x512xf32>
    %59 = arith.addf %55, %58 : vector<8x512xf32>
    %60 = vector.extract_strided_slice %59 {offsets = [0, 0], sizes = [8, 128], strides = [1, 1]} : vector<8x512xf32> to vector<8x128xf32>
    %cst_32 = arith.constant 5.000000e-01 : f32
    %61 = vector.broadcast %cst_32 : f32 to vector<8x128xf32>
    %62 = arith.mulf %61, %60 : vector<8x128xf32>
    %63 = math.tanh %62 : vector<8x128xf32>
    %cst_33 = arith.constant 1.000000e+00 : f32
    %64 = vector.broadcast %cst_33 : f32 to vector<8x128xf32>
    %65 = arith.addf %63, %64 : vector<8x128xf32>
    %cst_34 = arith.constant 5.000000e-01 : f32
    %66 = vector.broadcast %cst_34 : f32 to vector<8x128xf32>
    %67 = arith.mulf %66, %65 : vector<8x128xf32>
    %68 = vector.extract_strided_slice %59 {offsets = [0, 128], sizes = [8, 128], strides = [1, 1]} : vector<8x512xf32> to vector<8x128xf32>
    %cst_35 = arith.constant 5.000000e-01 : f32
    %69 = vector.broadcast %cst_35 : f32 to vector<8x128xf32>
    %70 = arith.mulf %69, %68 : vector<8x128xf32>
    %71 = math.tanh %70 : vector<8x128xf32>
    %cst_36 = arith.constant 1.000000e+00 : f32
    %72 = vector.broadcast %cst_36 : f32 to vector<8x128xf32>
    %73 = arith.addf %71, %72 : vector<8x128xf32>
    %cst_37 = arith.constant 5.000000e-01 : f32
    %74 = vector.broadcast %cst_37 : f32 to vector<8x128xf32>
    %75 = arith.mulf %74, %73 : vector<8x128xf32>
    %76 = vector.extract_strided_slice %59 {offsets = [0, 256], sizes = [8, 128], strides = [1, 1]} : vector<8x512xf32> to vector<8x128xf32>
    %77 = math.tanh %76 : vector<8x128xf32>
    %78 = vector.extract_strided_slice %59 {offsets = [0, 384], sizes = [8, 128], strides = [1, 1]} : vector<8x512xf32> to vector<8x128xf32>
    %cst_38 = arith.constant 5.000000e-01 : f32
    %79 = vector.broadcast %cst_38 : f32 to vector<8x128xf32>
    %80 = arith.mulf %79, %78 : vector<8x128xf32>
    %81 = math.tanh %80 : vector<8x128xf32>
    %cst_39 = arith.constant 1.000000e+00 : f32
    %82 = vector.broadcast %cst_39 : f32 to vector<8x128xf32>
    %83 = arith.addf %81, %82 : vector<8x128xf32>
    %cst_40 = arith.constant 5.000000e-01 : f32
    %84 = vector.broadcast %cst_40 : f32 to vector<8x128xf32>
    %85 = arith.mulf %84, %83 : vector<8x128xf32>
    %86 = arith.mulf %75, %49 : vector<8x128xf32>
    %87 = arith.mulf %67, %77 : vector<8x128xf32>
    %88 = arith.addf %86, %87 : vector<8x128xf32>
    %89 = math.tanh %88 : vector<8x128xf32>
    %90 = arith.mulf %85, %89 : vector<8x128xf32>
    %c2_i32 = arith.constant 2 : i32
    %c8_i32_41 = arith.constant 8 : i32
    %91 = arith.muli %c2_i32, %c8_i32_41 : i32
    %92 = tpu.assume_multiple %91, 8 : i32
    %93 = arith.index_cast %92 : i32 to index
    %c0_42 = arith.constant 0 : index
    %94 = vector.load %arg11[%93, %c0_42] : memref<64x512xf32, #tpu.memory_space<vmem>>, vector<8x512xf32>
    %95 = arith.truncf %90 : vector<8x128xf32> to vector<8x128xbf16>
    %c0_43 = arith.constant 0 : index
    %c0_44 = arith.constant 0 : index
    %96 = vector.load %arg4[%c0_43, %c0_44] : memref<128x512xbf16, #tpu.memory_space<vmem>>, vector<128x512xbf16>
    %cst_45 = arith.constant dense<0.000000e+00> : vector<8x512xf32>
    %97 = tpu.matmul %95, %96, %cst_45 {dimension_numbers = #tpu.dot_dimension_numbers<[1], [0], [0], [1], [0, 0, 1, 1], [], []>} : vector<8x128xbf16>, vector<128x512xbf16>, vector<8x512xf32> -> vector<8x512xf32>
    %98 = arith.addf %94, %97 : vector<8x512xf32>
    %99 = vector.extract_strided_slice %98 {offsets = [0, 0], sizes = [8, 128], strides = [1, 1]} : vector<8x512xf32> to vector<8x128xf32>
    %cst_46 = arith.constant 5.000000e-01 : f32
    %100 = vector.broadcast %cst_46 : f32 to vector<8x128xf32>
    %101 = arith.mulf %100, %99 : vector<8x128xf32>
    %102 = math.tanh %101 : vector<8x128xf32>
    %cst_47 = arith.constant 1.000000e+00 : f32
    %103 = vector.broadcast %cst_47 : f32 to vector<8x128xf32>
    %104 = arith.addf %102, %103 : vector<8x128xf32>
    %cst_48 = arith.constant 5.000000e-01 : f32
    %105 = vector.broadcast %cst_48 : f32 to vector<8x128xf32>
    %106 = arith.mulf %105, %104 : vector<8x128xf32>
    %107 = vector.extract_strided_slice %98 {offsets = [0, 128], sizes = [8, 128], strides = [1, 1]} : vector<8x512xf32> to vector<8x128xf32>
    %cst_49 = arith.constant 5.000000e-01 : f32
    %108 = vector.broadcast %cst_49 : f32 to vector<8x128xf32>
    %109 = arith.mulf %108, %107 : vector<8x128xf32>
    %110 = math.tanh %109 : vector<8x128xf32>
    %cst_50 = arith.constant 1.000000e+00 : f32
    %111 = vector.broadcast %cst_50 : f32 to vector<8x128xf32>
    %112 = arith.addf %110, %111 : vector<8x128xf32>
    %cst_51 = arith.constant 5.000000e-01 : f32
    %113 = vector.broadcast %cst_51 : f32 to vector<8x128xf32>
    %114 = arith.mulf %113, %112 : vector<8x128xf32>
    %115 = vector.extract_strided_slice %98 {offsets = [0, 256], sizes = [8, 128], strides = [1, 1]} : vector<8x512xf32> to vector<8x128xf32>
    %116 = math.tanh %115 : vector<8x128xf32>
    %117 = vector.extract_strided_slice %98 {offsets = [0, 384], sizes = [8, 128], strides = [1, 1]} : vector<8x512xf32> to vector<8x128xf32>
    %cst_52 = arith.constant 5.000000e-01 : f32
    %118 = vector.broadcast %cst_52 : f32 to vector<8x128xf32>
    %119 = arith.mulf %118, %117 : vector<8x128xf32>
    %120 = math.tanh %119 : vector<8x128xf32>
    %cst_53 = arith.constant 1.000000e+00 : f32
    %121 = vector.broadcast %cst_53 : f32 to vector<8x128xf32>
    %122 = arith.addf %120, %121 : vector<8x128xf32>
    %cst_54 = arith.constant 5.000000e-01 : f32
    %123 = vector.broadcast %cst_54 : f32 to vector<8x128xf32>
    %124 = arith.mulf %123, %122 : vector<8x128xf32>
    %125 = arith.mulf %114, %88 : vector<8x128xf32>
    %126 = arith.mulf %106, %116 : vector<8x128xf32>
    %127 = arith.addf %125, %126 : vector<8x128xf32>
    %128 = math.tanh %127 : vector<8x128xf32>
    %129 = arith.mulf %124, %128 : vector<8x128xf32>
    %c3_i32 = arith.constant 3 : i32
    %c8_i32_55 = arith.constant 8 : i32
    %130 = arith.muli %c3_i32, %c8_i32_55 : i32
    %131 = tpu.assume_multiple %130, 8 : i32
    %132 = arith.index_cast %131 : i32 to index
    %c0_56 = arith.constant 0 : index
    %133 = vector.load %arg11[%132, %c0_56] : memref<64x512xf32, #tpu.memory_space<vmem>>, vector<8x512xf32>
    %134 = arith.truncf %129 : vector<8x128xf32> to vector<8x128xbf16>
    %c0_57 = arith.constant 0 : index
    %c0_58 = arith.constant 0 : index
    %135 = vector.load %arg4[%c0_57, %c0_58] : memref<128x512xbf16, #tpu.memory_space<vmem>>, vector<128x512xbf16>
    %cst_59 = arith.constant dense<0.000000e+00> : vector<8x512xf32>
    %136 = tpu.matmul %134, %135, %cst_59 {dimension_numbers = #tpu.dot_dimension_numbers<[1], [0], [0], [1], [0, 0, 1, 1], [], []>} : vector<8x128xbf16>, vector<128x512xbf16>, vector<8x512xf32> -> vector<8x512xf32>
    %137 = arith.addf %133, %136 : vector<8x512xf32>
    %138 = vector.extract_strided_slice %137 {offsets = [0, 0], sizes = [8, 128], strides = [1, 1]} : vector<8x512xf32> to vector<8x128xf32>
    %cst_60 = arith.constant 5.000000e-01 : f32
    %139 = vector.broadcast %cst_60 : f32 to vector<8x128xf32>
    %140 = arith.mulf %139, %138 : vector<8x128xf32>
    %141 = math.tanh %140 : vector<8x128xf32>
    %cst_61 = arith.constant 1.000000e+00 : f32
    %142 = vector.broadcast %cst_61 : f32 to vector<8x128xf32>
    %143 = arith.addf %141, %142 : vector<8x128xf32>
    %cst_62 = arith.constant 5.000000e-01 : f32
    %144 = vector.broadcast %cst_62 : f32 to vector<8x128xf32>
    %145 = arith.mulf %144, %143 : vector<8x128xf32>
    %146 = vector.extract_strided_slice %137 {offsets = [0, 128], sizes = [8, 128], strides = [1, 1]} : vector<8x512xf32> to vector<8x128xf32>
    %cst_63 = arith.constant 5.000000e-01 : f32
    %147 = vector.broadcast %cst_63 : f32 to vector<8x128xf32>
    %148 = arith.mulf %147, %146 : vector<8x128xf32>
    %149 = math.tanh %148 : vector<8x128xf32>
    %cst_64 = arith.constant 1.000000e+00 : f32
    %150 = vector.broadcast %cst_64 : f32 to vector<8x128xf32>
    %151 = arith.addf %149, %150 : vector<8x128xf32>
    %cst_65 = arith.constant 5.000000e-01 : f32
    %152 = vector.broadcast %cst_65 : f32 to vector<8x128xf32>
    %153 = arith.mulf %152, %151 : vector<8x128xf32>
    %154 = vector.extract_strided_slice %137 {offsets = [0, 256], sizes = [8, 128], strides = [1, 1]} : vector<8x512xf32> to vector<8x128xf32>
    %155 = math.tanh %154 : vector<8x128xf32>
    %156 = vector.extract_strided_slice %137 {offsets = [0, 384], sizes = [8, 128], strides = [1, 1]} : vector<8x512xf32> to vector<8x128xf32>
    %cst_66 = arith.constant 5.000000e-01 : f32
    %157 = vector.broadcast %cst_66 : f32 to vector<8x128xf32>
    %158 = arith.mulf %157, %156 : vector<8x128xf32>
    %159 = math.tanh %158 : vector<8x128xf32>
    %cst_67 = arith.constant 1.000000e+00 : f32
    %160 = vector.broadcast %cst_67 : f32 to vector<8x128xf32>
    %161 = arith.addf %159, %160 : vector<8x128xf32>
    %cst_68 = arith.constant 5.000000e-01 : f32
    %162 = vector.broadcast %cst_68 : f32 to vector<8x128xf32>
    %163 = arith.mulf %162, %161 : vector<8x128xf32>
    %164 = arith.mulf %153, %127 : vector<8x128xf32>
    %165 = arith.mulf %145, %155 : vector<8x128xf32>
    %166 = arith.addf %164, %165 : vector<8x128xf32>
    %167 = math.tanh %166 : vector<8x128xf32>
    %168 = arith.mulf %163, %167 : vector<8x128xf32>
    %c4_i32 = arith.constant 4 : i32
    %c8_i32_69 = arith.constant 8 : i32
    %169 = arith.muli %c4_i32, %c8_i32_69 : i32
    %170 = tpu.assume_multiple %169, 8 : i32
    %171 = arith.index_cast %170 : i32 to index
    %c0_70 = arith.constant 0 : index
    %172 = vector.load %arg11[%171, %c0_70] : memref<64x512xf32, #tpu.memory_space<vmem>>, vector<8x512xf32>
    %173 = arith.truncf %168 : vector<8x128xf32> to vector<8x128xbf16>
    %c0_71 = arith.constant 0 : index
    %c0_72 = arith.constant 0 : index
    %174 = vector.load %arg4[%c0_71, %c0_72] : memref<128x512xbf16, #tpu.memory_space<vmem>>, vector<128x512xbf16>
    %cst_73 = arith.constant dense<0.000000e+00> : vector<8x512xf32>
    %175 = tpu.matmul %173, %174, %cst_73 {dimension_numbers = #tpu.dot_dimension_numbers<[1], [0], [0], [1], [0, 0, 1, 1], [], []>} : vector<8x128xbf16>, vector<128x512xbf16>, vector<8x512xf32> -> vector<8x512xf32>
    %176 = arith.addf %172, %175 : vector<8x512xf32>
    %177 = vector.extract_strided_slice %176 {offsets = [0, 0], sizes = [8, 128], strides = [1, 1]} : vector<8x512xf32> to vector<8x128xf32>
    %cst_74 = arith.constant 5.000000e-01 : f32
    %178 = vector.broadcast %cst_74 : f32 to vector<8x128xf32>
    %179 = arith.mulf %178, %177 : vector<8x128xf32>
    %180 = math.tanh %179 : vector<8x128xf32>
    %cst_75 = arith.constant 1.000000e+00 : f32
    %181 = vector.broadcast %cst_75 : f32 to vector<8x128xf32>
    %182 = arith.addf %180, %181 : vector<8x128xf32>
    %cst_76 = arith.constant 5.000000e-01 : f32
    %183 = vector.broadcast %cst_76 : f32 to vector<8x128xf32>
    %184 = arith.mulf %183, %182 : vector<8x128xf32>
    %185 = vector.extract_strided_slice %176 {offsets = [0, 128], sizes = [8, 128], strides = [1, 1]} : vector<8x512xf32> to vector<8x128xf32>
    %cst_77 = arith.constant 5.000000e-01 : f32
    %186 = vector.broadcast %cst_77 : f32 to vector<8x128xf32>
    %187 = arith.mulf %186, %185 : vector<8x128xf32>
    %188 = math.tanh %187 : vector<8x128xf32>
    %cst_78 = arith.constant 1.000000e+00 : f32
    %189 = vector.broadcast %cst_78 : f32 to vector<8x128xf32>
    %190 = arith.addf %188, %189 : vector<8x128xf32>
    %cst_79 = arith.constant 5.000000e-01 : f32
    %191 = vector.broadcast %cst_79 : f32 to vector<8x128xf32>
    %192 = arith.mulf %191, %190 : vector<8x128xf32>
    %193 = vector.extract_strided_slice %176 {offsets = [0, 256], sizes = [8, 128], strides = [1, 1]} : vector<8x512xf32> to vector<8x128xf32>
    %194 = math.tanh %193 : vector<8x128xf32>
    %195 = vector.extract_strided_slice %176 {offsets = [0, 384], sizes = [8, 128], strides = [1, 1]} : vector<8x512xf32> to vector<8x128xf32>
    %cst_80 = arith.constant 5.000000e-01 : f32
    %196 = vector.broadcast %cst_80 : f32 to vector<8x128xf32>
    %197 = arith.mulf %196, %195 : vector<8x128xf32>
    %198 = math.tanh %197 : vector<8x128xf32>
    %cst_81 = arith.constant 1.000000e+00 : f32
    %199 = vector.broadcast %cst_81 : f32 to vector<8x128xf32>
    %200 = arith.addf %198, %199 : vector<8x128xf32>
    %cst_82 = arith.constant 5.000000e-01 : f32
    %201 = vector.broadcast %cst_82 : f32 to vector<8x128xf32>
    %202 = arith.mulf %201, %200 : vector<8x128xf32>
    %203 = arith.mulf %192, %166 : vector<8x128xf32>
    %204 = arith.mulf %184, %194 : vector<8x128xf32>
    %205 = arith.addf %203, %204 : vector<8x128xf32>
    %206 = math.tanh %205 : vector<8x128xf32>
    %207 = arith.mulf %202, %206 : vector<8x128xf32>
    %c5_i32 = arith.constant 5 : i32
    %c8_i32_83 = arith.constant 8 : i32
    %208 = arith.muli %c5_i32, %c8_i32_83 : i32
    %209 = tpu.assume_multiple %208, 8 : i32
    %210 = arith.index_cast %209 : i32 to index
    %c0_84 = arith.constant 0 : index
    %211 = vector.load %arg11[%210, %c0_84] : memref<64x512xf32, #tpu.memory_space<vmem>>, vector<8x512xf32>
    %212 = arith.truncf %207 : vector<8x128xf32> to vector<8x128xbf16>
    %c0_85 = arith.constant 0 : index
    %c0_86 = arith.constant 0 : index
    %213 = vector.load %arg4[%c0_85, %c0_86] : memref<128x512xbf16, #tpu.memory_space<vmem>>, vector<128x512xbf16>
    %cst_87 = arith.constant dense<0.000000e+00> : vector<8x512xf32>
    %214 = tpu.matmul %212, %213, %cst_87 {dimension_numbers = #tpu.dot_dimension_numbers<[1], [0], [0], [1], [0, 0, 1, 1], [], []>} : vector<8x128xbf16>, vector<128x512xbf16>, vector<8x512xf32> -> vector<8x512xf32>
    %215 = arith.addf %211, %214 : vector<8x512xf32>
    %216 = vector.extract_strided_slice %215 {offsets = [0, 0], sizes = [8, 128], strides = [1, 1]} : vector<8x512xf32> to vector<8x128xf32>
    %cst_88 = arith.constant 5.000000e-01 : f32
    %217 = vector.broadcast %cst_88 : f32 to vector<8x128xf32>
    %218 = arith.mulf %217, %216 : vector<8x128xf32>
    %219 = math.tanh %218 : vector<8x128xf32>
    %cst_89 = arith.constant 1.000000e+00 : f32
    %220 = vector.broadcast %cst_89 : f32 to vector<8x128xf32>
    %221 = arith.addf %219, %220 : vector<8x128xf32>
    %cst_90 = arith.constant 5.000000e-01 : f32
    %222 = vector.broadcast %cst_90 : f32 to vector<8x128xf32>
    %223 = arith.mulf %222, %221 : vector<8x128xf32>
    %224 = vector.extract_strided_slice %215 {offsets = [0, 128], sizes = [8, 128], strides = [1, 1]} : vector<8x512xf32> to vector<8x128xf32>
    %cst_91 = arith.constant 5.000000e-01 : f32
    %225 = vector.broadcast %cst_91 : f32 to vector<8x128xf32>
    %226 = arith.mulf %225, %224 : vector<8x128xf32>
    %227 = math.tanh %226 : vector<8x128xf32>
    %cst_92 = arith.constant 1.000000e+00 : f32
    %228 = vector.broadcast %cst_92 : f32 to vector<8x128xf32>
    %229 = arith.addf %227, %228 : vector<8x128xf32>
    %cst_93 = arith.constant 5.000000e-01 : f32
    %230 = vector.broadcast %cst_93 : f32 to vector<8x128xf32>
    %231 = arith.mulf %230, %229 : vector<8x128xf32>
    %232 = vector.extract_strided_slice %215 {offsets = [0, 256], sizes = [8, 128], strides = [1, 1]} : vector<8x512xf32> to vector<8x128xf32>
    %233 = math.tanh %232 : vector<8x128xf32>
    %234 = vector.extract_strided_slice %215 {offsets = [0, 384], sizes = [8, 128], strides = [1, 1]} : vector<8x512xf32> to vector<8x128xf32>
    %cst_94 = arith.constant 5.000000e-01 : f32
    %235 = vector.broadcast %cst_94 : f32 to vector<8x128xf32>
    %236 = arith.mulf %235, %234 : vector<8x128xf32>
    %237 = math.tanh %236 : vector<8x128xf32>
    %cst_95 = arith.constant 1.000000e+00 : f32
    %238 = vector.broadcast %cst_95 : f32 to vector<8x128xf32>
    %239 = arith.addf %237, %238 : vector<8x128xf32>
    %cst_96 = arith.constant 5.000000e-01 : f32
    %240 = vector.broadcast %cst_96 : f32 to vector<8x128xf32>
    %241 = arith.mulf %240, %239 : vector<8x128xf32>
    %242 = arith.mulf %231, %205 : vector<8x128xf32>
    %243 = arith.mulf %223, %233 : vector<8x128xf32>
    %244 = arith.addf %242, %243 : vector<8x128xf32>
    %245 = math.tanh %244 : vector<8x128xf32>
    %246 = arith.mulf %241, %245 : vector<8x128xf32>
    %c6_i32 = arith.constant 6 : i32
    %c8_i32_97 = arith.constant 8 : i32
    %247 = arith.muli %c6_i32, %c8_i32_97 : i32
    %248 = tpu.assume_multiple %247, 8 : i32
    %249 = arith.index_cast %248 : i32 to index
    %c0_98 = arith.constant 0 : index
    %250 = vector.load %arg11[%249, %c0_98] : memref<64x512xf32, #tpu.memory_space<vmem>>, vector<8x512xf32>
    %251 = arith.truncf %246 : vector<8x128xf32> to vector<8x128xbf16>
    %c0_99 = arith.constant 0 : index
    %c0_100 = arith.constant 0 : index
    %252 = vector.load %arg4[%c0_99, %c0_100] : memref<128x512xbf16, #tpu.memory_space<vmem>>, vector<128x512xbf16>
    %cst_101 = arith.constant dense<0.000000e+00> : vector<8x512xf32>
    %253 = tpu.matmul %251, %252, %cst_101 {dimension_numbers = #tpu.dot_dimension_numbers<[1], [0], [0], [1], [0, 0, 1, 1], [], []>} : vector<8x128xbf16>, vector<128x512xbf16>, vector<8x512xf32> -> vector<8x512xf32>
    %254 = arith.addf %250, %253 : vector<8x512xf32>
    %255 = vector.extract_strided_slice %254 {offsets = [0, 0], sizes = [8, 128], strides = [1, 1]} : vector<8x512xf32> to vector<8x128xf32>
    %cst_102 = arith.constant 5.000000e-01 : f32
    %256 = vector.broadcast %cst_102 : f32 to vector<8x128xf32>
    %257 = arith.mulf %256, %255 : vector<8x128xf32>
    %258 = math.tanh %257 : vector<8x128xf32>
    %cst_103 = arith.constant 1.000000e+00 : f32
    %259 = vector.broadcast %cst_103 : f32 to vector<8x128xf32>
    %260 = arith.addf %258, %259 : vector<8x128xf32>
    %cst_104 = arith.constant 5.000000e-01 : f32
    %261 = vector.broadcast %cst_104 : f32 to vector<8x128xf32>
    %262 = arith.mulf %261, %260 : vector<8x128xf32>
    %263 = vector.extract_strided_slice %254 {offsets = [0, 128], sizes = [8, 128], strides = [1, 1]} : vector<8x512xf32> to vector<8x128xf32>
    %cst_105 = arith.constant 5.000000e-01 : f32
    %264 = vector.broadcast %cst_105 : f32 to vector<8x128xf32>
    %265 = arith.mulf %264, %263 : vector<8x128xf32>
    %266 = math.tanh %265 : vector<8x128xf32>
    %cst_106 = arith.constant 1.000000e+00 : f32
    %267 = vector.broadcast %cst_106 : f32 to vector<8x128xf32>
    %268 = arith.addf %266, %267 : vector<8x128xf32>
    %cst_107 = arith.constant 5.000000e-01 : f32
    %269 = vector.broadcast %cst_107 : f32 to vector<8x128xf32>
    %270 = arith.mulf %269, %268 : vector<8x128xf32>
    %271 = vector.extract_strided_slice %254 {offsets = [0, 256], sizes = [8, 128], strides = [1, 1]} : vector<8x512xf32> to vector<8x128xf32>
    %272 = math.tanh %271 : vector<8x128xf32>
    %273 = vector.extract_strided_slice %254 {offsets = [0, 384], sizes = [8, 128], strides = [1, 1]} : vector<8x512xf32> to vector<8x128xf32>
    %cst_108 = arith.constant 5.000000e-01 : f32
    %274 = vector.broadcast %cst_108 : f32 to vector<8x128xf32>
    %275 = arith.mulf %274, %273 : vector<8x128xf32>
    %276 = math.tanh %275 : vector<8x128xf32>
    %cst_109 = arith.constant 1.000000e+00 : f32
    %277 = vector.broadcast %cst_109 : f32 to vector<8x128xf32>
    %278 = arith.addf %276, %277 : vector<8x128xf32>
    %cst_110 = arith.constant 5.000000e-01 : f32
    %279 = vector.broadcast %cst_110 : f32 to vector<8x128xf32>
    %280 = arith.mulf %279, %278 : vector<8x128xf32>
    %281 = arith.mulf %270, %244 : vector<8x128xf32>
    %282 = arith.mulf %262, %272 : vector<8x128xf32>
    %283 = arith.addf %281, %282 : vector<8x128xf32>
    %284 = math.tanh %283 : vector<8x128xf32>
    %285 = arith.mulf %280, %284 : vector<8x128xf32>
    %c7_i32 = arith.constant 7 : i32
    %c8_i32_111 = arith.constant 8 : i32
    %286 = arith.muli %c7_i32, %c8_i32_111 : i32
    %287 = tpu.assume_multiple %286, 8 : i32
    %288 = arith.index_cast %287 : i32 to index
    %c0_112 = arith.constant 0 : index
    %289 = vector.load %arg11[%288, %c0_112] : memref<64x512xf32, #tpu.memory_space<vmem>>, vector<8x512xf32>
    %290 = arith.truncf %285 : vector<8x128xf32> to vector<8x128xbf16>
    %c0_113 = arith.constant 0 : index
    %c0_114 = arith.constant 0 : index
    %291 = vector.load %arg4[%c0_113, %c0_114] : memref<128x512xbf16, #tpu.memory_space<vmem>>, vector<128x512xbf16>
    %cst_115 = arith.constant dense<0.000000e+00> : vector<8x512xf32>
    %292 = tpu.matmul %290, %291, %cst_115 {dimension_numbers = #tpu.dot_dimension_numbers<[1], [0], [0], [1], [0, 0, 1, 1], [], []>} : vector<8x128xbf16>, vector<128x512xbf16>, vector<8x512xf32> -> vector<8x512xf32>
    %293 = arith.addf %289, %292 : vector<8x512xf32>
    %294 = vector.extract_strided_slice %293 {offsets = [0, 0], sizes = [8, 128], strides = [1, 1]} : vector<8x512xf32> to vector<8x128xf32>
    %cst_116 = arith.constant 5.000000e-01 : f32
    %295 = vector.broadcast %cst_116 : f32 to vector<8x128xf32>
    %296 = arith.mulf %295, %294 : vector<8x128xf32>
    %297 = math.tanh %296 : vector<8x128xf32>
    %cst_117 = arith.constant 1.000000e+00 : f32
    %298 = vector.broadcast %cst_117 : f32 to vector<8x128xf32>
    %299 = arith.addf %297, %298 : vector<8x128xf32>
    %cst_118 = arith.constant 5.000000e-01 : f32
    %300 = vector.broadcast %cst_118 : f32 to vector<8x128xf32>
    %301 = arith.mulf %300, %299 : vector<8x128xf32>
    %302 = vector.extract_strided_slice %293 {offsets = [0, 128], sizes = [8, 128], strides = [1, 1]} : vector<8x512xf32> to vector<8x128xf32>
    %cst_119 = arith.constant 5.000000e-01 : f32
    %303 = vector.broadcast %cst_119 : f32 to vector<8x128xf32>
    %304 = arith.mulf %303, %302 : vector<8x128xf32>
    %305 = math.tanh %304 : vector<8x128xf32>
    %cst_120 = arith.constant 1.000000e+00 : f32
    %306 = vector.broadcast %cst_120 : f32 to vector<8x128xf32>
    %307 = arith.addf %305, %306 : vector<8x128xf32>
    %cst_121 = arith.constant 5.000000e-01 : f32
    %308 = vector.broadcast %cst_121 : f32 to vector<8x128xf32>
    %309 = arith.mulf %308, %307 : vector<8x128xf32>
    %310 = vector.extract_strided_slice %293 {offsets = [0, 256], sizes = [8, 128], strides = [1, 1]} : vector<8x512xf32> to vector<8x128xf32>
    %311 = math.tanh %310 : vector<8x128xf32>
    %312 = vector.extract_strided_slice %293 {offsets = [0, 384], sizes = [8, 128], strides = [1, 1]} : vector<8x512xf32> to vector<8x128xf32>
    %cst_122 = arith.constant 5.000000e-01 : f32
    %313 = vector.broadcast %cst_122 : f32 to vector<8x128xf32>
    %314 = arith.mulf %313, %312 : vector<8x128xf32>
    %315 = math.tanh %314 : vector<8x128xf32>
    %cst_123 = arith.constant 1.000000e+00 : f32
    %316 = vector.broadcast %cst_123 : f32 to vector<8x128xf32>
    %317 = arith.addf %315, %316 : vector<8x128xf32>
    %cst_124 = arith.constant 5.000000e-01 : f32
    %318 = vector.broadcast %cst_124 : f32 to vector<8x128xf32>
    %319 = arith.mulf %318, %317 : vector<8x128xf32>
    %320 = arith.mulf %309, %283 : vector<8x128xf32>
    %321 = arith.mulf %301, %311 : vector<8x128xf32>
    %322 = arith.addf %320, %321 : vector<8x128xf32>
    %323 = math.tanh %322 : vector<8x128xf32>
    %324 = arith.mulf %319, %323 : vector<8x128xf32>
    %c8_i32_125 = arith.constant 8 : i32
    %c0_126 = arith.constant 0 : index
    %c0_127 = arith.constant 0 : index
    %325 = vector.load %arg9[%c0_126, %c0_127] : memref<8x128xf32, #tpu.memory_space<vmem>>, vector<8x128xf32>
    tpu.vector_store %arg9[%c0_126, %c0_127], %324 {strides = array<i32>} : memref<8x128xf32, #tpu.memory_space<vmem>>, vector<8x128xf32>,
    %c0_128 = arith.constant 0 : index
    %c0_129 = arith.constant 0 : index
    %326 = vector.load %arg10[%c0_128, %c0_129] : memref<8x128xf32, #tpu.memory_space<vmem>>, vector<8x128xf32>
    tpu.vector_store %arg10[%c0_128, %c0_129], %322 {strides = array<i32>} : memref<8x128xf32, #tpu.memory_space<vmem>>, vector<8x128xf32>,
    %c0_i32_130 = arith.constant 0 : i32
    %327 = arith.cmpi eq, %arg1, %c0_i32_130 : i32
    %328 = arith.extui %327 : i1 to i32
    %c0_i32_131 = arith.constant 0 : i32
    %329 = arith.cmpi ne, %328, %c0_i32_131 : i32
    scf.if %329 {
      %c0_132 = arith.constant 0 : index
      %c0_133 = arith.constant 0 : index
      %330 = vector.load %arg9[%c0_132, %c0_133] : memref<8x128xf32, #tpu.memory_space<vmem>>, vector<8x128xf32>
      %331 = arith.truncf %330 : vector<8x128xf32> to vector<8x128xbf16>
      %c0_134 = arith.constant 0 : index
      %c0_135 = arith.constant 0 : index
      %332 = vector.load %arg6[%c0_134, %c0_135] : memref<128x128xbf16, #tpu.memory_space<vmem>>, vector<128x128xbf16>
      %cst_136 = arith.constant dense<0.000000e+00> : vector<8x128xf32>
      %333 = tpu.matmul %331, %332, %cst_136 {dimension_numbers = #tpu.dot_dimension_numbers<[1], [0], [0], [1], [0, 0, 1, 1], [], []>} : vector<8x128xbf16>, vector<128x128xbf16>, vector<8x128xf32> -> vector<8x128xf32>
      %c0_137 = arith.constant 0 : index
      %c0_138 = arith.constant 0 : index
      %334 = vector.load %arg7[%c0_137, %c0_138] : memref<1x128xf32, #tpu.memory_space<vmem>>, vector<1x128xf32>
      %335 = vector.broadcast %334 : vector<1x128xf32> to vector<8x128xf32>
      %336 = arith.addf %333, %335 : vector<8x128xf32>
      %c0_139 = arith.constant 0 : index
      %c0_140 = arith.constant 0 : index
      %337 = vector.load %arg8[%c0_139, %c0_140] : memref<8x128xf32, #tpu.memory_space<vmem>>, vector<8x128xf32>
      tpu.vector_store %arg8[%c0_139, %c0_140], %336 {strides = array<i32>} : memref<8x128xf32, #tpu.memory_space<vmem>>, vector<8x128xf32>,
    } else {
    }
    return
  }
  func.func @transform_0(%arg0: i32, %arg1: i32) -> (i32, i32, i32) {
    %c0_i32 = arith.constant 0 : i32
    %c0_i32_0 = arith.constant 0 : i32
    return %arg0, %arg1, %c0_i32 : i32, i32, i32
  }
  func.func @transform_1(%arg0: i32, %arg1: i32) -> (i32, i32) {
    %c0_i32 = arith.constant 0 : i32
    %c0_i32_0 = arith.constant 0 : i32
    %c0_i32_1 = arith.constant 0 : i32
    return %c0_i32, %c0_i32_0 : i32, i32
  }
  func.func @transform_2(%arg0: i32, %arg1: i32) -> (i32, i32) {
    %c0_i32 = arith.constant 0 : i32
    %c0_i32_0 = arith.constant 0 : i32
    %c0_i32_1 = arith.constant 0 : i32
    return %c0_i32, %c0_i32_0 : i32, i32
  }
  func.func @transform_3(%arg0: i32, %arg1: i32) -> (i32, i32) {
    %c0_i32 = arith.constant 0 : i32
    %c0_i32_0 = arith.constant 0 : i32
    %c0_i32_1 = arith.constant 0 : i32
    return %c0_i32, %c0_i32_0 : i32, i32
  }
  func.func @transform_4(%arg0: i32, %arg1: i32) -> (i32, i32) {
    %c0_i32 = arith.constant 0 : i32
    %c0_i32_0 = arith.constant 0 : i32
    %c0_i32_1 = arith.constant 0 : i32
    return %c0_i32, %c0_i32_0 : i32, i32
  }
  func.func @transform_5(%arg0: i32, %arg1: i32) -> (i32, i32) {
    %c0_i32 = arith.constant 0 : i32
    %c0_i32_0 = arith.constant 0 : i32
    %c0_i32_1 = arith.constant 0 : i32
    return %c0_i32, %c0_i32_0 : i32, i32
  }
  func.func @transform_6(%arg0: i32, %arg1: i32) -> (i32, i32) {
    %c0_i32 = arith.constant 0 : i32
    %c0_i32_0 = arith.constant 0 : i32
    return %arg0, %c0_i32 : i32, i32
  }
}

</mosaic_0001>

<llo_original>
// kernel: tpu_custom_call.1
$region0: #{tpu_custom_call.1}
  #allocation0 [shape = 'u32[]', space=smem, size = 0x4, offset = 0x4, fixed_abs, tag = 'smem constant byte address 0x4 - core index']
  #allocation1 [shape = 'u32[72,128]{1,0:T(1,128)}', space=vmem, size = 0x9000, scoped, tag = 'internal scratch']
  #allocation2 [shape = 'f32[8,128]{1,0:T(8,128)}', space=vmem, size = 0x1000, scoped, tag = 'scratch operand']
  #allocation3 [shape = 'f32[8,128]{1,0:T(8,128)}', space=vmem, size = 0x1000, scoped, tag = 'scratch operand']
  #allocation4 [shape = 'f32[64,512]{1,0:T(8,128)}', space=vmem, size = 0x20000, scoped, tag = 'scratch operand']
  %s0 = inlined_call_operand.hbm [shape: bf16[1,64,128], index: 0, kind: input, shape index: {}]
  %s1 = inlined_call_operand.hbm [shape: bf16[128,512], index: 1, kind: input, shape index: {}]
  %s2 = inlined_call_operand.hbm [shape: bf16[128,512], index: 2, kind: input, shape index: {}]
  %s3 = inlined_call_operand.hbm [shape: f32[1,512], index: 3, kind: input, shape index: {}]
  %s4 = inlined_call_operand.hbm [shape: bf16[128,128], index: 4, kind: input, shape index: {}]
  %s5 = inlined_call_operand.vmem [shape: f32[1,128], index: 5, kind: input, shape index: {}]
  %s6 = inlined_call_operand.hbm [shape: f32[8,128], index: 6, kind: output, shape index: {}]
  %s7 = sld [smem:[#allocation0]]
  $region62: #{tpu_custom_call.1} parent=0
    _
  %s9 = ssub.s32 1, %s7
  %s10 = scalar_select 0, %s9, %s7
  $region1: #{tpu_custom_call.1} parent=0
    #allocation5 [shape = 'u8[16384]{0}', space=vmem, size = 0x4000, scoped, tag = 'input window, operand 0, single buffered']
    #allocation6 [shape = 's32[1]{0}', space=sflag, size = 0x4, scoped, tag = 'scoped memory for tpu_custom_call.1']
    #allocation7 [shape = 's32[1]{0}', space=sflag, size = 0x4, scoped, tag = 'scoped memory for tpu_custom_call.1']
    #allocation8 [shape = 'u8[131072]{0}', space=vmem, size = 0x20000, scoped, tag = 'input window, operand 1, single buffered']
    #allocation9 [shape = 's32[1]{0}', space=sflag, size = 0x4, scoped, tag = 'scoped memory for tpu_custom_call.1']
    #allocation10 [shape = 'u8[131072]{0}', space=vmem, size = 0x20000, scoped, tag = 'input window, operand 2, single buffered']
    #allocation11 [shape = 'u8[2048]{0}', space=vmem, size = 0x800, scoped, tag = 'input window, operand 3, single buffered']
    #allocation12 [shape = 's32[1]{0}', space=sflag, size = 0x4, scoped, tag = 'scoped memory for tpu_custom_call.1']
    #allocation13 [shape = 'u8[32768]{0}', space=vmem, size = 0x8000, scoped, tag = 'input window, operand 4, single buffered']
    #allocation14 [shape = 'u8[4096]{0}', space=vmem, size = 0x1000, scoped, tag = 'output window, operand 0, single buffered']
    %11 = vsyncpa [#allocation6], 0
    %12 = vsyncpa [#allocation9], 0
    %13 = vsyncpa [#allocation12], 0
    %14 = vsyncpa [#allocation7], 0
    // Predicated region
    $region2: #{tpu_custom_call.1} parent=1 // pred_check
      _
    $region3: #{tpu_custom_call.1} parent=1 // pred_check_branch
      %16 = sbr.rel (0) target = $region5
    $region4: #{tpu_custom_call.1} parent=1 // pred_region
      %18 = vsyncadd [#allocation6], 0
      %s19 = sshll.u32 %s0, 4
      %s20 = int_to_ptr.hbm [resolvable:$true] %s19
      %s21 = sshll.u32 [#allocation5], 4
      %s22 = int_to_ptr.vmem [resolvable:$true] %s21
      %27 = dma.hbm_to_vmem [thread:$0]  %s20, 512, %s22, [#allocation6], 64, 64, 4
    $region5: #{tpu_custom_call.1} parent=1 // pred_fallthru
      _
    // Predicated region
    $region6: #{tpu_custom_call.1} parent=1 // pred_check
      _
    $region7: #{tpu_custom_call.1} parent=1 // pred_check_branch
      %29 = sbr.rel (0) target = $region9
    $region8: #{tpu_custom_call.1} parent=1 // pred_region
      %31 = vsyncadd [#allocation9], 0
      %s32 = sshll.u32 %s1, 4
      %s33 = int_to_ptr.hbm [resolvable:$true] %s32
      %s34 = sshll.u32 [#allocation8], 4
      %s35 = int_to_ptr.vmem [resolvable:$true] %s34
      %40 = dma.hbm_to_vmem [thread:$0]  %s33, 4096, %s35, [#allocation9], 256, 256, 16
    $region9: #{tpu_custom_call.1} parent=1 // pred_fallthru
      _
    // Predicated region
    $region10: #{tpu_custom_call.1} parent=1 // pred_check
      _
    $region11: #{tpu_custom_call.1} parent=1 // pred_check_branch
      %42 = sbr.rel (0) target = $region13
    $region12: #{tpu_custom_call.1} parent=1 // pred_region
      %44 = vsyncadd [#allocation9], 0
      %s45 = sshll.u32 %s2, 4
      %s46 = int_to_ptr.hbm [resolvable:$true] %s45
      %s47 = sshll.u32 [#allocation10], 4
      %s48 = int_to_ptr.vmem [resolvable:$true] %s47
      %53 = dma.hbm_to_vmem [thread:$0]  %s46, 4096, %s48, [#allocation9], 256, 256, 16
    $region13: #{tpu_custom_call.1} parent=1 // pred_fallthru
      _
    // Predicated region
    $region14: #{tpu_custom_call.1} parent=1 // pred_check
      _
    $region15: #{tpu_custom_call.1} parent=1 // pred_check_branch
      %55 = sbr.rel (0) target = $region17
    $region16: #{tpu_custom_call.1} parent=1 // pred_region
      %57 = vsyncadd [#allocation12], 0
      %s59 = sshll.u32 %s3, 4
      %s60 = int_to_ptr.hbm [resolvable:$true] %s59
      %s61 = sshll.u32 [#allocation11], 4
      %s62 = int_to_ptr.vmem [resolvable:$true] %s61
      %64 = dma.hbm_to_vmem [thread:$0]  %s60, 64, %s62, [#allocation12]
    $region17: #{tpu_custom_call.1} parent=1 // pred_fallthru
      _
    // Predicated region
    $region18: #{tpu_custom_call.1} parent=1 // pred_check
      _
    $region19: #{tpu_custom_call.1} parent=1 // pred_check_branch
      %66 = sbr.rel (0) target = $region21
    $region20: #{tpu_custom_call.1} parent=1 // pred_region
      %68 = vsyncadd [#allocation12], 0
      %s69 = sshll.u32 %s4, 4
      %s70 = int_to_ptr.hbm [resolvable:$true] %s69
      %s71 = sshll.u32 [#allocation13], 4
      %s72 = int_to_ptr.vmem [resolvable:$true] %s71
      %77 = dma.hbm_to_vmem [thread:$0]  %s70, 1024, %s72, [#allocation12], 64, 64, 4
    $region21: #{tpu_custom_call.1} parent=1 // pred_fallthru
      _
    // Predicated region
    $region22: #{tpu_custom_call.1} parent=1 // pred_check
      _
    $region23: #{tpu_custom_call.1} parent=1 // pred_check_branch
      %79 = sbr.rel (0) target = $region25
    $region24: #{tpu_custom_call.1} parent=1 // pred_region
      _
    $region25: #{tpu_custom_call.1} parent=1 // pred_fallthru
      _
    // Predicated region
    $region26: #{tpu_custom_call.1} parent=1 // pred_check
      _
    $region27: #{tpu_custom_call.1} parent=1 // pred_check_branch
      %81 = sbr.rel (0) target = $region29
    $region28: #{tpu_custom_call.1} parent=1 // pred_region
      %83 = dma.done [#allocation6], 512
    $region29: #{tpu_custom_call.1} parent=1 // pred_fallthru
      _
    // Predicated region
    $region30: #{tpu_custom_call.1} parent=1 // pred_check
      _
    $region31: #{tpu_custom_call.1} parent=1 // pred_check_branch
      %85 = sbr.rel (0) target = $region33
    $region32: #{tpu_custom_call.1} parent=1 // pred_region
      %87 = dma.done [#allocation9], 4096
    $region33: #{tpu_custom_call.1} parent=1 // pred_fallthru
      _
    // Predicated region
    $region34: #{tpu_custom_call.1} parent=1 // pred_check
      _
    $region35: #{tpu_custom_call.1} parent=1 // pred_check_branch
      %89 = sbr.rel (0) target = $region37
    $region36: #{tpu_custom_call.1} parent=1 // pred_region
      %91 = dma.done [#allocation9], 4096
    $region37: #{tpu_custom_call.1} parent=1 // pred_fallthru
      _
    // Predicated region
    $region38: #{tpu_custom_call.1} parent=1 // pred_check
      _
    $region39: #{tpu_custom_call.1} parent=1 // pred_check_branch
      %93 = sbr.rel (0) target = $region41
    $region40: #{tpu_custom_call.1} parent=1 // pred_region
      %95 = dma.done [#allocation12], 64
    $region41: #{tpu_custom_call.1} parent=1 // pred_fallthru
      _
    // Predicated region
    $region42: #{tpu_custom_call.1} parent=1 // pred_check
      _
    $region43: #{tpu_custom_call.1} parent=1 // pred_check_branch
      %97 = sbr.rel (0) target = $region45
    $region44: #{tpu_custom_call.1} parent=1 // pred_region
      %99 = dma.done [#allocation12], 1024
    $region45: #{tpu_custom_call.1} parent=1 // pred_fallthru
      _
    %p100 = scmp.eq.s32.totalorder 0, 0
    // Predicated region
    $region46: #{tpu_custom_call.1} parent=1 // pred_check
      %p101 = pneg %p100
    $region47: #{tpu_custom_call.1} parent=1 // pred_check_branch
      %103 = sbr.rel (%p101) target = $region49
    $region48: #{tpu_custom_call.1} parent=1 // pred_region
      %104 = vst [vmem:[#allocation2] sm:$0xff] 0.0
      %105 = vst [vmem:[#allocation3] sm:$0xff] 0.0
    $region49: #{tpu_custom_call.1} parent=1 // pred_fallthru
      _
    %v106 = vld [vmem:[#allocation5] sm:$0xf]
    %v107 = vld [vmem:[#allocation5 + $0x4] sm:$0xf]
    %v108 = vld [vmem:[#allocation5 + $0x8] sm:$0xf]
    %v109 = vld [vmem:[#allocation5 + $0xc] sm:$0xf]
    %v110 = vld [vmem:[#allocation5 + $0x10] sm:$0xf]
    %v111 = vld [vmem:[#allocation5 + $0x14] sm:$0xf]
    %v112 = vld [vmem:[#allocation5 + $0x18] sm:$0xf]
    %v113 = vld [vmem:[#allocation5 + $0x1c] sm:$0xf]
    %v114 = vld [vmem:[#allocation8] sm:$0xff]
    %v115 = vld [vmem:[#allocation8 + $0x8] sm:$0xff]
    %v116 = vld [vmem:[#allocation8 + $0x10] sm:$0xff]
    %v117 = vld [vmem:[#allocation8 + $0x18] sm:$0xff]
    %v118 = vld [vmem:[#allocation8 + $0x20] sm:$0xff]
    %v119 = vld [vmem:[#allocation8 + $0x28] sm:$0xff]
    %v120 = vld [vmem:[#allocation8 + $0x30] sm:$0xff]
    %v121 = vld [vmem:[#allocation8 + $0x38] sm:$0xff]
    %v122 = vld [vmem:[#allocation8 + $0x40] sm:$0xff]
    %v123 = vld [vmem:[#allocation8 + $0x48] sm:$0xff]
    %v124 = vld [vmem:[#allocation8 + $0x50] sm:$0xff]
    %v125 = vld [vmem:[#allocation8 + $0x58] sm:$0xff]
    %v126 = vld [vmem:[#allocation8 + $0x60] sm:$0xff]
    %v127 = vld [vmem:[#allocation8 + $0x68] sm:$0xff]
    %v128 = vld [vmem:[#allocation8 + $0x70] sm:$0xff]
    %v129 = vld [vmem:[#allocation8 + $0x78] sm:$0xff]
    %v130 = vld [vmem:[#allocation8 + $0x80] sm:$0xff]
    %v131 = vld [vmem:[#allocation8 + $0x88] sm:$0xff]
    %v132 = vld [vmem:[#allocation8 + $0x90] sm:$0xff]
    %v133 = vld [vmem:[#allocation8 + $0x98] sm:$0xff]
    %v134 = vld [vmem:[#allocation8 + $0xa0] sm:$0xff]
    %v135 = vld [vmem:[#allocation8 + $0xa8] sm:$0xff]
    %v136 = vld [vmem:[#allocation8 + $0xb0] sm:$0xff]
    %v137 = vld [vmem:[#allocation8 + $0xb8] sm:$0xff]
    %v138 = vld [vmem:[#allocation8 + $0xc0] sm:$0xff]
    %v139 = vld [vmem:[#allocation8 + $0xc8] sm:$0xff]
    %v140 = vld [vmem:[#allocation8 + $0xd0] sm:$0xff]
    %v141 = vld [vmem:[#allocation8 + $0xd8] sm:$0xff]
    %v142 = vld [vmem:[#allocation8 + $0xe0] sm:$0xff]
    %v143 = vld [vmem:[#allocation8 + $0xe8] sm:$0xff]
    %v144 = vld [vmem:[#allocation8 + $0xf0] sm:$0xff]
    %v145 = vld [vmem:[#allocation8 + $0xf8] sm:$0xff]
    %v146 = vld [vmem:[#allocation11] sm:$0xf]
    %v148 = vperm.slane %v146, 0
    %v149 = vperm.slane %v146, 1
    %v150 = vperm.slane %v146, 2
    %v151 = vperm.slane %v146, 3
    %v164 = vunpack.c.l.b16 %v106
    %v165 = vunpack.c.l.b16 %v107
    %v166 = vunpack.c.l.b16 %v108
    %v167 = vunpack.c.l.b16 %v109
    %v168 = vunpack.c.l.b16 %v110
    %v169 = vunpack.c.l.b16 %v111
    %v170 = vunpack.c.l.b16 %v112
    %v171 = vunpack.c.l.b16 %v113
    %v172 = vpack.c.b16 %v165, %v164
    %v173 = vpack.c.b16 %v167, %v166
    %v174 = vpack.c.b16 %v169, %v168
    %v175 = vpack.c.b16 %v171, %v170
    %v212 = vunpack.c.l.b16 %v114
    %v213 = vunpack.c.h.b16 %v114
    %v214 = vunpack.c.l.b16 %v115
    %v215 = vunpack.c.h.b16 %v115
    %v216 = vunpack.c.l.b16 %v116
    %v217 = vunpack.c.h.b16 %v116
    %v218 = vunpack.c.l.b16 %v117
    %v219 = vunpack.c.h.b16 %v117
    %v220 = vunpack.c.l.b16 %v118
    %v221 = vunpack.c.h.b16 %v118
    %v222 = vunpack.c.l.b16 %v119
    %v223 = vunpack.c.h.b16 %v119
    %v224 = vunpack.c.l.b16 %v120
    %v225 = vunpack.c.h.b16 %v120
    %v226 = vunpack.c.l.b16 %v121
    %v227 = vunpack.c.h.b16 %v121
    %v228 = vunpack.c.l.b16 %v122
    %v229 = vunpack.c.h.b16 %v122
    %v230 = vunpack.c.l.b16 %v123
    %v231 = vunpack.c.h.b16 %v123
    %v232 = vunpack.c.l.b16 %v124
    %v233 = vunpack.c.h.b16 %v124
    %v234 = vunpack.c.l.b16 %v125
    %v235 = vunpack.c.h.b16 %v125
    %v236 = vunpack.c.l.b16 %v126
    %v237 = vunpack.c.h.b16 %v126
    %v238 = vunpack.c.l.b16 %v127
    %v239 = vunpack.c.h.b16 %v127
    %v240 = vunpack.c.l.b16 %v128
    %v241 = vunpack.c.h.b16 %v128
    %v242 = vunpack.c.l.b16 %v129
    %v243 = vunpack.c.h.b16 %v129
    %v244 = vunpack.c.l.b16 %v130
    %v245 = vunpack.c.h.b16 %v130
    %v246 = vunpack.c.l.b16 %v131
    %v247 = vunpack.c.h.b16 %v131
    %v248 = vunpack.c.l.b16 %v132
    %v249 = vunpack.c.h.b16 %v132
    %v250 = vunpack.c.l.b16 %v133
    %v251 = vunpack.c.h.b16 %v133
    %v252 = vunpack.c.l.b16 %v134
    %v253 = vunpack.c.h.b16 %v134
    %v254 = vunpack.c.l.b16 %v135
    %v255 = vunpack.c.h.b16 %v135
    %v256 = vunpack.c.l.b16 %v136
    %v257 = vunpack.c.h.b16 %v136
    %v258 = vunpack.c.l.b16 %v137
    %v259 = vunpack.c.h.b16 %v137
    %v260 = vunpack.c.l.b16 %v138
    %v261 = vunpack.c.h.b16 %v138
    %v262 = vunpack.c.l.b16 %v139
    %v263 = vunpack.c.h.b16 %v139
    %v264 = vunpack.c.l.b16 %v140
    %v265 = vunpack.c.h.b16 %v140
    %v266 = vunpack.c.l.b16 %v141
    %v267 = vunpack.c.h.b16 %v141
    %v268 = vunpack.c.l.b16 %v142
    %v269 = vunpack.c.h.b16 %v142
    %v270 = vunpack.c.l.b16 %v143
    %v271 = vunpack.c.h.b16 %v143
    %v272 = vunpack.c.l.b16 %v144
    %v273 = vunpack.c.h.b16 %v144
    %v274 = vunpack.c.l.b16 %v145
    %v275 = vunpack.c.h.b16 %v145
    %v276 = vpack.c.b16 %v216, %v212
    %v277 = vpack.c.b16 %v217, %v213
    %v278 = vpack.c.b16 %v218, %v214
    %v279 = vpack.c.b16 %v219, %v215
    %v280 = vpack.c.b16 %v224, %v220
    %v281 = vpack.c.b16 %v225, %v221
    %v282 = vpack.c.b16 %v226, %v222
    %v283 = vpack.c.b16 %v227, %v223
    %v284 = vpack.c.b16 %v232, %v228
    %v285 = vpack.c.b16 %v233, %v229
    %v286 = vpack.c.b16 %v234, %v230
    %v287 = vpack.c.b16 %v235, %v231
    %v288 = vpack.c.b16 %v240, %v236
    %v289 = vpack.c.b16 %v241, %v237
    %v290 = vpack.c.b16 %v242, %v238
    %v291 = vpack.c.b16 %v243, %v239
    %v292 = vpack.c.b16 %v248, %v244
    %v293 = vpack.c.b16 %v249, %v245
    %v294 = vpack.c.b16 %v250, %v246
    %v295 = vpack.c.b16 %v251, %v247
    %v296 = vpack.c.b16 %v256, %v252
    %v297 = vpack.c.b16 %v257, %v253
    %v298 = vpack.c.b16 %v258, %v254
    %v299 = vpack.c.b16 %v259, %v255
    %v300 = vpack.c.b16 %v264, %v260
    %v301 = vpack.c.b16 %v265, %v261
    %v302 = vpack.c.b16 %v266, %v262
    %v303 = vpack.c.b16 %v267, %v263
    %v304 = vpack.c.b16 %v272, %v268
    %v305 = vpack.c.b16 %v273, %v269
    %v306 = vpack.c.b16 %v274, %v270
    %v307 = vpack.c.b16 %v275, %v271
    %340 = vmatpush.bf16.msra.mxu0 %v304
    %341 = vmatpush.bf16.msra.mxu0 %v300
    %342 = vmatpush.bf16.msra.mxu0 %v296
    %343 = vmatpush.bf16.msra.mxu0 %v292
    %344 = vmatpush.bf16.msra.mxu0 %v288
    %345 = vmatpush.bf16.msra.mxu0 %v284
    %346 = vmatpush.bf16.msra.mxu0 %v280
    %347 = vmatpush.bf16.msra.mxu0 %v276
    %348 = vmatmul.bf16.gmra.mxu0 %v172
    %v349 = vpop.f32.mrf.mxu0
    %v350 = vadd.f32 %v148, %v349
    %v351 = vpop.f32.mrf.mxu0
    %v352 = vadd.f32 %v148, %v351
    %353 = vmatmul.bf16.gmra.mxu0 %v173
    %v354 = vpop.f32.mrf.mxu0
    %v355 = vadd.f32 %v148, %v354
    %v356 = vpop.f32.mrf.mxu0
    %v357 = vadd.f32 %v148, %v356
    %358 = vmatmul.bf16.gmra.mxu0 %v174
    %v359 = vpop.f32.mrf.mxu0
    %v360 = vadd.f32 %v148, %v359
    %v361 = vpop.f32.mrf.mxu0
    %v362 = vadd.f32 %v148, %v361
    %363 = vmatmul.bf16.gmra.mxu0 %v175
    %v364 = vpop.f32.mrf.mxu0
    %v365 = vadd.f32 %v148, %v364
    %v366 = vpop.f32.mrf.mxu0
    %v367 = vadd.f32 %v148, %v366
    %368 = vdwg.mxu0
    %369 = vmatpush.bf16.msra.mxu0 %v305
    %370 = vmatpush.bf16.msra.mxu0 %v301
    %371 = vmatpush.bf16.msra.mxu0 %v297
    %372 = vmatpush.bf16.msra.mxu0 %v293
    %373 = vmatpush.bf16.msra.mxu0 %v289
    %374 = vmatpush.bf16.msra.mxu0 %v285
    %375 = vmatpush.bf16.msra.mxu0 %v281
    %376 = vmatpush.bf16.msra.mxu0 %v277
    %377 = vmatmul.bf16.gmra.mxu0 %v172
    %v378 = vpop.f32.mrf.mxu0
    %v379 = vadd.f32 %v149, %v378
    %v380 = vpop.f32.mrf.mxu0
    %v381 = vadd.f32 %v149, %v380
    %382 = vmatmul.bf16.gmra.mxu0 %v173
    %v383 = vpop.f32.mrf.mxu0
    %v384 = vadd.f32 %v149, %v383
    %v385 = vpop.f32.mrf.mxu0
    %v386 = vadd.f32 %v149, %v385
    %387 = vmatmul.bf16.gmra.mxu0 %v174
    %v388 = vpop.f32.mrf.mxu0
    %v389 = vadd.f32 %v149, %v388
    %v390 = vpop.f32.mrf.mxu0
    %v391 = vadd.f32 %v149, %v390
    %392 = vmatmul.bf16.gmra.mxu0 %v175
    %v393 = vpop.f32.mrf.mxu0
    %v394 = vadd.f32 %v149, %v393
    %v395 = vpop.f32.mrf.mxu0
    %v396 = vadd.f32 %v149, %v395
    %397 = vdwg.mxu0
    %398 = vmatpush.bf16.msra.mxu0 %v306
    %399 = vmatpush.bf16.msra.mxu0 %v302
    %400 = vmatpush.bf16.msra.mxu0 %v298
    %401 = vmatpush.bf16.msra.mxu0 %v294
    %402 = vmatpush.bf16.msra.mxu0 %v290
    %403 = vmatpush.bf16.msra.mxu0 %v286
    %404 = vmatpush.bf16.msra.mxu0 %v282
    %405 = vmatpush.bf16.msra.mxu0 %v278
    %406 = vmatmul.bf16.gmra.mxu0 %v172
    %v407 = vpop.f32.mrf.mxu0
    %v408 = vadd.f32 %v150, %v407
    %v409 = vpop.f32.mrf.mxu0
    %v410 = vadd.f32 %v150, %v409
    %411 = vmatmul.bf16.gmra.mxu0 %v173
    %v412 = vpop.f32.mrf.mxu0
    %v413 = vadd.f32 %v150, %v412
    %v414 = vpop.f32.mrf.mxu0
    %v415 = vadd.f32 %v150, %v414
    %416 = vmatmul.bf16.gmra.mxu0 %v174
    %v417 = vpop.f32.mrf.mxu0
    %v418 = vadd.f32 %v150, %v417
    %v419 = vpop.f32.mrf.mxu0
    %v420 = vadd.f32 %v150, %v419
    %421 = vmatmul.bf16.gmra.mxu0 %v175
    %v422 = vpop.f32.mrf.mxu0
    %v423 = vadd.f32 %v150, %v422
    %v424 = vpop.f32.mrf.mxu0
    %v425 = vadd.f32 %v150, %v424
    %426 = vdwg.mxu0
    %427 = vmatpush.bf16.msra.mxu0 %v307
    %428 = vmatpush.bf16.msra.mxu0 %v303
    %429 = vmatpush.bf16.msra.mxu0 %v299
    %430 = vmatpush.bf16.msra.mxu0 %v295
    %431 = vmatpush.bf16.msra.mxu0 %v291
    %432 = vmatpush.bf16.msra.mxu0 %v287
    %433 = vmatpush.bf16.msra.mxu0 %v283
    %434 = vmatpush.bf16.msra.mxu0 %v279
    %435 = vmatmul.bf16.gmra.mxu0 %v172
    %v436 = vpop.f32.mrf.mxu0
    %v437 = vadd.f32 %v151, %v436
    %v438 = vpop.f32.mrf.mxu0
    %v439 = vadd.f32 %v151, %v438
    %440 = vmatmul.bf16.gmra.mxu0 %v173
    %v441 = vpop.f32.mrf.mxu0
    %v442 = vadd.f32 %v151, %v441
    %v443 = vpop.f32.mrf.mxu0
    %v444 = vadd.f32 %v151, %v443
    %445 = vmatmul.bf16.gmra.mxu0 %v174
    %v446 = vpop.f32.mrf.mxu0
    %v447 = vadd.f32 %v151, %v446
    %v448 = vpop.f32.mrf.mxu0
    %v449 = vadd.f32 %v151, %v448
    %450 = vmatmul.bf16.gmra.mxu0 %v175
    %v451 = vpop.f32.mrf.mxu0
    %v452 = vadd.f32 %v151, %v451
    %v453 = vpop.f32.mrf.mxu0
    %v454 = vadd.f32 %v151, %v453
    %455 = vdwg.mxu0
    %456 = vst [vmem:[#allocation4] sm:$0xff] %v350
    %457 = vst [vmem:[#allocation4 + $0x8] sm:$0xff] %v379
    %458 = vst [vmem:[#allocation4 + $0x10] sm:$0xff] %v408
    %459 = vst [vmem:[#allocation4 + $0x18] sm:$0xff] %v437
    %460 = vst [vmem:[#allocation4 + $0x20] sm:$0xff] %v352
    %461 = vst [vmem:[#allocation4 + $0x28] sm:$0xff] %v381
    %462 = vst [vmem:[#allocation4 + $0x30] sm:$0xff] %v410
    %463 = vst [vmem:[#allocation4 + $0x38] sm:$0xff] %v439
    %464 = vst [vmem:[#allocation4 + $0x40] sm:$0xff] %v355
    %465 = vst [vmem:[#allocation4 + $0x48] sm:$0xff] %v384
    %466 = vst [vmem:[#allocation4 + $0x50] sm:$0xff] %v413
    %467 = vst [vmem:[#allocation4 + $0x58] sm:$0xff] %v442
    %468 = vst [vmem:[#allocation4 + $0x60] sm:$0xff] %v357
    %469 = vst [vmem:[#allocation4 + $0x68] sm:$0xff] %v386
    %470 = vst [vmem:[#allocation4 + $0x70] sm:$0xff] %v415
    %471 = vst [vmem:[#allocation4 + $0x78] sm:$0xff] %v444
    %472 = vst [vmem:[#allocation4 + $0x80] sm:$0xff] %v360
    %473 = vst [vmem:[#allocation4 + $0x88] sm:$0xff] %v389
    %474 = vst [vmem:[#allocation4 + $0x90] sm:$0xff] %v418
    %475 = vst [vmem:[#allocation4 + $0x98] sm:$0xff] %v447
    %476 = vst [vmem:[#allocation4 + $0xa0] sm:$0xff] %v362
    %477 = vst [vmem:[#allocation4 + $0xa8] sm:$0xff] %v391
    %478 = vst [vmem:[#allocation4 + $0xb0] sm:$0xff] %v420
    %479 = vst [vmem:[#allocation4 + $0xb8] sm:$0xff] %v449
    %480 = vst [vmem:[#allocation4 + $0xc0] sm:$0xff] %v365
    %481 = vst [vmem:[#allocation4 + $0xc8] sm:$0xff] %v394
    %482 = vst [vmem:[#allocation4 + $0xd0] sm:$0xff] %v423
    %483 = vst [vmem:[#allocation4 + $0xd8] sm:$0xff] %v452
    %484 = vst [vmem:[#allocation4 + $0xe0] sm:$0xff] %v367
    %485 = vst [vmem:[#allocation4 + $0xe8] sm:$0xff] %v396
    %486 = vst [vmem:[#allocation4 + $0xf0] sm:$0xff] %v425
    %487 = vst [vmem:[#allocation4 + $0xf8] sm:$0xff] %v454
    %v488 = vld [vmem:[#allocation2] sm:$0xff]
    %v489 = vld [vmem:[#allocation3] sm:$0xff]
    %s490 = smul.u32 0, 4
    %s491 = smul.addr %s490, 8
    %s492 = scalar_lea.vmem [#allocation4], %s491
    %v493 = vld [vmem:[%s492] sm:$0xff]
    %v494 = vld [vmem:[%s492 + $0x8] sm:$0xff]
    %v495 = vld [vmem:[%s492 + $0x10] sm:$0xff]
    %v496 = vld [vmem:[%s492 + $0x18] sm:$0xff]
    %v497 = vpack.c.bf16 %v488, %v488
    %v498 = vld [vmem:[#allocation10] sm:$0xff]
    %v499 = vld [vmem:[#allocation10 + $0x8] sm:$0xff]
    %v500 = vld [vmem:[#allocation10 + $0x10] sm:$0xff]
    %v501 = vld [vmem:[#allocation10 + $0x18] sm:$0xff]
    %v502 = vld [vmem:[#allocation10 + $0x20] sm:$0xff]
    %v503 = vld [vmem:[#allocation10 + $0x28] sm:$0xff]
    %v504 = vld [vmem:[#allocation10 + $0x30] sm:$0xff]
    %v505 = vld [vmem:[#allocation10 + $0x38] sm:$0xff]
    %v506 = vld [vmem:[#allocation10 + $0x40] sm:$0xff]
    %v507 = vld [vmem:[#allocation10 + $0x48] sm:$0xff]
    %v508 = vld [vmem:[#allocation10 + $0x50] sm:$0xff]
    %v509 = vld [vmem:[#allocation10 + $0x58] sm:$0xff]
    %v510 = vld [vmem:[#allocation10 + $0x60] sm:$0xff]
    %v511 = vld [vmem:[#allocation10 + $0x68] sm:$0xff]
    %v512 = vld [vmem:[#allocation10 + $0x70] sm:$0xff]
    %v513 = vld [vmem:[#allocation10 + $0x78] sm:$0xff]
    %v514 = vld [vmem:[#allocation10 + $0x80] sm:$0xff]
    %v515 = vld [vmem:[#allocation10 + $0x88] sm:$0xff]
    %v516 = vld [vmem:[#allocation10 + $0x90] sm:$0xff]
    %v517 = vld [vmem:[#allocation10 + $0x98] sm:$0xff]
    %v518 = vld [vmem:[#allocation10 + $0xa0] sm:$0xff]
    %v519 = vld [vmem:[#allocation10 + $0xa8] sm:$0xff]
    %v520 = vld [vmem:[#allocation10 + $0xb0] sm:$0xff]
    %v521 = vld [vmem:[#allocation10 + $0xb8] sm:$0xff]
    %v522 = vld [vmem:[#allocation10 + $0xc0] sm:$0xff]
    %v523 = vld [vmem:[#allocation10 + $0xc8] sm:$0xff]
    %v524 = vld [vmem:[#allocation10 + $0xd0] sm:$0xff]
    %v525 = vld [vmem:[#allocation10 + $0xd8] sm:$0xff]
    %v526 = vld [vmem:[#allocation10 + $0xe0] sm:$0xff]
    %v527 = vld [vmem:[#allocation10 + $0xe8] sm:$0xff]
    %v528 = vld [vmem:[#allocation10 + $0xf0] sm:$0xff]
    %v529 = vld [vmem:[#allocation10 + $0xf8] sm:$0xff]
    %v562 = vunpack.c.l.b16 %v498
    %v563 = vunpack.c.h.b16 %v498
    %v564 = vunpack.c.l.b16 %v499
    %v565 = vunpack.c.h.b16 %v499
    %v566 = vunpack.c.l.b16 %v500
    %v567 = vunpack.c.h.b16 %v500
    %v568 = vunpack.c.l.b16 %v501
    %v569 = vunpack.c.h.b16 %v501
    %v570 = vunpack.c.l.b16 %v502
    %v571 = vunpack.c.h.b16 %v502
    %v572 = vunpack.c.l.b16 %v503
    %v573 = vunpack.c.h.b16 %v503
    %v574 = vunpack.c.l.b16 %v504
    %v575 = vunpack.c.h.b16 %v504
    %v576 = vunpack.c.l.b16 %v505
    %v577 = vunpack.c.h.b16 %v505
    %v578 = vunpack.c.l.b16 %v506
    %v579 = vunpack.c.h.b16 %v506
    %v580 = vunpack.c.l.b16 %v507
    %v581 = vunpack.c.h.b16 %v507
    %v582 = vunpack.c.l.b16 %v508
    %v583 = vunpack.c.h.b16 %v508
    %v584 = vunpack.c.l.b16 %v509
    %v585 = vunpack.c.h.b16 %v509
    %v586 = vunpack.c.l.b16 %v510
    %v587 = vunpack.c.h.b16 %v510
    %v588 = vunpack.c.l.b16 %v511
    %v589 = vunpack.c.h.b16 %v511
    %v590 = vunpack.c.l.b16 %v512
    %v591 = vunpack.c.h.b16 %v512
    %v592 = vunpack.c.l.b16 %v513
    %v593 = vunpack.c.h.b16 %v513
    %v594 = vunpack.c.l.b16 %v514
    %v595 = vunpack.c.h.b16 %v514
    %v596 = vunpack.c.l.b16 %v515
    %v597 = vunpack.c.h.b16 %v515
    %v598 = vunpack.c.l.b16 %v516
    %v599 = vunpack.c.h.b16 %v516
    %v600 = vunpack.c.l.b16 %v517
    %v601 = vunpack.c.h.b16 %v517
    %v602 = vunpack.c.l.b16 %v518
    %v603 = vunpack.c.h.b16 %v518
    %v604 = vunpack.c.l.b16 %v519
    %v605 = vunpack.c.h.b16 %v519
    %v606 = vunpack.c.l.b16 %v520
    %v607 = vunpack.c.h.b16 %v520
    %v608 = vunpack.c.l.b16 %v521
    %v609 = vunpack.c.h.b16 %v521
    %v610 = vunpack.c.l.b16 %v522
    %v611 = vunpack.c.h.b16 %v522
    %v612 = vunpack.c.l.b16 %v523
    %v613 = vunpack.c.h.b16 %v523
    %v614 = vunpack.c.l.b16 %v524
    %v615 = vunpack.c.h.b16 %v524
    %v616 = vunpack.c.l.b16 %v525
    %v617 = vunpack.c.h.b16 %v525
    %v618 = vunpack.c.l.b16 %v526
    %v619 = vunpack.c.h.b16 %v526
    %v620 = vunpack.c.l.b16 %v527
    %v621 = vunpack.c.h.b16 %v527
    %v622 = vunpack.c.l.b16 %v528
    %v623 = vunpack.c.h.b16 %v528
    %v624 = vunpack.c.l.b16 %v529
    %v625 = vunpack.c.h.b16 %v529
    %v626 = vpack.c.b16 %v566, %v562
    %v627 = vpack.c.b16 %v567, %v563
    %v628 = vpack.c.b16 %v568, %v564
    %v629 = vpack.c.b16 %v569, %v565
    %v630 = vpack.c.b16 %v574, %v570
    %v631 = vpack.c.b16 %v575, %v571
    %v632 = vpack.c.b16 %v576, %v572
    %v633 = vpack.c.b16 %v577, %v573
    %v634 = vpack.c.b16 %v582, %v578
    %v635 = vpack.c.b16 %v583, %v579
    %v636 = vpack.c.b16 %v584, %v580
    %v637 = vpack.c.b16 %v585, %v581
    %v638 = vpack.c.b16 %v590, %v586
    %v639 = vpack.c.b16 %v591, %v587
    %v640 = vpack.c.b16 %v592, %v588
    %v641 = vpack.c.b16 %v593, %v589
    %v642 = vpack.c.b16 %v598, %v594
    %v643 = vpack.c.b16 %v599, %v595
    %v644 = vpack.c.b16 %v600, %v596
    %v645 = vpack.c.b16 %v601, %v597
    %v646 = vpack.c.b16 %v606, %v602
    %v647 = vpack.c.b16 %v607, %v603
    %v648 = vpack.c.b16 %v608, %v604
    %v649 = vpack.c.b16 %v609, %v605
    %v650 = vpack.c.b16 %v614, %v610
    %v651 = vpack.c.b16 %v615, %v611
    %v652 = vpack.c.b16 %v616, %v612
    %v653 = vpack.c.b16 %v617, %v613
    %v654 = vpack.c.b16 %v622, %v618
    %v655 = vpack.c.b16 %v623, %v619
    %v656 = vpack.c.b16 %v624, %v620
    %v657 = vpack.c.b16 %v625, %v621
    %690 = vmatpush.bf16.msra.mxu0 %v654
    %691 = vmatpush.bf16.msra.mxu0 %v650
    %692 = vmatpush.bf16.msra.mxu0 %v646
    %693 = vmatpush.bf16.msra.mxu0 %v642
    %694 = vmatpush.bf16.msra.mxu0 %v638
    %695 = vmatpush.bf16.msra.mxu0 %v634
    %696 = vmatpush.bf16.msra.mxu0 %v630
    %697 = vmatpush.bf16.msra.mxu0 %v626
    %698 = vmatmul.bf16.gmra.mxu0 %v497
    %v699 = vpop.f32.mrf.mxu0
    %v700 = vadd.f32 0.0, %v699
    %v701 = vpop.f32.mrf.mxu0
    %702 = vdwg.mxu0
    %703 = vmatpush.bf16.msra.mxu0 %v655
    %704 = vmatpush.bf16.msra.mxu0 %v651
    %705 = vmatpush.bf16.msra.mxu0 %v647
    %706 = vmatpush.bf16.msra.mxu0 %v643
    %707 = vmatpush.bf16.msra.mxu0 %v639
    %708 = vmatpush.bf16.msra.mxu0 %v635
    %709 = vmatpush.bf16.msra.mxu0 %v631
    %710 = vmatpush.bf16.msra.mxu0 %v627
    %711 = vmatmul.bf16.gmra.mxu0 %v497
    %v712 = vpop.f32.mrf.mxu0
    %v713 = vadd.f32 0.0, %v712
    %v714 = vpop.f32.mrf.mxu0
    %715 = vdwg.mxu0
    %716 = vmatpush.bf16.msra.mxu0 %v656
    %717 = vmatpush.bf16.msra.mxu0 %v652
    %718 = vmatpush.bf16.msra.mxu0 %v648
    %719 = vmatpush.bf16.msra.mxu0 %v644
    %720 = vmatpush.bf16.msra.mxu0 %v640
    %721 = vmatpush.bf16.msra.mxu0 %v636
    %722 = vmatpush.bf16.msra.mxu0 %v632
    %723 = vmatpush.bf16.msra.mxu0 %v628
    %724 = vmatmul.bf16.gmra.mxu0 %v497
    %v725 = vpop.f32.mrf.mxu0
    %v726 = vadd.f32 0.0, %v725
    %v727 = vpop.f32.mrf.mxu0
    %728 = vdwg.mxu0
    %729 = vmatpush.bf16.msra.mxu0 %v657
    %730 = vmatpush.bf16.msra.mxu0 %v653
    %731 = vmatpush.bf16.msra.mxu0 %v649
    %732 = vmatpush.bf16.msra.mxu0 %v645
    %733 = vmatpush.bf16.msra.mxu0 %v641
    %734 = vmatpush.bf16.msra.mxu0 %v637
    %735 = vmatpush.bf16.msra.mxu0 %v633
    %736 = vmatpush.bf16.msra.mxu0 %v629
    %737 = vmatmul.bf16.gmra.mxu0 %v497
    %v738 = vpop.f32.mrf.mxu0
    %v739 = vadd.f32 0.0, %v738
    %v740 = vpop.f32.mrf.mxu0
    %741 = vdwg.mxu0
    %v742 = vadd.f32 %v493, %v700
    %v743 = vadd.f32 %v494, %v713
    %v744 = vadd.f32 %v495, %v726
    %v745 = vadd.f32 %v496, %v739
    %v746 = vmul.f32 %v742, 0.5
    %v747 = vtanh.pop %v746
    %v748 = vadd.f32 %v747, 1.0
    %v749 = vmul.f32 %v748, 0.5
    %v750 = vmul.f32 %v743, 0.5
    %v751 = vtanh.pop %v750
    %v752 = vadd.f32 %v751, 1.0
    %v753 = vmul.f32 %v752, 0.5
    %v754 = vtanh.pop %v744
    %v755 = vmul.f32 %v745, 0.5
    %v756 = vtanh.pop %v755
    %v757 = vadd.f32 %v756, 1.0
    %v758 = vmul.f32 %v757, 0.5
    %v759 = vmul.f32 %v753, %v489
    %v760 = vmul.f32 %v749, %v754
    %v761 = vadd.f32 %v759, %v760
    %v762 = vtanh.pop %v761
    %v763 = vmul.f32 %v758, %v762
    %s764 = smul.u32 1, 4
    %s765 = smul.addr %s764, 8
    %s766 = scalar_lea.vmem [#allocation4], %s765
    %v767 = vld [vmem:[%s766] sm:$0xff]
    %v768 = vld [vmem:[%s766 + $0x8] sm:$0xff]
    %v769 = vld [vmem:[%s766 + $0x10] sm:$0xff]
    %v770 = vld [vmem:[%s766 + $0x18] sm:$0xff]
    %v771 = vpack.c.bf16 %v763, %v763
    %772 = vmatpush.bf16.msra.mxu0 %v654
    %773 = vmatpush.bf16.msra.mxu0 %v650
    %774 = vmatpush.bf16.msra.mxu0 %v646
    %775 = vmatpush.bf16.msra.mxu0 %v642
    %776 = vmatpush.bf16.msra.mxu0 %v638
    %777 = vmatpush.bf16.msra.mxu0 %v634
    %778 = vmatpush.bf16.msra.mxu0 %v630
    %779 = vmatpush.bf16.msra.mxu0 %v626
    %780 = vmatmul.bf16.gmra.mxu0 %v771
    %v781 = vpop.f32.mrf.mxu0
    %v782 = vadd.f32 0.0, %v781
    %v783 = vpop.f32.mrf.mxu0
    %784 = vdwg.mxu0
    %785 = vmatpush.bf16.msra.mxu0 %v655
    %786 = vmatpush.bf16.msra.mxu0 %v651
    %787 = vmatpush.bf16.msra.mxu0 %v647
    %788 = vmatpush.bf16.msra.mxu0 %v643
    %789 = vmatpush.bf16.msra.mxu0 %v639
    %790 = vmatpush.bf16.msra.mxu0 %v635
    %791 = vmatpush.bf16.msra.mxu0 %v631
    %792 = vmatpush.bf16.msra.mxu0 %v627
    %793 = vmatmul.bf16.gmra.mxu0 %v771
    %v794 = vpop.f32.mrf.mxu0
    %v795 = vadd.f32 0.0, %v794
    %v796 = vpop.f32.mrf.mxu0
    %797 = vdwg.mxu0
    %798 = vmatpush.bf16.msra.mxu0 %v656
    %799 = vmatpush.bf16.msra.mxu0 %v652
    %800 = vmatpush.bf16.msra.mxu0 %v648
    %801 = vmatpush.bf16.msra.mxu0 %v644
    %802 = vmatpush.bf16.msra.mxu0 %v640
    %803 = vmatpush.bf16.msra.mxu0 %v636
    %804 = vmatpush.bf16.msra.mxu0 %v632
    %805 = vmatpush.bf16.msra.mxu0 %v628
    %806 = vmatmul.bf16.gmra.mxu0 %v771
    %v807 = vpop.f32.mrf.mxu0
    %v808 = vadd.f32 0.0, %v807
    %v809 = vpop.f32.mrf.mxu0
    %810 = vdwg.mxu0
    %811 = vmatpush.bf16.msra.mxu0 %v657
    %812 = vmatpush.bf16.msra.mxu0 %v653
    %813 = vmatpush.bf16.msra.mxu0 %v649
    %814 = vmatpush.bf16.msra.mxu0 %v645
    %815 = vmatpush.bf16.msra.mxu0 %v641
    %816 = vmatpush.bf16.msra.mxu0 %v637
    %817 = vmatpush.bf16.msra.mxu0 %v633
    %818 = vmatpush.bf16.msra.mxu0 %v629
    %819 = vmatmul.bf16.gmra.mxu0 %v771
    %v820 = vpop.f32.mrf.mxu0
    %v821 = vadd.f32 0.0, %v820
    %v822 = vpop.f32.mrf.mxu0
    %823 = vdwg.mxu0
    %v824 = vadd.f32 %v767, %v782
    %v825 = vadd.f32 %v768, %v795
    %v826 = vadd.f32 %v769, %v808
    %v827 = vadd.f32 %v770, %v821
    %v828 = vmul.f32 %v824, 0.5
    %v829 = vtanh.pop %v828
    %v830 = vadd.f32 %v829, 1.0
    %v831 = vmul.f32 %v830, 0.5
    %v832 = vmul.f32 %v825, 0.5
    %v833 = vtanh.pop %v832
    %v834 = vadd.f32 %v833, 1.0
    %v835 = vmul.f32 %v834, 0.5
    %v836 = vtanh.pop %v826
    %v837 = vmul.f32 %v827, 0.5
    %v838 = vtanh.pop %v837
    %v839 = vadd.f32 %v838, 1.0
    %v840 = vmul.f32 %v839, 0.5
    %v841 = vmul.f32 %v835, %v761
    %v842 = vmul.f32 %v831, %v836
    %v843 = vadd.f32 %v841, %v842
    %v844 = vtanh.pop %v843
    %v845 = vmul.f32 %v840, %v844
    %s846 = smul.u32 2, 4
    %s847 = smul.addr %s846, 8
    %s848 = scalar_lea.vmem [#allocation4], %s847
    %v849 = vld [vmem:[%s848] sm:$0xff]
    %v850 = vld [vmem:[%s848 + $0x8] sm:$0xff]
    %v851 = vld [vmem:[%s848 + $0x10] sm:$0xff]
    %v852 = vld [vmem:[%s848 + $0x18] sm:$0xff]
    %v853 = vpack.c.bf16 %v845, %v845
    %854 = vmatpush.bf16.msra.mxu0 %v654
    %855 = vmatpush.bf16.msra.mxu0 %v650
    %856 = vmatpush.bf16.msra.mxu0 %v646
    %857 = vmatpush.bf16.msra.mxu0 %v642
    %858 = vmatpush.bf16.msra.mxu0 %v638
    %859 = vmatpush.bf16.msra.mxu0 %v634
    %860 = vmatpush.bf16.msra.mxu0 %v630
    %861 = vmatpush.bf16.msra.mxu0 %v626
    %862 = vmatmul.bf16.gmra.mxu0 %v853
    %v863 = vpop.f32.mrf.mxu0
    %v864 = vadd.f32 0.0, %v863
    %v865 = vpop.f32.mrf.mxu0
    %866 = vdwg.mxu0
    %867 = vmatpush.bf16.msra.mxu0 %v655
    %868 = vmatpush.bf16.msra.mxu0 %v651
    %869 = vmatpush.bf16.msra.mxu0 %v647
    %870 = vmatpush.bf16.msra.mxu0 %v643
    %871 = vmatpush.bf16.msra.mxu0 %v639
    %872 = vmatpush.bf16.msra.mxu0 %v635
    %873 = vmatpush.bf16.msra.mxu0 %v631
    %874 = vmatpush.bf16.msra.mxu0 %v627
    %875 = vmatmul.bf16.gmra.mxu0 %v853
    %v876 = vpop.f32.mrf.mxu0
    %v877 = vadd.f32 0.0, %v876
    %v878 = vpop.f32.mrf.mxu0
    %879 = vdwg.mxu0
    %880 = vmatpush.bf16.msra.mxu0 %v656
    %881 = vmatpush.bf16.msra.mxu0 %v652
    %882 = vmatpush.bf16.msra.mxu0 %v648
    %883 = vmatpush.bf16.msra.mxu0 %v644
    %884 = vmatpush.bf16.msra.mxu0 %v640
    %885 = vmatpush.bf16.msra.mxu0 %v636
    %886 = vmatpush.bf16.msra.mxu0 %v632
    %887 = vmatpush.bf16.msra.mxu0 %v628
    %888 = vmatmul.bf16.gmra.mxu0 %v853
    %v889 = vpop.f32.mrf.mxu0
    %v890 = vadd.f32 0.0, %v889
    %v891 = vpop.f32.mrf.mxu0
    %892 = vdwg.mxu0
    %893 = vmatpush.bf16.msra.mxu0 %v657
    %894 = vmatpush.bf16.msra.mxu0 %v653
    %895 = vmatpush.bf16.msra.mxu0 %v649
    %896 = vmatpush.bf16.msra.mxu0 %v645
    %897 = vmatpush.bf16.msra.mxu0 %v641
    %898 = vmatpush.bf16.msra.mxu0 %v637
    %899 = vmatpush.bf16.msra.mxu0 %v633
    %900 = vmatpush.bf16.msra.mxu0 %v629
    %901 = vmatmul.bf16.gmra.mxu0 %v853
    %v902 = vpop.f32.mrf.mxu0
    %v903 = vadd.f32 0.0, %v902
    %v904 = vpop.f32.mrf.mxu0
    %905 = vdwg.mxu0
    %v906 = vadd.f32 %v849, %v864
    %v907 = vadd.f32 %v850, %v877
    %v908 = vadd.f32 %v851, %v890
    %v909 = vadd.f32 %v852, %v903
    %v910 = vmul.f32 %v906, 0.5
    %v911 = vtanh.pop %v910
    %v912 = vadd.f32 %v911, 1.0
    %v913 = vmul.f32 %v912, 0.5
    %v914 = vmul.f32 %v907, 0.5
    %v915 = vtanh.pop %v914
    %v916 = vadd.f32 %v915, 1.0
    %v917 = vmul.f32 %v916, 0.5
    %v918 = vtanh.pop %v908
    %v919 = vmul.f32 %v909, 0.5
    %v920 = vtanh.pop %v919
    %v921 = vadd.f32 %v920, 1.0
    %v922 = vmul.f32 %v921, 0.5
    %v923 = vmul.f32 %v917, %v843
    %v924 = vmul.f32 %v913, %v918
    %v925 = vadd.f32 %v923, %v924
    %v926 = vtanh.pop %v925
    %v927 = vmul.f32 %v922, %v926
    %s928 = smul.u32 3, 4
    %s929 = smul.addr %s928, 8
    %s930 = scalar_lea.vmem [#allocation4], %s929
    %v931 = vld [vmem:[%s930] sm:$0xff]
    %v932 = vld [vmem:[%s930 + $0x8] sm:$0xff]
    %v933 = vld [vmem:[%s930 + $0x10] sm:$0xff]
    %v934 = vld [vmem:[%s930 + $0x18] sm:$0xff]
    %v935 = vpack.c.bf16 %v927, %v927
    %936 = vmatpush.bf16.msra.mxu0 %v654
    %937 = vmatpush.bf16.msra.mxu0 %v650
    %938 = vmatpush.bf16.msra.mxu0 %v646
    %939 = vmatpush.bf16.msra.mxu0 %v642
    %940 = vmatpush.bf16.msra.mxu0 %v638
    %941 = vmatpush.bf16.msra.mxu0 %v634
    %942 = vmatpush.bf16.msra.mxu0 %v630
    %943 = vmatpush.bf16.msra.mxu0 %v626
    %944 = vmatmul.bf16.gmra.mxu0 %v935
    %v945 = vpop.f32.mrf.mxu0
    %v946 = vadd.f32 0.0, %v945
    %v947 = vpop.f32.mrf.mxu0
    %948 = vdwg.mxu0
    %949 = vmatpush.bf16.msra.mxu0 %v655
    %950 = vmatpush.bf16.msra.mxu0 %v651
    %951 = vmatpush.bf16.msra.mxu0 %v647
    %952 = vmatpush.bf16.msra.mxu0 %v643
    %953 = vmatpush.bf16.msra.mxu0 %v639
    %954 = vmatpush.bf16.msra.mxu0 %v635
    %955 = vmatpush.bf16.msra.mxu0 %v631
    %956 = vmatpush.bf16.msra.mxu0 %v627
    %957 = vmatmul.bf16.gmra.mxu0 %v935
    %v958 = vpop.f32.mrf.mxu0
    %v959 = vadd.f32 0.0, %v958
    %v960 = vpop.f32.mrf.mxu0
    %961 = vdwg.mxu0
    %962 = vmatpush.bf16.msra.mxu0 %v656
    %963 = vmatpush.bf16.msra.mxu0 %v652
    %964 = vmatpush.bf16.msra.mxu0 %v648
    %965 = vmatpush.bf16.msra.mxu0 %v644
    %966 = vmatpush.bf16.msra.mxu0 %v640
    %967 = vmatpush.bf16.msra.mxu0 %v636
    %968 = vmatpush.bf16.msra.mxu0 %v632
    %969 = vmatpush.bf16.msra.mxu0 %v628
    %970 = vmatmul.bf16.gmra.mxu0 %v935
    %v971 = vpop.f32.mrf.mxu0
    %v972 = vadd.f32 0.0, %v971
    %v973 = vpop.f32.mrf.mxu0
    %974 = vdwg.mxu0
    %975 = vmatpush.bf16.msra.mxu0 %v657
    %976 = vmatpush.bf16.msra.mxu0 %v653
    %977 = vmatpush.bf16.msra.mxu0 %v649
    %978 = vmatpush.bf16.msra.mxu0 %v645
    %979 = vmatpush.bf16.msra.mxu0 %v641
    %980 = vmatpush.bf16.msra.mxu0 %v637
    %981 = vmatpush.bf16.msra.mxu0 %v633
    %982 = vmatpush.bf16.msra.mxu0 %v629
    %983 = vmatmul.bf16.gmra.mxu0 %v935
    %v984 = vpop.f32.mrf.mxu0
    %v985 = vadd.f32 0.0, %v984
    %v986 = vpop.f32.mrf.mxu0
    %987 = vdwg.mxu0
    %v988 = vadd.f32 %v931, %v946
    %v989 = vadd.f32 %v932, %v959
    %v990 = vadd.f32 %v933, %v972
    %v991 = vadd.f32 %v934, %v985
    %v992 = vmul.f32 %v988, 0.5
    %v993 = vtanh.pop %v992
    %v994 = vadd.f32 %v993, 1.0
    %v995 = vmul.f32 %v994, 0.5
    %v996 = vmul.f32 %v989, 0.5
    %v997 = vtanh.pop %v996
    %v998 = vadd.f32 %v997, 1.0
    %v999 = vmul.f32 %v998, 0.5
    %v1000 = vtanh.pop %v990
    %v1001 = vmul.f32 %v991, 0.5
    %v1002 = vtanh.pop %v1001
    %v1003 = vadd.f32 %v1002, 1.0
    %v1004 = vmul.f32 %v1003, 0.5
    %v1005 = vmul.f32 %v999, %v925
    %v1006 = vmul.f32 %v995, %v1000
    %v1007 = vadd.f32 %v1005, %v1006
    %v1008 = vtanh.pop %v1007
    %v1009 = vmul.f32 %v1004, %v1008
    %s1010 = smul.u32 4, 4
    %s1011 = smul.addr %s1010, 8
    %s1012 = scalar_lea.vmem [#allocation4], %s1011
    %v1013 = vld [vmem:[%s1012] sm:$0xff]
    %v1014 = vld [vmem:[%s1012 + $0x8] sm:$0xff]
    %v1015 = vld [vmem:[%s1012 + $0x10] sm:$0xff]
    %v1016 = vld [vmem:[%s1012 + $0x18] sm:$0xff]
    %v1017 = vpack.c.bf16 %v1009, %v1009
    %1018 = vmatpush.bf16.msra.mxu0 %v654
    %1019 = vmatpush.bf16.msra.mxu0 %v650
    %1020 = vmatpush.bf16.msra.mxu0 %v646
    %1021 = vmatpush.bf16.msra.mxu0 %v642
    %1022 = vmatpush.bf16.msra.mxu0 %v638
    %1023 = vmatpush.bf16.msra.mxu0 %v634
    %1024 = vmatpush.bf16.msra.mxu0 %v630
    %1025 = vmatpush.bf16.msra.mxu0 %v626
    %1026 = vmatmul.bf16.gmra.mxu0 %v1017
    %v1027 = vpop.f32.mrf.mxu0
    %v1028 = vadd.f32 0.0, %v1027
    %v1029 = vpop.f32.mrf.mxu0
    %1030 = vdwg.mxu0
    %1031 = vmatpush.bf16.msra.mxu0 %v655
    %1032 = vmatpush.bf16.msra.mxu0 %v651
    %1033 = vmatpush.bf16.msra.mxu0 %v647
    %1034 = vmatpush.bf16.msra.mxu0 %v643
    %1035 = vmatpush.bf16.msra.mxu0 %v639
    %1036 = vmatpush.bf16.msra.mxu0 %v635
    %1037 = vmatpush.bf16.msra.mxu0 %v631
    %1038 = vmatpush.bf16.msra.mxu0 %v627
    %1039 = vmatmul.bf16.gmra.mxu0 %v1017
    %v1040 = vpop.f32.mrf.mxu0
    %v1041 = vadd.f32 0.0, %v1040
    %v1042 = vpop.f32.mrf.mxu0
    %1043 = vdwg.mxu0
    %1044 = vmatpush.bf16.msra.mxu0 %v656
    %1045 = vmatpush.bf16.msra.mxu0 %v652
    %1046 = vmatpush.bf16.msra.mxu0 %v648
    %1047 = vmatpush.bf16.msra.mxu0 %v644
    %1048 = vmatpush.bf16.msra.mxu0 %v640
    %1049 = vmatpush.bf16.msra.mxu0 %v636
    %1050 = vmatpush.bf16.msra.mxu0 %v632
    %1051 = vmatpush.bf16.msra.mxu0 %v628
    %1052 = vmatmul.bf16.gmra.mxu0 %v1017
    %v1053 = vpop.f32.mrf.mxu0
    %v1054 = vadd.f32 0.0, %v1053
    %v1055 = vpop.f32.mrf.mxu0
    %1056 = vdwg.mxu0
    %1057 = vmatpush.bf16.msra.mxu0 %v657
    %1058 = vmatpush.bf16.msra.mxu0 %v653
    %1059 = vmatpush.bf16.msra.mxu0 %v649
    %1060 = vmatpush.bf16.msra.mxu0 %v645
    %1061 = vmatpush.bf16.msra.mxu0 %v641
    %1062 = vmatpush.bf16.msra.mxu0 %v637
    %1063 = vmatpush.bf16.msra.mxu0 %v633
    %1064 = vmatpush.bf16.msra.mxu0 %v629
    %1065 = vmatmul.bf16.gmra.mxu0 %v1017
    %v1066 = vpop.f32.mrf.mxu0
    %v1067 = vadd.f32 0.0, %v1066
    %v1068 = vpop.f32.mrf.mxu0
    %1069 = vdwg.mxu0
    %v1070 = vadd.f32 %v1013, %v1028
    %v1071 = vadd.f32 %v1014, %v1041
    %v1072 = vadd.f32 %v1015, %v1054
    %v1073 = vadd.f32 %v1016, %v1067
    %v1074 = vmul.f32 %v1070, 0.5
    %v1075 = vtanh.pop %v1074
    %v1076 = vadd.f32 %v1075, 1.0
    %v1077 = vmul.f32 %v1076, 0.5
    %v1078 = vmul.f32 %v1071, 0.5
    %v1079 = vtanh.pop %v1078
    %v1080 = vadd.f32 %v1079, 1.0
    %v1081 = vmul.f32 %v1080, 0.5
    %v1082 = vtanh.pop %v1072
    %v1083 = vmul.f32 %v1073, 0.5
    %v1084 = vtanh.pop %v1083
    %v1085 = vadd.f32 %v1084, 1.0
    %v1086 = vmul.f32 %v1085, 0.5
    %v1087 = vmul.f32 %v1081, %v1007
    %v1088 = vmul.f32 %v1077, %v1082
    %v1089 = vadd.f32 %v1087, %v1088
    %v1090 = vtanh.pop %v1089
    %v1091 = vmul.f32 %v1086, %v1090
    %s1092 = smul.u32 5, 4
    %s1093 = smul.addr %s1092, 8
    %s1094 = scalar_lea.vmem [#allocation4], %s1093
    %v1095 = vld [vmem:[%s1094] sm:$0xff]
    %v1096 = vld [vmem:[%s1094 + $0x8] sm:$0xff]
    %v1097 = vld [vmem:[%s1094 + $0x10] sm:$0xff]
    %v1098 = vld [vmem:[%s1094 + $0x18] sm:$0xff]
    %v1099 = vpack.c.bf16 %v1091, %v1091
    %1100 = vmatpush.bf16.msra.mxu0 %v654
    %1101 = vmatpush.bf16.msra.mxu0 %v650
    %1102 = vmatpush.bf16.msra.mxu0 %v646
    %1103 = vmatpush.bf16.msra.mxu0 %v642
    %1104 = vmatpush.bf16.msra.mxu0 %v638
    %1105 = vmatpush.bf16.msra.mxu0 %v634
    %1106 = vmatpush.bf16.msra.mxu0 %v630
    %1107 = vmatpush.bf16.msra.mxu0 %v626
    %1108 = vmatmul.bf16.gmra.mxu0 %v1099
    %v1109 = vpop.f32.mrf.mxu0
    %v1110 = vadd.f32 0.0, %v1109
    %v1111 = vpop.f32.mrf.mxu0
    %1112 = vdwg.mxu0
    %1113 = vmatpush.bf16.msra.mxu0 %v655
    %1114 = vmatpush.bf16.msra.mxu0 %v651
    %1115 = vmatpush.bf16.msra.mxu0 %v647
    %1116 = vmatpush.bf16.msra.mxu0 %v643
    %1117 = vmatpush.bf16.msra.mxu0 %v639
    %1118 = vmatpush.bf16.msra.mxu0 %v635
    %1119 = vmatpush.bf16.msra.mxu0 %v631
    %1120 = vmatpush.bf16.msra.mxu0 %v627
    %1121 = vmatmul.bf16.gmra.mxu0 %v1099
    %v1122 = vpop.f32.mrf.mxu0
    %v1123 = vadd.f32 0.0, %v1122
    %v1124 = vpop.f32.mrf.mxu0
    %1125 = vdwg.mxu0
    %1126 = vmatpush.bf16.msra.mxu0 %v656
    %1127 = vmatpush.bf16.msra.mxu0 %v652
    %1128 = vmatpush.bf16.msra.mxu0 %v648
    %1129 = vmatpush.bf16.msra.mxu0 %v644
    %1130 = vmatpush.bf16.msra.mxu0 %v640
    %1131 = vmatpush.bf16.msra.mxu0 %v636
    %1132 = vmatpush.bf16.msra.mxu0 %v632
    %1133 = vmatpush.bf16.msra.mxu0 %v628
    %1134 = vmatmul.bf16.gmra.mxu0 %v1099
    %v1135 = vpop.f32.mrf.mxu0
    %v1136 = vadd.f32 0.0, %v1135
    %v1137 = vpop.f32.mrf.mxu0
    %1138 = vdwg.mxu0
    %1139 = vmatpush.bf16.msra.mxu0 %v657
    %1140 = vmatpush.bf16.msra.mxu0 %v653
    %1141 = vmatpush.bf16.msra.mxu0 %v649
    %1142 = vmatpush.bf16.msra.mxu0 %v645
    %1143 = vmatpush.bf16.msra.mxu0 %v641
    %1144 = vmatpush.bf16.msra.mxu0 %v637
    %1145 = vmatpush.bf16.msra.mxu0 %v633
    %1146 = vmatpush.bf16.msra.mxu0 %v629
    %1147 = vmatmul.bf16.gmra.mxu0 %v1099
    %v1148 = vpop.f32.mrf.mxu0
    %v1149 = vadd.f32 0.0, %v1148
    %v1150 = vpop.f32.mrf.mxu0
    %1151 = vdwg.mxu0
    %v1152 = vadd.f32 %v1095, %v1110
    %v1153 = vadd.f32 %v1096, %v1123
    %v1154 = vadd.f32 %v1097, %v1136
    %v1155 = vadd.f32 %v1098, %v1149
    %v1156 = vmul.f32 %v1152, 0.5
    %v1157 = vtanh.pop %v1156
    %v1158 = vadd.f32 %v1157, 1.0
    %v1159 = vmul.f32 %v1158, 0.5
    %v1160 = vmul.f32 %v1153, 0.5
    %v1161 = vtanh.pop %v1160
    %v1162 = vadd.f32 %v1161, 1.0
    %v1163 = vmul.f32 %v1162, 0.5
    %v1164 = vtanh.pop %v1154
    %v1165 = vmul.f32 %v1155, 0.5
    %v1166 = vtanh.pop %v1165
    %v1167 = vadd.f32 %v1166, 1.0
    %v1168 = vmul.f32 %v1167, 0.5
    %v1169 = vmul.f32 %v1163, %v1089
    %v1170 = vmul.f32 %v1159, %v1164
    %v1171 = vadd.f32 %v1169, %v1170
    %v1172 = vtanh.pop %v1171
    %v1173 = vmul.f32 %v1168, %v1172
    %s1174 = smul.u32 6, 4
    %s1175 = smul.addr %s1174, 8
    %s1176 = scalar_lea.vmem [#allocation4], %s1175
    %v1177 = vld [vmem:[%s1176] sm:$0xff]
    %v1178 = vld [vmem:[%s1176 + $0x8] sm:$0xff]
    %v1179 = vld [vmem:[%s1176 + $0x10] sm:$0xff]
    %v1180 = vld [vmem:[%s1176 + $0x18] sm:$0xff]
    %v1181 = vpack.c.bf16 %v1173, %v1173
    %1182 = vmatpush.bf16.msra.mxu0 %v654
    %1183 = vmatpush.bf16.msra.mxu0 %v650
    %1184 = vmatpush.bf16.msra.mxu0 %v646
    %1185 = vmatpush.bf16.msra.mxu0 %v642
    %1186 = vmatpush.bf16.msra.mxu0 %v638
    %1187 = vmatpush.bf16.msra.mxu0 %v634
    %1188 = vmatpush.bf16.msra.mxu0 %v630
    %1189 = vmatpush.bf16.msra.mxu0 %v626
    %1190 = vmatmul.bf16.gmra.mxu0 %v1181
    %v1191 = vpop.f32.mrf.mxu0
    %v1192 = vadd.f32 0.0, %v1191
    %v1193 = vpop.f32.mrf.mxu0
    %1194 = vdwg.mxu0
    %1195 = vmatpush.bf16.msra.mxu0 %v655
    %1196 = vmatpush.bf16.msra.mxu0 %v651
    %1197 = vmatpush.bf16.msra.mxu0 %v647
    %1198 = vmatpush.bf16.msra.mxu0 %v643
    %1199 = vmatpush.bf16.msra.mxu0 %v639
    %1200 = vmatpush.bf16.msra.mxu0 %v635
    %1201 = vmatpush.bf16.msra.mxu0 %v631
    %1202 = vmatpush.bf16.msra.mxu0 %v627
    %1203 = vmatmul.bf16.gmra.mxu0 %v1181
    %v1204 = vpop.f32.mrf.mxu0
    %v1205 = vadd.f32 0.0, %v1204
    %v1206 = vpop.f32.mrf.mxu0
    %1207 = vdwg.mxu0
    %1208 = vmatpush.bf16.msra.mxu0 %v656
    %1209 = vmatpush.bf16.msra.mxu0 %v652
    %1210 = vmatpush.bf16.msra.mxu0 %v648
    %1211 = vmatpush.bf16.msra.mxu0 %v644
    %1212 = vmatpush.bf16.msra.mxu0 %v640
    %1213 = vmatpush.bf16.msra.mxu0 %v636
    %1214 = vmatpush.bf16.msra.mxu0 %v632
    %1215 = vmatpush.bf16.msra.mxu0 %v628
    %1216 = vmatmul.bf16.gmra.mxu0 %v1181
    %v1217 = vpop.f32.mrf.mxu0
    %v1218 = vadd.f32 0.0, %v1217
    %v1219 = vpop.f32.mrf.mxu0
    %1220 = vdwg.mxu0
    %1221 = vmatpush.bf16.msra.mxu0 %v657
    %1222 = vmatpush.bf16.msra.mxu0 %v653
    %1223 = vmatpush.bf16.msra.mxu0 %v649
    %1224 = vmatpush.bf16.msra.mxu0 %v645
    %1225 = vmatpush.bf16.msra.mxu0 %v641
    %1226 = vmatpush.bf16.msra.mxu0 %v637
    %1227 = vmatpush.bf16.msra.mxu0 %v633
    %1228 = vmatpush.bf16.msra.mxu0 %v629
    %1229 = vmatmul.bf16.gmra.mxu0 %v1181
    %v1230 = vpop.f32.mrf.mxu0
    %v1231 = vadd.f32 0.0, %v1230
    %v1232 = vpop.f32.mrf.mxu0
    %1233 = vdwg.mxu0
    %v1234 = vadd.f32 %v1177, %v1192
    %v1235 = vadd.f32 %v1178, %v1205
    %v1236 = vadd.f32 %v1179, %v1218
    %v1237 = vadd.f32 %v1180, %v1231
    %v1238 = vmul.f32 %v1234, 0.5
    %v1239 = vtanh.pop %v1238
    %v1240 = vadd.f32 %v1239, 1.0
    %v1241 = vmul.f32 %v1240, 0.5
    %v1242 = vmul.f32 %v1235, 0.5
    %v1243 = vtanh.pop %v1242
    %v1244 = vadd.f32 %v1243, 1.0
    %v1245 = vmul.f32 %v1244, 0.5
    %v1246 = vtanh.pop %v1236
    %v1247 = vmul.f32 %v1237, 0.5
    %v1248 = vtanh.pop %v1247
    %v1249 = vadd.f32 %v1248, 1.0
    %v1250 = vmul.f32 %v1249, 0.5
    %v1251 = vmul.f32 %v1245, %v1171
    %v1252 = vmul.f32 %v1241, %v1246
    %v1253 = vadd.f32 %v1251, %v1252
    %v1254 = vtanh.pop %v1253
    %v1255 = vmul.f32 %v1250, %v1254
    %s1256 = smul.u32 7, 4
    %s1257 = smul.addr %s1256, 8
    %s1258 = scalar_lea.vmem [#allocation4], %s1257
    %v1259 = vld [vmem:[%s1258] sm:$0xff]
    %v1260 = vld [vmem:[%s1258 + $0x8] sm:$0xff]
    %v1261 = vld [vmem:[%s1258 + $0x10] sm:$0xff]
    %v1262 = vld [vmem:[%s1258 + $0x18] sm:$0xff]
    %v1263 = vpack.c.bf16 %v1255, %v1255
    %1264 = vmatpush.bf16.msra.mxu0 %v654
    %1265 = vmatpush.bf16.msra.mxu0 %v650
    %1266 = vmatpush.bf16.msra.mxu0 %v646
    %1267 = vmatpush.bf16.msra.mxu0 %v642
    %1268 = vmatpush.bf16.msra.mxu0 %v638
    %1269 = vmatpush.bf16.msra.mxu0 %v634
    %1270 = vmatpush.bf16.msra.mxu0 %v630
    %1271 = vmatpush.bf16.msra.mxu0 %v626
    %1272 = vmatmul.bf16.gmra.mxu0 %v1263
    %v1273 = vpop.f32.mrf.mxu0
    %v1274 = vadd.f32 0.0, %v1273
    %v1275 = vpop.f32.mrf.mxu0
    %1276 = vdwg.mxu0
    %1277 = vmatpush.bf16.msra.mxu0 %v655
    %1278 = vmatpush.bf16.msra.mxu0 %v651
    %1279 = vmatpush.bf16.msra.mxu0 %v647
    %1280 = vmatpush.bf16.msra.mxu0 %v643
    %1281 = vmatpush.bf16.msra.mxu0 %v639
    %1282 = vmatpush.bf16.msra.mxu0 %v635
    %1283 = vmatpush.bf16.msra.mxu0 %v631
    %1284 = vmatpush.bf16.msra.mxu0 %v627
    %1285 = vmatmul.bf16.gmra.mxu0 %v1263
    %v1286 = vpop.f32.mrf.mxu0
    %v1287 = vadd.f32 0.0, %v1286
    %v1288 = vpop.f32.mrf.mxu0
    %1289 = vdwg.mxu0
    %1290 = vmatpush.bf16.msra.mxu0 %v656
    %1291 = vmatpush.bf16.msra.mxu0 %v652
    %1292 = vmatpush.bf16.msra.mxu0 %v648
    %1293 = vmatpush.bf16.msra.mxu0 %v644
    %1294 = vmatpush.bf16.msra.mxu0 %v640
    %1295 = vmatpush.bf16.msra.mxu0 %v636
    %1296 = vmatpush.bf16.msra.mxu0 %v632
    %1297 = vmatpush.bf16.msra.mxu0 %v628
    %1298 = vmatmul.bf16.gmra.mxu0 %v1263
    %v1299 = vpop.f32.mrf.mxu0
    %v1300 = vadd.f32 0.0, %v1299
    %v1301 = vpop.f32.mrf.mxu0
    %1302 = vdwg.mxu0
    %1303 = vmatpush.bf16.msra.mxu0 %v657
    %1304 = vmatpush.bf16.msra.mxu0 %v653
    %1305 = vmatpush.bf16.msra.mxu0 %v649
    %1306 = vmatpush.bf16.msra.mxu0 %v645
    %1307 = vmatpush.bf16.msra.mxu0 %v641
    %1308 = vmatpush.bf16.msra.mxu0 %v637
    %1309 = vmatpush.bf16.msra.mxu0 %v633
    %1310 = vmatpush.bf16.msra.mxu0 %v629
    %1311 = vmatmul.bf16.gmra.mxu0 %v1263
    %v1312 = vpop.f32.mrf.mxu0
    %v1313 = vadd.f32 0.0, %v1312
    %v1314 = vpop.f32.mrf.mxu0
    %1315 = vdwg.mxu0
    %v1316 = vadd.f32 %v1259, %v1274
    %v1317 = vadd.f32 %v1260, %v1287
    %v1318 = vadd.f32 %v1261, %v1300
    %v1319 = vadd.f32 %v1262, %v1313
    %v1320 = vmul.f32 %v1316, 0.5
    %v1321 = vtanh.pop %v1320
    %v1322 = vadd.f32 %v1321, 1.0
    %v1323 = vmul.f32 %v1322, 0.5
    %v1324 = vmul.f32 %v1317, 0.5
    %v1325 = vtanh.pop %v1324
    %v1326 = vadd.f32 %v1325, 1.0
    %v1327 = vmul.f32 %v1326, 0.5
    %v1328 = vtanh.pop %v1318
    %v1329 = vmul.f32 %v1319, 0.5
    %v1330 = vtanh.pop %v1329
    %v1331 = vadd.f32 %v1330, 1.0
    %v1332 = vmul.f32 %v1331, 0.5
    %v1333 = vmul.f32 %v1327, %v1253
    %v1334 = vmul.f32 %v1323, %v1328
    %v1335 = vadd.f32 %v1333, %v1334
    %v1336 = vtanh.pop %v1335
    %v1337 = vmul.f32 %v1332, %v1336
    %1338 = vst [vmem:[#allocation2] sm:$0xff] %v1337
    %1339 = vst [vmem:[#allocation3] sm:$0xff] %v1335
    // Predicated region
    $region50: #{tpu_custom_call.1} parent=1 // pred_check
      %p1340 = pneg %p100
    $region51: #{tpu_custom_call.1} parent=1 // pred_check_branch
      %1342 = sbr.rel (%p1340) target = $region53
    $region52: #{tpu_custom_call.1} parent=1 // pred_region
      %v1343 = vld [vmem:[#allocation2] sm:$0xff]
      %v1344 = vpack.c.bf16 %v1343, %v1343
      %v1345 = vld [vmem:[#allocation13] sm:$0xf]
      %v1346 = vld [vmem:[#allocation13 + $0x4] sm:$0xf]
      %v1347 = vld [vmem:[#allocation13 + $0x8] sm:$0xf]
      %v1348 = vld [vmem:[#allocation13 + $0xc] sm:$0xf]
      %v1349 = vld [vmem:[#allocation13 + $0x10] sm:$0xf]
      %v1350 = vld [vmem:[#allocation13 + $0x14] sm:$0xf]
      %v1351 = vld [vmem:[#allocation13 + $0x18] sm:$0xf]
      %v1352 = vld [vmem:[#allocation13 + $0x1c] sm:$0xf]
      %v1353 = vld [vmem:[#allocation13 + $0x20] sm:$0xf]
      %v1354 = vld [vmem:[#allocation13 + $0x24] sm:$0xf]
      %v1355 = vld [vmem:[#allocation13 + $0x28] sm:$0xf]
      %v1356 = vld [vmem:[#allocation13 + $0x2c] sm:$0xf]
      %v1357 = vld [vmem:[#allocation13 + $0x30] sm:$0xf]
      %v1358 = vld [vmem:[#allocation13 + $0x34] sm:$0xf]
      %v1359 = vld [vmem:[#allocation13 + $0x38] sm:$0xf]
      %v1360 = vld [vmem:[#allocation13 + $0x3c] sm:$0xf]
      %v1361 = vld [vmem:[%s5] sm:$0x1]
      %v1363 = vperm.slane %v1361, 0
      %v1381 = vunpack.c.l.b16 %v1345
      %v1382 = vunpack.c.l.b16 %v1346
      %v1383 = vunpack.c.l.b16 %v1347
      %v1384 = vunpack.c.l.b16 %v1348
      %v1385 = vunpack.c.l.b16 %v1349
      %v1386 = vunpack.c.l.b16 %v1350
      %v1387 = vunpack.c.l.b16 %v1351
      %v1388 = vunpack.c.l.b16 %v1352
      %v1389 = vunpack.c.l.b16 %v1353
      %v1390 = vunpack.c.l.b16 %v1354
      %v1391 = vunpack.c.l.b16 %v1355
      %v1392 = vunpack.c.l.b16 %v1356
      %v1393 = vunpack.c.l.b16 %v1357
      %v1394 = vunpack.c.l.b16 %v1358
      %v1395 = vunpack.c.l.b16 %v1359
      %v1396 = vunpack.c.l.b16 %v1360
      %v1397 = vpack.c.b16 %v1382, %v1381
      %v1398 = vpack.c.b16 %v1384, %v1383
      %v1399 = vpack.c.b16 %v1386, %v1385
      %v1400 = vpack.c.b16 %v1388, %v1387
      %v1401 = vpack.c.b16 %v1390, %v1389
      %v1402 = vpack.c.b16 %v1392, %v1391
      %v1403 = vpack.c.b16 %v1394, %v1393
      %v1404 = vpack.c.b16 %v1396, %v1395
      %1413 = vmatpush.bf16.msra.mxu0 %v1404
      %1414 = vmatpush.bf16.msra.mxu0 %v1403
      %1415 = vmatpush.bf16.msra.mxu0 %v1402
      %1416 = vmatpush.bf16.msra.mxu0 %v1401
      %1417 = vmatpush.bf16.msra.mxu0 %v1400
      %1418 = vmatpush.bf16.msra.mxu0 %v1399
      %1419 = vmatpush.bf16.msra.mxu0 %v1398
      %1420 = vmatpush.bf16.msra.mxu0 %v1397
      %1421 = vmatmul.bf16.gmra.mxu0 %v1344
      %v1422 = vpop.f32.mrf.mxu0
      %v1423 = vadd.f32 %v1363, %v1422
      %v1424 = vpop.f32.mrf.mxu0
      %1425 = vdwg.mxu0
      %1426 = vst [vmem:[#allocation14] sm:$0xff] %v1423
    $region53: #{tpu_custom_call.1} parent=1 // pred_fallthru
      _
    // Predicated region
    $region54: #{tpu_custom_call.1} parent=1 // pred_check
      _
    $region55: #{tpu_custom_call.1} parent=1 // pred_check_branch
      %1428 = sbr.rel (0) target = $region57
    $region56: #{tpu_custom_call.1} parent=1 // pred_region
      %1430 = vsyncadd [#allocation7], 0
      %s1432 = sshll.u32 [#allocation14], 4
      %s1433 = int_to_ptr.vmem [resolvable:$true] %s1432
      %s1434 = sshll.u32 %s6, 4
      %s1435 = int_to_ptr.hbm [resolvable:$true] %s1434
      %1437 = dma.vmem_to_hbm [thread:$0]  %s1433, 128, %s1435, [#allocation7]
    $region57: #{tpu_custom_call.1} parent=1 // pred_fallthru
      _
    // Predicated region
    $region58: #{tpu_custom_call.1} parent=1 // pred_check
      _
    $region59: #{tpu_custom_call.1} parent=1 // pred_check_branch
      %1439 = sbr.rel (0) target = $region61
    $region60: #{tpu_custom_call.1} parent=1 // pred_region
      %1441 = dma.done [#allocation7], 128
    $region61: #{tpu_custom_call.1} parent=1 // pred_fallthru
      _
    %1442 = vsyncpa [#allocation6], 1
    %1443 = vsyncpa [#allocation9], 1
    %1444 = vsyncpa [#allocation12], 1
    %1445 = vsyncpa [#allocation7], 1

// kernel: tpu_custom_call.1
$region0: #{tpu_custom_call.1}
  #allocation0 [shape = 'u32[]', space=smem, size = 0x4, offset = 0x4, fixed_abs, tag = 'smem constant byte address 0x4 - core index']
  #allocation1 [shape = 'u32[72,128]{1,0:T(1,128)}', space=vmem, size = 0x9000, scoped, tag = 'internal scratch']
  #allocation2 [shape = 'f32[8,128]{1,0:T(8,128)}', space=vmem, size = 0x1000, scoped, tag = 'scratch operand']
  #allocation3 [shape = 'f32[8,128]{1,0:T(8,128)}', space=vmem, size = 0x1000, scoped, tag = 'scratch operand']
  #allocation4 [shape = 'f32[64,512]{1,0:T(8,128)}', space=vmem, size = 0x20000, scoped, tag = 'scratch operand']
  %s0 = inlined_call_operand.hbm [shape: bf16[1,64,128], index: 0, kind: input, shape index: {}]
  %s1 = inlined_call_operand.hbm [shape: bf16[128,512], index: 1, kind: input, shape index: {}]
  %s2 = inlined_call_operand.hbm [shape: bf16[128,512], index: 2, kind: input, shape index: {}]
  %s3 = inlined_call_operand.hbm [shape: f32[1,512], index: 3, kind: input, shape index: {}]
  %s4 = inlined_call_operand.hbm [shape: bf16[128,128], index: 4, kind: input, shape index: {}]
  %s5 = inlined_call_operand.vmem [shape: f32[1,128], index: 5, kind: input, shape index: {}]
  %s6 = inlined_call_operand.hbm [shape: f32[8,128], index: 6, kind: output, shape index: {}]
  %s7 = sld [smem:[#allocation0]]
  $region62: #{tpu_custom_call.1} parent=0
    _
  %s9 = ssub.s32 1, %s7
  %s10 = scalar_select 0, %s9, %s7
  $region1: #{tpu_custom_call.1} parent=0
    #allocation5 [shape = 'u8[16384]{0}', space=vmem, size = 0x4000, scoped, tag = 'input window, operand 0, single buffered']
    #allocation6 [shape = 's32[1]{0}', space=sflag, size = 0x4, scoped, tag = 'scoped memory for tpu_custom_call.1']
    #allocation7 [shape = 's32[1]{0}', space=sflag, size = 0x4, scoped, tag = 'scoped memory for tpu_custom_call.1']
    #allocation8 [shape = 'u8[131072]{0}', space=vmem, size = 0x20000, scoped, tag = 'input window, operand 1, single buffered']
    #allocation9 [shape = 's32[1]{0}', space=sflag, size = 0x4, scoped, tag = 'scoped memory for tpu_custom_call.1']
    #allocation10 [shape = 'u8[131072]{0}', space=vmem, size = 0x20000, scoped, tag = 'input window, operand 2, single buffered']
    #allocation11 [shape = 'u8[2048]{0}', space=vmem, size = 0x800, scoped, tag = 'input window, operand 3, single buffered']
    #allocation12 [shape = 's32[1]{0}', space=sflag, size = 0x4, scoped, tag = 'scoped memory for tpu_custom_call.1']
    #allocation13 [shape = 'u8[32768]{0}', space=vmem, size = 0x8000, scoped, tag = 'input window, operand 4, single buffered']
    #allocation14 [shape = 'u8[4096]{0}', space=vmem, size = 0x1000, scoped, tag = 'output window, operand 0, single buffered']
    %11 = vsyncpa [#allocation6], 0
    %12 = vsyncpa [#allocation9], 0
    %13 = vsyncpa [#allocation12], 0
    %14 = vsyncpa [#allocation7], 0
    // Predicated region
    $region2: #{tpu_custom_call.1} parent=1 // pred_check
      _
    $region3: #{tpu_custom_call.1} parent=1 // pred_check_branch
      %16 = sbr.rel (0) target = $region5
    $region4: #{tpu_custom_call.1} parent=1 // pred_region
      %18 = vsyncadd [#allocation6], 0
      %s19 = sshll.u32 %s0, 4
      %s20 = int_to_ptr.hbm [resolvable:$true] %s19
      %s21 = sshll.u32 [#allocation5], 4
      %s22 = int_to_ptr.vmem [resolvable:$true] %s21
      %27 = dma.hbm_to_vmem [thread:$0]  %s20, 512, %s22, [#allocation6], 64, 64, 4
    $region5: #{tpu_custom_call.1} parent=1 // pred_fallthru
      _
    // Predicated region
    $region6: #{tpu_custom_call.1} parent=1 // pred_check
      _
    $region7: #{tpu_custom_call.1} parent=1 // pred_check_branch
      %29 = sbr.rel (0) target = $region9
    $region8: #{tpu_custom_call.1} parent=1 // pred_region
      %31 = vsyncadd [#allocation9], 0
      %s32 = sshll.u32 %s1, 4
      %s33 = int_to_ptr.hbm [resolvable:$true] %s32
      %s34 = sshll.u32 [#allocation8], 4
      %s35 = int_to_ptr.vmem [resolvable:$true] %s34
      %40 = dma.hbm_to_vmem [thread:$0]  %s33, 4096, %s35, [#allocation9], 256, 256, 16
    $region9: #{tpu_custom_call.1} parent=1 // pred_fallthru
      _
    // Predicated region
    $region10: #{tpu_custom_call.1} parent=1 // pred_check
      _
    $region11: #{tpu_custom_call.1} parent=1 // pred_check_branch
      %42 = sbr.rel (0) target = $region13
    $region12: #{tpu_custom_call.1} parent=1 // pred_region
      %44 = vsyncadd [#allocation9], 0
      %s45 = sshll.u32 %s2, 4
      %s46 = int_to_ptr.hbm [resolvable:$true] %s45
      %s47 = sshll.u32 [#allocation10], 4
      %s48 = int_to_ptr.vmem [resolvable:$true] %s47
      %53 = dma.hbm_to_vmem [thread:$0]  %s46, 4096, %s48, [#allocation9], 256, 256, 16
    $region13: #{tpu_custom_call.1} parent=1 // pred_fallthru
      _
    // Predicated region
    $region14: #{tpu_custom_call.1} parent=1 // pred_check
      _
    $region15: #{tpu_custom_call.1} parent=1 // pred_check_branch
      %55 = sbr.rel (0) target = $region17
    $region16: #{tpu_custom_call.1} parent=1 // pred_region
      %57 = vsyncadd [#allocation12], 0
      %s59 = sshll.u32 %s3, 4
      %s60 = int_to_ptr.hbm [resolvable:$true] %s59
      %s61 = sshll.u32 [#allocation11], 4
      %s62 = int_to_ptr.vmem [resolvable:$true] %s61
      %64 = dma.hbm_to_vmem [thread:$0]  %s60, 64, %s62, [#allocation12]
    $region17: #{tpu_custom_call.1} parent=1 // pred_fallthru
      _
    // Predicated region
    $region18: #{tpu_custom_call.1} parent=1 // pred_check
      _
    $region19: #{tpu_custom_call.1} parent=1 // pred_check_branch
      %66 = sbr.rel (0) target = $region21
    $region20: #{tpu_custom_call.1} parent=1 // pred_region
      %68 = vsyncadd [#allocation12], 0
      %s69 = sshll.u32 %s4, 4
      %s70 = int_to_ptr.hbm [resolvable:$true] %s69
      %s71 = sshll.u32 [#allocation13], 4
      %s72 = int_to_ptr.vmem [resolvable:$true] %s71
      %77 = dma.hbm_to_vmem [thread:$0]  %s70, 1024, %s72, [#allocation12], 64, 64, 4
    $region21: #{tpu_custom_call.1} parent=1 // pred_fallthru
      _
    // Predicated region
    $region22: #{tpu_custom_call.1} parent=1 // pred_check
      _
    $region23: #{tpu_custom_call.1} parent=1 // pred_check_branch
      %79 = sbr.rel (0) target = $region25
    $region24: #{tpu_custom_call.1} parent=1 // pred_region
      _
    $region25: #{tpu_custom_call.1} parent=1 // pred_fallthru
      _
    // Predicated region
    $region26: #{tpu_custom_call.1} parent=1 // pred_check
      _
    $region27: #{tpu_custom_call.1} parent=1 // pred_check_branch
      %81 = sbr.rel (0) target = $region29
    $region28: #{tpu_custom_call.1} parent=1 // pred_region
      %83 = dma.done [#allocation6], 512
    $region29: #{tpu_custom_call.1} parent=1 // pred_fallthru
      _
    // Predicated region
    $region30: #{tpu_custom_call.1} parent=1 // pred_check
      _
    $region31: #{tpu_custom_call.1} parent=1 // pred_check_branch
      %85 = sbr.rel (0) target = $region33
    $region32: #{tpu_custom_call.1} parent=1 // pred_region
      %87 = dma.done [#allocation9], 4096
    $region33: #{tpu_custom_call.1} parent=1 // pred_fallthru
      _
    // Predicated region
    $region34: #{tpu_custom_call.1} parent=1 // pred_check
      _
    $region35: #{tpu_custom_call.1} parent=1 // pred_check_branch
      %89 = sbr.rel (0) target = $region37
    $region36: #{tpu_custom_call.1} parent=1 // pred_region
      %91 = dma.done [#allocation9], 4096
    $region37: #{tpu_custom_call.1} parent=1 // pred_fallthru
      _
    // Predicated region
    $region38: #{tpu_custom_call.1} parent=1 // pred_check
      _
    $region39: #{tpu_custom_call.1} parent=1 // pred_check_branch
      %93 = sbr.rel (0) target = $region41
    $region40: #{tpu_custom_call.1} parent=1 // pred_region
      %95 = dma.done [#allocation12], 64
    $region41: #{tpu_custom_call.1} parent=1 // pred_fallthru
      _
    // Predicated region
    $region42: #{tpu_custom_call.1} parent=1 // pred_check
      _
    $region43: #{tpu_custom_call.1} parent=1 // pred_check_branch
      %97 = sbr.rel (0) target = $region45
    $region44: #{tpu_custom_call.1} parent=1 // pred_region
      %99 = dma.done [#allocation12], 1024
    $region45: #{tpu_custom_call.1} parent=1 // pred_fallthru
      _
    %p100 = scmp.eq.s32.totalorder 0, 0
    // Predicated region
    $region46: #{tpu_custom_call.1} parent=1 // pred_check
      %p101 = pneg %p100
    $region47: #{tpu_custom_call.1} parent=1 // pred_check_branch
      %103 = sbr.rel (%p101) target = $region49
    $region48: #{tpu_custom_call.1} parent=1 // pred_region
      %104 = vst [vmem:[#allocation2] sm:$0xff] 0.0
      %105 = vst [vmem:[#allocation3] sm:$0xff] 0.0
    $region49: #{tpu_custom_call.1} parent=1 // pred_fallthru
      _
    %v106 = vld [vmem:[#allocation5] sm:$0xf]
    %v107 = vld [vmem:[#allocation5 + $0x4] sm:$0xf]
    %v108 = vld [vmem:[#allocation5 + $0x8] sm:$0xf]
    %v109 = vld [vmem:[#allocation5 + $0xc] sm:$0xf]
    %v110 = vld [vmem:[#allocation5 + $0x10] sm:$0xf]
    %v111 = vld [vmem:[#allocation5 + $0x14] sm:$0xf]
    %v112 = vld [vmem:[#allocation5 + $0x18] sm:$0xf]
    %v113 = vld [vmem:[#allocation5 + $0x1c] sm:$0xf]
    %v114 = vld [vmem:[#allocation8] sm:$0xff]
    %v115 = vld [vmem:[#allocation8 + $0x8] sm:$0xff]
    %v116 = vld [vmem:[#allocation8 + $0x10] sm:$0xff]
    %v117 = vld [vmem:[#allocation8 + $0x18] sm:$0xff]
    %v118 = vld [vmem:[#allocation8 + $0x20] sm:$0xff]
    %v119 = vld [vmem:[#allocation8 + $0x28] sm:$0xff]
    %v120 = vld [vmem:[#allocation8 + $0x30] sm:$0xff]
    %v121 = vld [vmem:[#allocation8 + $0x38] sm:$0xff]
    %v122 = vld [vmem:[#allocation8 + $0x40] sm:$0xff]
    %v123 = vld [vmem:[#allocation8 + $0x48] sm:$0xff]
    %v124 = vld [vmem:[#allocation8 + $0x50] sm:$0xff]
    %v125 = vld [vmem:[#allocation8 + $0x58] sm:$0xff]
    %v126 = vld [vmem:[#allocation8 + $0x60] sm:$0xff]
    %v127 = vld [vmem:[#allocation8 + $0x68] sm:$0xff]
    %v128 = vld [vmem:[#allocation8 + $0x70] sm:$0xff]
    %v129 = vld [vmem:[#allocation8 + $0x78] sm:$0xff]
    %v130 = vld [vmem:[#allocation8 + $0x80] sm:$0xff]
    %v131 = vld [vmem:[#allocation8 + $0x88] sm:$0xff]
    %v132 = vld [vmem:[#allocation8 + $0x90] sm:$0xff]
    %v133 = vld [vmem:[#allocation8 + $0x98] sm:$0xff]
    %v134 = vld [vmem:[#allocation8 + $0xa0] sm:$0xff]
    %v135 = vld [vmem:[#allocation8 + $0xa8] sm:$0xff]
    %v136 = vld [vmem:[#allocation8 + $0xb0] sm:$0xff]
    %v137 = vld [vmem:[#allocation8 + $0xb8] sm:$0xff]
    %v138 = vld [vmem:[#allocation8 + $0xc0] sm:$0xff]
    %v139 = vld [vmem:[#allocation8 + $0xc8] sm:$0xff]
    %v140 = vld [vmem:[#allocation8 + $0xd0] sm:$0xff]
    %v141 = vld [vmem:[#allocation8 + $0xd8] sm:$0xff]
    %v142 = vld [vmem:[#allocation8 + $0xe0] sm:$0xff]
    %v143 = vld [vmem:[#allocation8 + $0xe8] sm:$0xff]
    %v144 = vld [vmem:[#allocation8 + $0xf0] sm:$0xff]
    %v145 = vld [vmem:[#allocation8 + $0xf8] sm:$0xff]
    %v146 = vld [vmem:[#allocation11] sm:$0xf]
    %v148 = vperm.slane %v146, 0
    %v149 = vperm.slane %v146, 1
    %v150 = vperm.slane %v146, 2
    %v151 = vperm.slane %v146, 3
    %v164 = vunpack.c.l.b16 %v106
    %v165 = vunpack.c.l.b16 %v107
    %v166 = vunpack.c.l.b16 %v108
    %v167 = vunpack.c.l.b16 %v109
    %v168 = vunpack.c.l.b16 %v110
    %v169 = vunpack.c.l.b16 %v111
    %v170 = vunpack.c.l.b16 %v112
    %v171 = vunpack.c.l.b16 %v113
    %v172 = vpack.c.b16 %v165, %v164
    %v173 = vpack.c.b16 %v167, %v166
    %v174 = vpack.c.b16 %v169, %v168
    %v175 = vpack.c.b16 %v171, %v170
    %v212 = vunpack.c.l.b16 %v114
    %v213 = vunpack.c.h.b16 %v114
    %v214 = vunpack.c.l.b16 %v115
    %v215 = vunpack.c.h.b16 %v115
    %v216 = vunpack.c.l.b16 %v116
    %v217 = vunpack.c.h.b16 %v116
    %v218 = vunpack.c.l.b16 %v117
    %v219 = vunpack.c.h.b16 %v117
    %v220 = vunpack.c.l.b16 %v118
    %v221 = vunpack.c.h.b16 %v118
    %v222 = vunpack.c.l.b16 %v119
    %v223 = vunpack.c.h.b16 %v119
    %v224 = vunpack.c.l.b16 %v120
    %v225 = vunpack.c.h.b16 %v120
    %v226 = vunpack.c.l.b16 %v121
    %v227 = vunpack.c.h.b16 %v121
    %v228 = vunpack.c.l.b16 %v122
    %v229 = vunpack.c.h.b16 %v122
    %v230 = vunpack.c.l.b16 %v123
    %v231 = vunpack.c.h.b16 %v123
    %v232 = vunpack.c.l.b16 %v124
    %v233 = vunpack.c.h.b16 %v124
    %v234 = vunpack.c.l.b16 %v125
    %v235 = vunpack.c.h.b16 %v125
    %v236 = vunpack.c.l.b16 %v126
    %v237 = vunpack.c.h.b16 %v126
    %v238 = vunpack.c.l.b16 %v127
    %v239 = vunpack.c.h.b16 %v127
    %v240 = vunpack.c.l.b16 %v128
    %v241 = vunpack.c.h.b16 %v128
    %v242 = vunpack.c.l.b16 %v129
    %v243 = vunpack.c.h.b16 %v129
    %v244 = vunpack.c.l.b16 %v130
    %v245 = vunpack.c.h.b16 %v130
    %v246 = vunpack.c.l.b16 %v131
    %v247 = vunpack.c.h.b16 %v131
    %v248 = vunpack.c.l.b16 %v132
    %v249 = vunpack.c.h.b16 %v132
    %v250 = vunpack.c.l.b16 %v133
    %v251 = vunpack.c.h.b16 %v133
    %v252 = vunpack.c.l.b16 %v134
    %v253 = vunpack.c.h.b16 %v134
    %v254 = vunpack.c.l.b16 %v135
    %v255 = vunpack.c.h.b16 %v135
    %v256 = vunpack.c.l.b16 %v136
    %v257 = vunpack.c.h.b16 %v136
    %v258 = vunpack.c.l.b16 %v137
    %v259 = vunpack.c.h.b16 %v137
    %v260 = vunpack.c.l.b16 %v138
    %v261 = vunpack.c.h.b16 %v138
    %v262 = vunpack.c.l.b16 %v139
    %v263 = vunpack.c.h.b16 %v139
    %v264 = vunpack.c.l.b16 %v140
    %v265 = vunpack.c.h.b16 %v140
    %v266 = vunpack.c.l.b16 %v141
    %v267 = vunpack.c.h.b16 %v141
    %v268 = vunpack.c.l.b16 %v142
    %v269 = vunpack.c.h.b16 %v142
    %v270 = vunpack.c.l.b16 %v143
    %v271 = vunpack.c.h.b16 %v143
    %v272 = vunpack.c.l.b16 %v144
    %v273 = vunpack.c.h.b16 %v144
    %v274 = vunpack.c.l.b16 %v145
    %v275 = vunpack.c.h.b16 %v145
    %v276 = vpack.c.b16 %v216, %v212
    %v277 = vpack.c.b16 %v217, %v213
    %v278 = vpack.c.b16 %v218, %v214
    %v279 = vpack.c.b16 %v219, %v215
    %v280 = vpack.c.b16 %v224, %v220
    %v281 = vpack.c.b16 %v225, %v221
    %v282 = vpack.c.b16 %v226, %v222
    %v283 = vpack.c.b16 %v227, %v223
    %v284 = vpack.c.b16 %v232, %v228
    %v285 = vpack.c.b16 %v233, %v229
    %v286 = vpack.c.b16 %v234, %v230
    %v287 = vpack.c.b16 %v235, %v231
    %v288 = vpack.c.b16 %v240, %v236
    %v289 = vpack.c.b16 %v241, %v237
    %v290 = vpack.c.b16 %v242, %v238
    %v291 = vpack.c.b16 %v243, %v239
    %v292 = vpack.c.b16 %v248, %v244
    %v293 = vpack.c.b16 %v249, %v245
    %v294 = vpack.c.b16 %v250, %v246
    %v295 = vpack.c.b16 %v251, %v247
    %v296 = vpack.c.b16 %v256, %v252
    %v297 = vpack.c.b16 %v257, %v253
    %v298 = vpack.c.b16 %v258, %v254
    %v299 = vpack.c.b16 %v259, %v255
    %v300 = vpack.c.b16 %v264, %v260
    %v301 = vpack.c.b16 %v265, %v261
    %v302 = vpack.c.b16 %v266, %v262
    %v303 = vpack.c.b16 %v267, %v263
    %v304 = vpack.c.b16 %v272, %v268
    %v305 = vpack.c.b16 %v273, %v269
    %v306 = vpack.c.b16 %v274, %v270
    %v307 = vpack.c.b16 %v275, %v271
    %340 = vmatpush.bf16.msra.mxu0 %v304
    %341 = vmatpush.bf16.msra.mxu0 %v300
    %342 = vmatpush.bf16.msra.mxu0 %v296
    %343 = vmatpush.bf16.msra.mxu0 %v292
    %344 = vmatpush.bf16.msra.mxu0 %v288
    %345 = vmatpush.bf16.msra.mxu0 %v284
    %346 = vmatpush.bf16.msra.mxu0 %v280
    %347 = vmatpush.bf16.msra.mxu0 %v276
    %348 = vmatmul.bf16.gmra.mxu0 %v172
    %v349 = vpop.f32.mrf.mxu0
    %v350 = vadd.f32 %v148, %v349
    %v351 = vpop.f32.mrf.mxu0
    %v352 = vadd.f32 %v148, %v351
    %353 = vmatmul.bf16.gmra.mxu0 %v173
    %v354 = vpop.f32.mrf.mxu0
    %v355 = vadd.f32 %v148, %v354
    %v356 = vpop.f32.mrf.mxu0
    %v357 = vadd.f32 %v148, %v356
    %358 = vmatmul.bf16.gmra.mxu0 %v174
    %v359 = vpop.f32.mrf.mxu0
    %v360 = vadd.f32 %v148, %v359
    %v361 = vpop.f32.mrf.mxu0
    %v362 = vadd.f32 %v148, %v361
    %363 = vmatmul.bf16.gmra.mxu0 %v175
    %v364 = vpop.f32.mrf.mxu0
    %v365 = vadd.f32 %v148, %v364
    %v366 = vpop.f32.mrf.mxu0
    %v367 = vadd.f32 %v148, %v366
    %368 = vdwg.mxu0
    %369 = vmatpush.bf16.msra.mxu0 %v305
    %370 = vmatpush.bf16.msra.mxu0 %v301
    %371 = vmatpush.bf16.msra.mxu0 %v297
    %372 = vmatpush.bf16.msra.mxu0 %v293
    %373 = vmatpush.bf16.msra.mxu0 %v289
    %374 = vmatpush.bf16.msra.mxu0 %v285
    %375 = vmatpush.bf16.msra.mxu0 %v281
    %376 = vmatpush.bf16.msra.mxu0 %v277
    %377 = vmatmul.bf16.gmra.mxu0 %v172
    %v378 = vpop.f32.mrf.mxu0
    %v379 = vadd.f32 %v149, %v378
    %v380 = vpop.f32.mrf.mxu0
    %v381 = vadd.f32 %v149, %v380
    %382 = vmatmul.bf16.gmra.mxu0 %v173
    %v383 = vpop.f32.mrf.mxu0
    %v384 = vadd.f32 %v149, %v383
    %v385 = vpop.f32.mrf.mxu0
    %v386 = vadd.f32 %v149, %v385
    %387 = vmatmul.bf16.gmra.mxu0 %v174
    %v388 = vpop.f32.mrf.mxu0
    %v389 = vadd.f32 %v149, %v388
    %v390 = vpop.f32.mrf.mxu0
    %v391 = vadd.f32 %v149, %v390
    %392 = vmatmul.bf16.gmra.mxu0 %v175
    %v393 = vpop.f32.mrf.mxu0
    %v394 = vadd.f32 %v149, %v393
    %v395 = vpop.f32.mrf.mxu0
    %v396 = vadd.f32 %v149, %v395
    %397 = vdwg.mxu0
    %398 = vmatpush.bf16.msra.mxu0 %v306
    %399 = vmatpush.bf16.msra.mxu0 %v302
    %400 = vmatpush.bf16.msra.mxu0 %v298
    %401 = vmatpush.bf16.msra.mxu0 %v294
    %402 = vmatpush.bf16.msra.mxu0 %v290
    %403 = vmatpush.bf16.msra.mxu0 %v286
    %404 = vmatpush.bf16.msra.mxu0 %v282
    %405 = vmatpush.bf16.msra.mxu0 %v278
    %406 = vmatmul.bf16.gmra.mxu0 %v172
    %v407 = vpop.f32.mrf.mxu0
    %v408 = vadd.f32 %v150, %v407
    %v409 = vpop.f32.mrf.mxu0
    %v410 = vadd.f32 %v150, %v409
    %411 = vmatmul.bf16.gmra.mxu0 %v173
    %v412 = vpop.f32.mrf.mxu0
    %v413 = vadd.f32 %v150, %v412
    %v414 = vpop.f32.mrf.mxu0
    %v415 = vadd.f32 %v150, %v414
    %416 = vmatmul.bf16.gmra.mxu0 %v174
    %v417 = vpop.f32.mrf.mxu0
    %v418 = vadd.f32 %v150, %v417
    %v419 = vpop.f32.mrf.mxu0
    %v420 = vadd.f32 %v150, %v419
    %421 = vmatmul.bf16.gmra.mxu0 %v175
    %v422 = vpop.f32.mrf.mxu0
    %v423 = vadd.f32 %v150, %v422
    %v424 = vpop.f32.mrf.mxu0
    %v425 = vadd.f32 %v150, %v424
    %426 = vdwg.mxu0
    %427 = vmatpush.bf16.msra.mxu0 %v307
    %428 = vmatpush.bf16.msra.mxu0 %v303
    %429 = vmatpush.bf16.msra.mxu0 %v299
    %430 = vmatpush.bf16.msra.mxu0 %v295
    %431 = vmatpush.bf16.msra.mxu0 %v291
    %432 = vmatpush.bf16.msra.mxu0 %v287
    %433 = vmatpush.bf16.msra.mxu0 %v283
    %434 = vmatpush.bf16.msra.mxu0 %v279
    %435 = vmatmul.bf16.gmra.mxu0 %v172
    %v436 = vpop.f32.mrf.mxu0
    %v437 = vadd.f32 %v151, %v436
    %v438 = vpop.f32.mrf.mxu0
    %v439 = vadd.f32 %v151, %v438
    %440 = vmatmul.bf16.gmra.mxu0 %v173
    %v441 = vpop.f32.mrf.mxu0
    %v442 = vadd.f32 %v151, %v441
    %v443 = vpop.f32.mrf.mxu0
    %v444 = vadd.f32 %v151, %v443
    %445 = vmatmul.bf16.gmra.mxu0 %v174
    %v446 = vpop.f32.mrf.mxu0
    %v447 = vadd.f32 %v151, %v446
    %v448 = vpop.f32.mrf.mxu0
    %v449 = vadd.f32 %v151, %v448
    %450 = vmatmul.bf16.gmra.mxu0 %v175
    %v451 = vpop.f32.mrf.mxu0
    %v452 = vadd.f32 %v151, %v451
    %v453 = vpop.f32.mrf.mxu0
    %v454 = vadd.f32 %v151, %v453
    %455 = vdwg.mxu0
    %456 = vst [vmem:[#allocation4] sm:$0xff] %v350
    %457 = vst [vmem:[#allocation4 + $0x8] sm:$0xff] %v379
    %458 = vst [vmem:[#allocation4 + $0x10] sm:$0xff] %v408
    %459 = vst [vmem:[#allocation4 + $0x18] sm:$0xff] %v437
    %460 = vst [vmem:[#allocation4 + $0x20] sm:$0xff] %v352
    %461 = vst [vmem:[#allocation4 + $0x28] sm:$0xff] %v381
    %462 = vst [vmem:[#allocation4 + $0x30] sm:$0xff] %v410
    %463 = vst [vmem:[#allocation4 + $0x38] sm:$0xff] %v439
    %464 = vst [vmem:[#allocation4 + $0x40] sm:$0xff] %v355
    %465 = vst [vmem:[#allocation4 + $0x48] sm:$0xff] %v384
    %466 = vst [vmem:[#allocation4 + $0x50] sm:$0xff] %v413
    %467 = vst [vmem:[#allocation4 + $0x58] sm:$0xff] %v442
    %468 = vst [vmem:[#allocation4 + $0x60] sm:$0xff] %v357
    %469 = vst [vmem:[#allocation4 + $0x68] sm:$0xff] %v386
    %470 = vst [vmem:[#allocation4 + $0x70] sm:$0xff] %v415
    %471 = vst [vmem:[#allocation4 + $0x78] sm:$0xff] %v444
    %472 = vst [vmem:[#allocation4 + $0x80] sm:$0xff] %v360
    %473 = vst [vmem:[#allocation4 + $0x88] sm:$0xff] %v389
    %474 = vst [vmem:[#allocation4 + $0x90] sm:$0xff] %v418
    %475 = vst [vmem:[#allocation4 + $0x98] sm:$0xff] %v447
    %476 = vst [vmem:[#allocation4 + $0xa0] sm:$0xff] %v362
    %477 = vst [vmem:[#allocation4 + $0xa8] sm:$0xff] %v391
    %478 = vst [vmem:[#allocation4 + $0xb0] sm:$0xff] %v420
    %479 = vst [vmem:[#allocation4 + $0xb8] sm:$0xff] %v449
    %480 = vst [vmem:[#allocation4 + $0xc0] sm:$0xff] %v365
    %481 = vst [vmem:[#allocation4 + $0xc8] sm:$0xff] %v394
    %482 = vst [vmem:[#allocation4 + $0xd0] sm:$0xff] %v423
    %483 = vst [vmem:[#allocation4 + $0xd8] sm:$0xff] %v452
    %484 = vst [vmem:[#allocation4 + $0xe0] sm:$0xff] %v367
    %485 = vst [vmem:[#allocation4 + $0xe8] sm:$0xff] %v396
    %486 = vst [vmem:[#allocation4 + $0xf0] sm:$0xff] %v425
    %487 = vst [vmem:[#allocation4 + $0xf8] sm:$0xff] %v454
    %v488 = vld [vmem:[#allocation2] sm:$0xff]
    %v489 = vld [vmem:[#allocation3] sm:$0xff]
    %s490 = smul.u32 0, 4
    %s491 = smul.addr %s490, 8
    %s492 = scalar_lea.vmem [#allocation4], %s491
    %v493 = vld [vmem:[%s492] sm:$0xff]
    %v494 = vld [vmem:[%s492 + $0x8] sm:$0xff]
    %v495 = vld [vmem:[%s492 + $0x10] sm:$0xff]
    %v496 = vld [vmem:[%s492 + $0x18] sm:$0xff]
    %v497 = vpack.c.bf16 %v488, %v488
    %v498 = vld [vmem:[#allocation10] sm:$0xff]
    %v499 = vld [vmem:[#allocation10 + $0x8] sm:$0xff]
    %v500 = vld [vmem:[#allocation10 + $0x10] sm:$0xff]
    %v501 = vld [vmem:[#allocation10 + $0x18] sm:$0xff]
    %v502 = vld [vmem:[#allocation10 + $0x20] sm:$0xff]
    %v503 = vld [vmem:[#allocation10 + $0x28] sm:$0xff]
    %v504 = vld [vmem:[#allocation10 + $0x30] sm:$0xff]
    %v505 = vld [vmem:[#allocation10 + $0x38] sm:$0xff]
    %v506 = vld [vmem:[#allocation10 + $0x40] sm:$0xff]
    %v507 = vld [vmem:[#allocation10 + $0x48] sm:$0xff]
    %v508 = vld [vmem:[#allocation10 + $0x50] sm:$0xff]
    %v509 = vld [vmem:[#allocation10 + $0x58] sm:$0xff]
    %v510 = vld [vmem:[#allocation10 + $0x60] sm:$0xff]
    %v511 = vld [vmem:[#allocation10 + $0x68] sm:$0xff]
    %v512 = vld [vmem:[#allocation10 + $0x70] sm:$0xff]
    %v513 = vld [vmem:[#allocation10 + $0x78] sm:$0xff]
    %v514 = vld [vmem:[#allocation10 + $0x80] sm:$0xff]
    %v515 = vld [vmem:[#allocation10 + $0x88] sm:$0xff]
    %v516 = vld [vmem:[#allocation10 + $0x90] sm:$0xff]
    %v517 = vld [vmem:[#allocation10 + $0x98] sm:$0xff]
    %v518 = vld [vmem:[#allocation10 + $0xa0] sm:$0xff]
    %v519 = vld [vmem:[#allocation10 + $0xa8] sm:$0xff]
    %v520 = vld [vmem:[#allocation10 + $0xb0] sm:$0xff]
    %v521 = vld [vmem:[#allocation10 + $0xb8] sm:$0xff]
    %v522 = vld [vmem:[#allocation10 + $0xc0] sm:$0xff]
    %v523 = vld [vmem:[#allocation10 + $0xc8] sm:$0xff]
    %v524 = vld [vmem:[#allocation10 + $0xd0] sm:$0xff]
    %v525 = vld [vmem:[#allocation10 + $0xd8] sm:$0xff]
    %v526 = vld [vmem:[#allocation10 + $0xe0] sm:$0xff]
    %v527 = vld [vmem:[#allocation10 + $0xe8] sm:$0xff]
    %v528 = vld [vmem:[#allocation10 + $0xf0] sm:$0xff]
    %v529 = vld [vmem:[#allocation10 + $0xf8] sm:$0xff]
    %v562 = vunpack.c.l.b16 %v498
    %v563 = vunpack.c.h.b16 %v498
    %v564 = vunpack.c.l.b16 %v499
    %v565 = vunpack.c.h.b16 %v499
    %v566 = vunpack.c.l.b16 %v500
    %v567 = vunpack.c.h.b16 %v500
    %v568 = vunpack.c.l.b16 %v501
    %v569 = vunpack.c.h.b16 %v501
    %v570 = vunpack.c.l.b16 %v502
    %v571 = vunpack.c.h.b16 %v502
    %v572 = vunpack.c.l.b16 %v503
    %v573 = vunpack.c.h.b16 %v503
    %v574 = vunpack.c.l.b16 %v504
    %v575 = vunpack.c.h.b16 %v504
    %v576 = vunpack.c.l.b16 %v505
    %v577 = vunpack.c.h.b16 %v505
    %v578 = vunpack.c.l.b16 %v506
    %v579 = vunpack.c.h.b16 %v506
    %v580 = vunpack.c.l.b16 %v507
    %v581 = vunpack.c.h.b16 %v507
    %v582 = vunpack.c.l.b16 %v508
    %v583 = vunpack.c.h.b16 %v508
    %v584 = vunpack.c.l.b16 %v509
    %v585 = vunpack.c.h.b16 %v509
    %v586 = vunpack.c.l.b16 %v510
    %v587 = vunpack.c.h.b16 %v510
    %v588 = vunpack.c.l.b16 %v511
    %v589 = vunpack.c.h.b16 %v511
    %v590 = vunpack.c.l.b16 %v512
    %v591 = vunpack.c.h.b16 %v512
    %v592 = vunpack.c.l.b16 %v513
    %v593 = vunpack.c.h.b16 %v513
    %v594 = vunpack.c.l.b16 %v514
    %v595 = vunpack.c.h.b16 %v514
    %v596 = vunpack.c.l.b16 %v515
    %v597 = vunpack.c.h.b16 %v515
    %v598 = vunpack.c.l.b16 %v516
    %v599 = vunpack.c.h.b16 %v516
    %v600 = vunpack.c.l.b16 %v517
    %v601 = vunpack.c.h.b16 %v517
    %v602 = vunpack.c.l.b16 %v518
    %v603 = vunpack.c.h.b16 %v518
    %v604 = vunpack.c.l.b16 %v519
    %v605 = vunpack.c.h.b16 %v519
    %v606 = vunpack.c.l.b16 %v520
    %v607 = vunpack.c.h.b16 %v520
    %v608 = vunpack.c.l.b16 %v521
    %v609 = vunpack.c.h.b16 %v521
    %v610 = vunpack.c.l.b16 %v522
    %v611 = vunpack.c.h.b16 %v522
    %v612 = vunpack.c.l.b16 %v523
    %v613 = vunpack.c.h.b16 %v523
    %v614 = vunpack.c.l.b16 %v524
    %v615 = vunpack.c.h.b16 %v524
    %v616 = vunpack.c.l.b16 %v525
    %v617 = vunpack.c.h.b16 %v525
    %v618 = vunpack.c.l.b16 %v526
    %v619 = vunpack.c.h.b16 %v526
    %v620 = vunpack.c.l.b16 %v527
    %v621 = vunpack.c.h.b16 %v527
    %v622 = vunpack.c.l.b16 %v528
    %v623 = vunpack.c.h.b16 %v528
    %v624 = vunpack.c.l.b16 %v529
    %v625 = vunpack.c.h.b16 %v529
    %v626 = vpack.c.b16 %v566, %v562
    %v627 = vpack.c.b16 %v567, %v563
    %v628 = vpack.c.b16 %v568, %v564
    %v629 = vpack.c.b16 %v569, %v565
    %v630 = vpack.c.b16 %v574, %v570
    %v631 = vpack.c.b16 %v575, %v571
    %v632 = vpack.c.b16 %v576, %v572
    %v633 = vpack.c.b16 %v577, %v573
    %v634 = vpack.c.b16 %v582, %v578
    %v635 = vpack.c.b16 %v583, %v579
    %v636 = vpack.c.b16 %v584, %v580
    %v637 = vpack.c.b16 %v585, %v581
    %v638 = vpack.c.b16 %v590, %v586
    %v639 = vpack.c.b16 %v591, %v587
    %v640 = vpack.c.b16 %v592, %v588
    %v641 = vpack.c.b16 %v593, %v589
    %v642 = vpack.c.b16 %v598, %v594
    %v643 = vpack.c.b16 %v599, %v595
    %v644 = vpack.c.b16 %v600, %v596
    %v645 = vpack.c.b16 %v601, %v597
    %v646 = vpack.c.b16 %v606, %v602
    %v647 = vpack.c.b16 %v607, %v603
    %v648 = vpack.c.b16 %v608, %v604
    %v649 = vpack.c.b16 %v609, %v605
    %v650 = vpack.c.b16 %v614, %v610
    %v651 = vpack.c.b16 %v615, %v611
    %v652 = vpack.c.b16 %v616, %v612
    %v653 = vpack.c.b16 %v617, %v613
    %v654 = vpack.c.b16 %v622, %v618
    %v655 = vpack.c.b16 %v623, %v619
    %v656 = vpack.c.b16 %v624, %v620
    %v657 = vpack.c.b16 %v625, %v621
    %690 = vmatpush.bf16.msra.mxu0 %v654
    %691 = vmatpush.bf16.msra.mxu0 %v650
    %692 = vmatpush.bf16.msra.mxu0 %v646
    %693 = vmatpush.bf16.msra.mxu0 %v642
    %694 = vmatpush.bf16.msra.mxu0 %v638
    %695 = vmatpush.bf16.msra.mxu0 %v634
    %696 = vmatpush.bf16.msra.mxu0 %v630
    %697 = vmatpush.bf16.msra.mxu0 %v626
    %698 = vmatmul.bf16.gmra.mxu0 %v497
    %v699 = vpop.f32.mrf.mxu0
    %v700 = vadd.f32 0.0, %v699
    %v701 = vpop.f32.mrf.mxu0
    %702 = vdwg.mxu0
    %703 = vmatpush.bf16.msra.mxu0 %v655
    %704 = vmatpush.bf16.msra.mxu0 %v651
    %705 = vmatpush.bf16.msra.mxu0 %v647
    %706 = vmatpush.bf16.msra.mxu0 %v643
    %707 = vmatpush.bf16.msra.mxu0 %v639
    %708 = vmatpush.bf16.msra.mxu0 %v635
    %709 = vmatpush.bf16.msra.mxu0 %v631
    %710 = vmatpush.bf16.msra.mxu0 %v627
    %711 = vmatmul.bf16.gmra.mxu0 %v497
    %v712 = vpop.f32.mrf.mxu0
    %v713 = vadd.f32 0.0, %v712
    %v714 = vpop.f32.mrf.mxu0
    %715 = vdwg.mxu0
    %716 = vmatpush.bf16.msra.mxu0 %v656
    %717 = vmatpush.bf16.msra.mxu0 %v652
    %718 = vmatpush.bf16.msra.mxu0 %v648
    %719 = vmatpush.bf16.msra.mxu0 %v644
    %720 = vmatpush.bf16.msra.mxu0 %v640
    %721 = vmatpush.bf16.msra.mxu0 %v636
    %722 = vmatpush.bf16.msra.mxu0 %v632
    %723 = vmatpush.bf16.msra.mxu0 %v628
    %724 = vmatmul.bf16.gmra.mxu0 %v497
    %v725 = vpop.f32.mrf.mxu0
    %v726 = vadd.f32 0.0, %v725
    %v727 = vpop.f32.mrf.mxu0
    %728 = vdwg.mxu0
    %729 = vmatpush.bf16.msra.mxu0 %v657
    %730 = vmatpush.bf16.msra.mxu0 %v653
    %731 = vmatpush.bf16.msra.mxu0 %v649
    %732 = vmatpush.bf16.msra.mxu0 %v645
    %733 = vmatpush.bf16.msra.mxu0 %v641
    %734 = vmatpush.bf16.msra.mxu0 %v637
    %735 = vmatpush.bf16.msra.mxu0 %v633
    %736 = vmatpush.bf16.msra.mxu0 %v629
    %737 = vmatmul.bf16.gmra.mxu0 %v497
    %v738 = vpop.f32.mrf.mxu0
    %v739 = vadd.f32 0.0, %v738
    %v740 = vpop.f32.mrf.mxu0
    %741 = vdwg.mxu0
    %v742 = vadd.f32 %v493, %v700
    %v743 = vadd.f32 %v494, %v713
    %v744 = vadd.f32 %v495, %v726
    %v745 = vadd.f32 %v496, %v739
    %v746 = vmul.f32 %v742, 0.5
    %v747 = vtanh.pop %v746
    %v748 = vadd.f32 %v747, 1.0
    %v749 = vmul.f32 %v748, 0.5
    %v750 = vmul.f32 %v743, 0.5
    %v751 = vtanh.pop %v750
    %v752 = vadd.f32 %v751, 1.0
    %v753 = vmul.f32 %v752, 0.5
    %v754 = vtanh.pop %v744
    %v755 = vmul.f32 %v745, 0.5
    %v756 = vtanh.pop %v755
    %v757 = vadd.f32 %v756, 1.0
    %v758 = vmul.f32 %v757, 0.5
    %v759 = vmul.f32 %v753, %v489
    %v760 = vmul.f32 %v749, %v754
    %v761 = vadd.f32 %v759, %v760
    %v762 = vtanh.pop %v761
    %v763 = vmul.f32 %v758, %v762
    %s764 = smul.u32 1, 4
    %s765 = smul.addr %s764, 8
    %s766 = scalar_lea.vmem [#allocation4], %s765
    %v767 = vld [vmem:[%s766] sm:$0xff]
    %v768 = vld [vmem:[%s766 + $0x8] sm:$0xff]
    %v769 = vld [vmem:[%s766 + $0x10] sm:$0xff]
    %v770 = vld [vmem:[%s766 + $0x18] sm:$0xff]
    %v771 = vpack.c.bf16 %v763, %v763
    %772 = vmatpush.bf16.msra.mxu0 %v654
    %773 = vmatpush.bf16.msra.mxu0 %v650
    %774 = vmatpush.bf16.msra.mxu0 %v646
    %775 = vmatpush.bf16.msra.mxu0 %v642
    %776 = vmatpush.bf16.msra.mxu0 %v638
    %777 = vmatpush.bf16.msra.mxu0 %v634
    %778 = vmatpush.bf16.msra.mxu0 %v630
    %779 = vmatpush.bf16.msra.mxu0 %v626
    %780 = vmatmul.bf16.gmra.mxu0 %v771
    %v781 = vpop.f32.mrf.mxu0
    %v782 = vadd.f32 0.0, %v781
    %v783 = vpop.f32.mrf.mxu0
    %784 = vdwg.mxu0
    %785 = vmatpush.bf16.msra.mxu0 %v655
    %786 = vmatpush.bf16.msra.mxu0 %v651
    %787 = vmatpush.bf16.msra.mxu0 %v647
    %788 = vmatpush.bf16.msra.mxu0 %v643
    %789 = vmatpush.bf16.msra.mxu0 %v639
    %790 = vmatpush.bf16.msra.mxu0 %v635
    %791 = vmatpush.bf16.msra.mxu0 %v631
    %792 = vmatpush.bf16.msra.mxu0 %v627
    %793 = vmatmul.bf16.gmra.mxu0 %v771
    %v794 = vpop.f32.mrf.mxu0
    %v795 = vadd.f32 0.0, %v794
    %v796 = vpop.f32.mrf.mxu0
    %797 = vdwg.mxu0
    %798 = vmatpush.bf16.msra.mxu0 %v656
    %799 = vmatpush.bf16.msra.mxu0 %v652
    %800 = vmatpush.bf16.msra.mxu0 %v648
    %801 = vmatpush.bf16.msra.mxu0 %v644
    %802 = vmatpush.bf16.msra.mxu0 %v640
    %803 = vmatpush.bf16.msra.mxu0 %v636
    %804 = vmatpush.bf16.msra.mxu0 %v632
    %805 = vmatpush.bf16.msra.mxu0 %v628
    %806 = vmatmul.bf16.gmra.mxu0 %v771
    %v807 = vpop.f32.mrf.mxu0
    %v808 = vadd.f32 0.0, %v807
    %v809 = vpop.f32.mrf.mxu0
    %810 = vdwg.mxu0
    %811 = vmatpush.bf16.msra.mxu0 %v657
    %812 = vmatpush.bf16.msra.mxu0 %v653
    %813 = vmatpush.bf16.msra.mxu0 %v649
    %814 = vmatpush.bf16.msra.mxu0 %v645
    %815 = vmatpush.bf16.msra.mxu0 %v641
    %816 = vmatpush.bf16.msra.mxu0 %v637
    %817 = vmatpush.bf16.msra.mxu0 %v633
    %818 = vmatpush.bf16.msra.mxu0 %v629
    %819 = vmatmul.bf16.gmra.mxu0 %v771
    %v820 = vpop.f32.mrf.mxu0
    %v821 = vadd.f32 0.0, %v820
    %v822 = vpop.f32.mrf.mxu0
    %823 = vdwg.mxu0
    %v824 = vadd.f32 %v767, %v782
    %v825 = vadd.f32 %v768, %v795
    %v826 = vadd.f32 %v769, %v808
    %v827 = vadd.f32 %v770, %v821
    %v828 = vmul.f32 %v824, 0.5
    %v829 = vtanh.pop %v828
    %v830 = vadd.f32 %v829, 1.0
    %v831 = vmul.f32 %v830, 0.5
    %v832 = vmul.f32 %v825, 0.5
    %v833 = vtanh.pop %v832
    %v834 = vadd.f32 %v833, 1.0
    %v835 = vmul.f32 %v834, 0.5
    %v836 = vtanh.pop %v826
    %v837 = vmul.f32 %v827, 0.5
    %v838 = vtanh.pop %v837
    %v839 = vadd.f32 %v838, 1.0
    %v840 = vmul.f32 %v839, 0.5
    %v841 = vmul.f32 %v835, %v761
    %v842 = vmul.f32 %v831, %v836
    %v843 = vadd.f32 %v841, %v842
    %v844 = vtanh.pop %v843
    %v845 = vmul.f32 %v840, %v844
    %s846 = smul.u32 2, 4
    %s847 = smul.addr %s846, 8
    %s848 = scalar_lea.vmem [#allocation4], %s847
    %v849 = vld [vmem:[%s848] sm:$0xff]
    %v850 = vld [vmem:[%s848 + $0x8] sm:$0xff]
    %v851 = vld [vmem:[%s848 + $0x10] sm:$0xff]
    %v852 = vld [vmem:[%s848 + $0x18] sm:$0xff]
    %v853 = vpack.c.bf16 %v845, %v845
    %854 = vmatpush.bf16.msra.mxu0 %v654
    %855 = vmatpush.bf16.msra.mxu0 %v650
    %856 = vmatpush.bf16.msra.mxu0 %v646
    %857 = vmatpush.bf16.msra.mxu0 %v642
    %858 = vmatpush.bf16.msra.mxu0 %v638
    %859 = vmatpush.bf16.msra.mxu0 %v634
    %860 = vmatpush.bf16.msra.mxu0 %v630
    %861 = vmatpush.bf16.msra.mxu0 %v626
    %862 = vmatmul.bf16.gmra.mxu0 %v853
    %v863 = vpop.f32.mrf.mxu0
    %v864 = vadd.f32 0.0, %v863
    %v865 = vpop.f32.mrf.mxu0
    %866 = vdwg.mxu0
    %867 = vmatpush.bf16.msra.mxu0 %v655
    %868 = vmatpush.bf16.msra.mxu0 %v651
    %869 = vmatpush.bf16.msra.mxu0 %v647
    %870 = vmatpush.bf16.msra.mxu0 %v643
    %871 = vmatpush.bf16.msra.mxu0 %v639
    %872 = vmatpush.bf16.msra.mxu0 %v635
    %873 = vmatpush.bf16.msra.mxu0 %v631
    %874 = vmatpush.bf16.msra.mxu0 %v627
    %875 = vmatmul.bf16.gmra.mxu0 %v853
    %v876 = vpop.f32.mrf.mxu0
    %v877 = vadd.f32 0.0, %v876
    %v878 = vpop.f32.mrf.mxu0
    %879 = vdwg.mxu0
    %880 = vmatpush.bf16.msra.mxu0 %v656
    %881 = vmatpush.bf16.msra.mxu0 %v652
    %882 = vmatpush.bf16.msra.mxu0 %v648
    %883 = vmatpush.bf16.msra.mxu0 %v644
    %884 = vmatpush.bf16.msra.mxu0 %v640
    %885 = vmatpush.bf16.msra.mxu0 %v636
    %886 = vmatpush.bf16.msra.mxu0 %v632
    %887 = vmatpush.bf16.msra.mxu0 %v628
    %888 = vmatmul.bf16.gmra.mxu0 %v853
    %v889 = vpop.f32.mrf.mxu0
    %v890 = vadd.f32 0.0, %v889
    %v891 = vpop.f32.mrf.mxu0
    %892 = vdwg.mxu0
    %893 = vmatpush.bf16.msra.mxu0 %v657
    %894 = vmatpush.bf16.msra.mxu0 %v653
    %895 = vmatpush.bf16.msra.mxu0 %v649
    %896 = vmatpush.bf16.msra.mxu0 %v645
    %897 = vmatpush.bf16.msra.mxu0 %v641
    %898 = vmatpush.bf16.msra.mxu0 %v637
    %899 = vmatpush.bf16.msra.mxu0 %v633
    %900 = vmatpush.bf16.msra.mxu0 %v629
    %901 = vmatmul.bf16.gmra.mxu0 %v853
    %v902 = vpop.f32.mrf.mxu0
    %v903 = vadd.f32 0.0, %v902
    %v904 = vpop.f32.mrf.mxu0
    %905 = vdwg.mxu0
    %v906 = vadd.f32 %v849, %v864
    %v907 = vadd.f32 %v850, %v877
    %v908 = vadd.f32 %v851, %v890
    %v909 = vadd.f32 %v852, %v903
    %v910 = vmul.f32 %v906, 0.5
    %v911 = vtanh.pop %v910
    %v912 = vadd.f32 %v911, 1.0
    %v913 = vmul.f32 %v912, 0.5
    %v914 = vmul.f32 %v907, 0.5
    %v915 = vtanh.pop %v914
    %v916 = vadd.f32 %v915, 1.0
    %v917 = vmul.f32 %v916, 0.5
    %v918 = vtanh.pop %v908
    %v919 = vmul.f32 %v909, 0.5
    %v920 = vtanh.pop %v919
    %v921 = vadd.f32 %v920, 1.0
    %v922 = vmul.f32 %v921, 0.5
    %v923 = vmul.f32 %v917, %v843
    %v924 = vmul.f32 %v913, %v918
    %v925 = vadd.f32 %v923, %v924
    %v926 = vtanh.pop %v925
    %v927 = vmul.f32 %v922, %v926
    %s928 = smul.u32 3, 4
    %s929 = smul.addr %s928, 8
    %s930 = scalar_lea.vmem [#allocation4], %s929
    %v931 = vld [vmem:[%s930] sm:$0xff]
    %v932 = vld [vmem:[%s930 + $0x8] sm:$0xff]
    %v933 = vld [vmem:[%s930 + $0x10] sm:$0xff]
    %v934 = vld [vmem:[%s930 + $0x18] sm:$0xff]
    %v935 = vpack.c.bf16 %v927, %v927
    %936 = vmatpush.bf16.msra.mxu0 %v654
    %937 = vmatpush.bf16.msra.mxu0 %v650
    %938 = vmatpush.bf16.msra.mxu0 %v646
    %939 = vmatpush.bf16.msra.mxu0 %v642
    %940 = vmatpush.bf16.msra.mxu0 %v638
    %941 = vmatpush.bf16.msra.mxu0 %v634
    %942 = vmatpush.bf16.msra.mxu0 %v630
    %943 = vmatpush.bf16.msra.mxu0 %v626
    %944 = vmatmul.bf16.gmra.mxu0 %v935
    %v945 = vpop.f32.mrf.mxu0
    %v946 = vadd.f32 0.0, %v945
    %v947 = vpop.f32.mrf.mxu0
    %948 = vdwg.mxu0
    %949 = vmatpush.bf16.msra.mxu0 %v655
    %950 = vmatpush.bf16.msra.mxu0 %v651
    %951 = vmatpush.bf16.msra.mxu0 %v647
    %952 = vmatpush.bf16.msra.mxu0 %v643
    %953 = vmatpush.bf16.msra.mxu0 %v639
    %954 = vmatpush.bf16.msra.mxu0 %v635
    %955 = vmatpush.bf16.msra.mxu0 %v631
    %956 = vmatpush.bf16.msra.mxu0 %v627
    %957 = vmatmul.bf16.gmra.mxu0 %v935
    %v958 = vpop.f32.mrf.mxu0
    %v959 = vadd.f32 0.0, %v958
    %v960 = vpop.f32.mrf.mxu0
    %961 = vdwg.mxu0
    %962 = vmatpush.bf16.msra.mxu0 %v656
    %963 = vmatpush.bf16.msra.mxu0 %v652
    %964 = vmatpush.bf16.msra.mxu0 %v648
    %965 = vmatpush.bf16.msra.mxu0 %v644
    %966 = vmatpush.bf16.msra.mxu0 %v640
    %967 = vmatpush.bf16.msra.mxu0 %v636
    %968 = vmatpush.bf16.msra.mxu0 %v632
    %969 = vmatpush.bf16.msra.mxu0 %v628
    %970 = vmatmul.bf16.gmra.mxu0 %v935
    %v971 = vpop.f32.mrf.mxu0
    %v972 = vadd.f32 0.0, %v971
    %v973 = vpop.f32.mrf.mxu0
    %974 = vdwg.mxu0
    %975 = vmatpush.bf16.msra.mxu0 %v657
    %976 = vmatpush.bf16.msra.mxu0 %v653
    %977 = vmatpush.bf16.msra.mxu0 %v649
    %978 = vmatpush.bf16.msra.mxu0 %v645
    %979 = vmatpush.bf16.msra.mxu0 %v641
    %980 = vmatpush.bf16.msra.mxu0 %v637
    %981 = vmatpush.bf16.msra.mxu0 %v633
    %982 = vmatpush.bf16.msra.mxu0 %v629
    %983 = vmatmul.bf16.gmra.mxu0 %v935
    %v984 = vpop.f32.mrf.mxu0
    %v985 = vadd.f32 0.0, %v984
    %v986 = vpop.f32.mrf.mxu0
    %987 = vdwg.mxu0
    %v988 = vadd.f32 %v931, %v946
    %v989 = vadd.f32 %v932, %v959
    %v990 = vadd.f32 %v933, %v972
    %v991 = vadd.f32 %v934, %v985
    %v992 = vmul.f32 %v988, 0.5
    %v993 = vtanh.pop %v992
    %v994 = vadd.f32 %v993, 1.0
    %v995 = vmul.f32 %v994, 0.5
    %v996 = vmul.f32 %v989, 0.5
    %v997 = vtanh.pop %v996
    %v998 = vadd.f32 %v997, 1.0
    %v999 = vmul.f32 %v998, 0.5
    %v1000 = vtanh.pop %v990
    %v1001 = vmul.f32 %v991, 0.5
    %v1002 = vtanh.pop %v1001
    %v1003 = vadd.f32 %v1002, 1.0
    %v1004 = vmul.f32 %v1003, 0.5
    %v1005 = vmul.f32 %v999, %v925
    %v1006 = vmul.f32 %v995, %v1000
    %v1007 = vadd.f32 %v1005, %v1006
    %v1008 = vtanh.pop %v1007
    %v1009 = vmul.f32 %v1004, %v1008
    %s1010 = smul.u32 4, 4
    %s1011 = smul.addr %s1010, 8
    %s1012 = scalar_lea.vmem [#allocation4], %s1011
    %v1013 = vld [vmem:[%s1012] sm:$0xff]
    %v1014 = vld [vmem:[%s1012 + $0x8] sm:$0xff]
    %v1015 = vld [vmem:[%s1012 + $0x10] sm:$0xff]
    %v1016 = vld [vmem:[%s1012 + $0x18] sm:$0xff]
    %v1017 = vpack.c.bf16 %v1009, %v1009
    %1018 = vmatpush.bf16.msra.mxu0 %v654
    %1019 = vmatpush.bf16.msra.mxu0 %v650
    %1020 = vmatpush.bf16.msra.mxu0 %v646
    %1021 = vmatpush.bf16.msra.mxu0 %v642
    %1022 = vmatpush.bf16.msra.mxu0 %v638
    %1023 = vmatpush.bf16.msra.mxu0 %v634
    %1024 = vmatpush.bf16.msra.mxu0 %v630
    %1025 = vmatpush.bf16.msra.mxu0 %v626
    %1026 = vmatmul.bf16.gmra.mxu0 %v1017
    %v1027 = vpop.f32.mrf.mxu0
    %v1028 = vadd.f32 0.0, %v1027
    %v1029 = vpop.f32.mrf.mxu0
    %1030 = vdwg.mxu0
    %1031 = vmatpush.bf16.msra.mxu0 %v655
    %1032 = vmatpush.bf16.msra.mxu0 %v651
    %1033 = vmatpush.bf16.msra.mxu0 %v647
    %1034 = vmatpush.bf16.msra.mxu0 %v643
    %1035 = vmatpush.bf16.msra.mxu0 %v639
    %1036 = vmatpush.bf16.msra.mxu0 %v635
    %1037 = vmatpush.bf16.msra.mxu0 %v631
    %1038 = vmatpush.bf16.msra.mxu0 %v627
    %1039 = vmatmul.bf16.gmra.mxu0 %v1017
    %v1040 = vpop.f32.mrf.mxu0
    %v1041 = vadd.f32 0.0, %v1040
    %v1042 = vpop.f32.mrf.mxu0
    %1043 = vdwg.mxu0
    %1044 = vmatpush.bf16.msra.mxu0 %v656
    %1045 = vmatpush.bf16.msra.mxu0 %v652
    %1046 = vmatpush.bf16.msra.mxu0 %v648
    %1047 = vmatpush.bf16.msra.mxu0 %v644
    %1048 = vmatpush.bf16.msra.mxu0 %v640
    %1049 = vmatpush.bf16.msra.mxu0 %v636
    %1050 = vmatpush.bf16.msra.mxu0 %v632
    %1051 = vmatpush.bf16.msra.mxu0 %v628
    %1052 = vmatmul.bf16.gmra.mxu0 %v1017
    %v1053 = vpop.f32.mrf.mxu0
    %v1054 = vadd.f32 0.0, %v1053
    %v1055 = vpop.f32.mrf.mxu0
    %1056 = vdwg.mxu0
    %1057 = vmatpush.bf16.msra.mxu0 %v657
    %1058 = vmatpush.bf16.msra.mxu0 %v653
    %1059 = vmatpush.bf16.msra.mxu0 %v649
    %1060 = vmatpush.bf16.msra.mxu0 %v645
    %1061 = vmatpush.bf16.msra.mxu0 %v641
    %1062 = vmatpush.bf16.msra.mxu0 %v637
    %1063 = vmatpush.bf16.msra.mxu0 %v633
    %1064 = vmatpush.bf16.msra.mxu0 %v629
    %1065 = vmatmul.bf16.gmra.mxu0 %v1017
    %v1066 = vpop.f32.mrf.mxu0
    %v1067 = vadd.f32 0.0, %v1066
    %v1068 = vpop.f32.mrf.mxu0
    %1069 = vdwg.mxu0
    %v1070 = vadd.f32 %v1013, %v1028
    %v1071 = vadd.f32 %v1014, %v1041
    %v1072 = vadd.f32 %v1015, %v1054
    %v1073 = vadd.f32 %v1016, %v1067
    %v1074 = vmul.f32 %v1070, 0.5
    %v1075 = vtanh.pop %v1074
    %v1076 = vadd.f32 %v1075, 1.0
    %v1077 = vmul.f32 %v1076, 0.5
    %v1078 = vmul.f32 %v1071, 0.5
    %v1079 = vtanh.pop %v1078
    %v1080 = vadd.f32 %v1079, 1.0
    %v1081 = vmul.f32 %v1080, 0.5
    %v1082 = vtanh.pop %v1072
    %v1083 = vmul.f32 %v1073, 0.5
    %v1084 = vtanh.pop %v1083
    %v1085 = vadd.f32 %v1084, 1.0
    %v1086 = vmul.f32 %v1085, 0.5
    %v1087 = vmul.f32 %v1081, %v1007
    %v1088 = vmul.f32 %v1077, %v1082
    %v1089 = vadd.f32 %v1087, %v1088
    %v1090 = vtanh.pop %v1089
    %v1091 = vmul.f32 %v1086, %v1090
    %s1092 = smul.u32 5, 4
    %s1093 = smul.addr %s1092, 8
    %s1094 = scalar_lea.vmem [#allocation4], %s1093
    %v1095 = vld [vmem:[%s1094] sm:$0xff]
    %v1096 = vld [vmem:[%s1094 + $0x8] sm:$0xff]
    %v1097 = vld [vmem:[%s1094 + $0x10] sm:$0xff]
    %v1098 = vld [vmem:[%s1094 + $0x18] sm:$0xff]
    %v1099 = vpack.c.bf16 %v1091, %v1091
    %1100 = vmatpush.bf16.msra.mxu0 %v654
    %1101 = vmatpush.bf16.msra.mxu0 %v650
    %1102 = vmatpush.bf16.msra.mxu0 %v646
    %1103 = vmatpush.bf16.msra.mxu0 %v642
    %1104 = vmatpush.bf16.msra.mxu0 %v638
    %1105 = vmatpush.bf16.msra.mxu0 %v634
    %1106 = vmatpush.bf16.msra.mxu0 %v630
    %1107 = vmatpush.bf16.msra.mxu0 %v626
    %1108 = vmatmul.bf16.gmra.mxu0 %v1099
    %v1109 = vpop.f32.mrf.mxu0
    %v1110 = vadd.f32 0.0, %v1109
    %v1111 = vpop.f32.mrf.mxu0
    %1112 = vdwg.mxu0
    %1113 = vmatpush.bf16.msra.mxu0 %v655
    %1114 = vmatpush.bf16.msra.mxu0 %v651
    %1115 = vmatpush.bf16.msra.mxu0 %v647
    %1116 = vmatpush.bf16.msra.mxu0 %v643
    %1117 = vmatpush.bf16.msra.mxu0 %v639
    %1118 = vmatpush.bf16.msra.mxu0 %v635
    %1119 = vmatpush.bf16.msra.mxu0 %v631
    %1120 = vmatpush.bf16.msra.mxu0 %v627
    %1121 = vmatmul.bf16.gmra.mxu0 %v1099
    %v1122 = vpop.f32.mrf.mxu0
    %v1123 = vadd.f32 0.0, %v1122
    %v1124 = vpop.f32.mrf.mxu0
    %1125 = vdwg.mxu0
    %1126 = vmatpush.bf16.msra.mxu0 %v656
    %1127 = vmatpush.bf16.msra.mxu0 %v652
    %1128 = vmatpush.bf16.msra.mxu0 %v648
    %1129 = vmatpush.bf16.msra.mxu0 %v644
    %1130 = vmatpush.bf16.msra.mxu0 %v640
    %1131 = vmatpush.bf16.msra.mxu0 %v636
    %1132 = vmatpush.bf16.msra.mxu0 %v632
    %1133 = vmatpush.bf16.msra.mxu0 %v628
    %1134 = vmatmul.bf16.gmra.mxu0 %v1099
    %v1135 = vpop.f32.mrf.mxu0
    %v1136 = vadd.f32 0.0, %v1135
    %v1137 = vpop.f32.mrf.mxu0
    %1138 = vdwg.mxu0
    %1139 = vmatpush.bf16.msra.mxu0 %v657
    %1140 = vmatpush.bf16.msra.mxu0 %v653
    %1141 = vmatpush.bf16.msra.mxu0 %v649
    %1142 = vmatpush.bf16.msra.mxu0 %v645
    %1143 = vmatpush.bf16.msra.mxu0 %v641
    %1144 = vmatpush.bf16.msra.mxu0 %v637
    %1145 = vmatpush.bf16.msra.mxu0 %v633
    %1146 = vmatpush.bf16.msra.mxu0 %v629
    %1147 = vmatmul.bf16.gmra.mxu0 %v1099
    %v1148 = vpop.f32.mrf.mxu0
    %v1149 = vadd.f32 0.0, %v1148
    %v1150 = vpop.f32.mrf.mxu0
    %1151 = vdwg.mxu0
    %v1152 = vadd.f32 %v1095, %v1110
    %v1153 = vadd.f32 %v1096, %v1123
    %v1154 = vadd.f32 %v1097, %v1136
    %v1155 = vadd.f32 %v1098, %v1149
    %v1156 = vmul.f32 %v1152, 0.5
    %v1157 = vtanh.pop %v1156
    %v1158 = vadd.f32 %v1157, 1.0
    %v1159 = vmul.f32 %v1158, 0.5
    %v1160 = vmul.f32 %v1153, 0.5
    %v1161 = vtanh.pop %v1160
    %v1162 = vadd.f32 %v1161, 1.0
    %v1163 = vmul.f32 %v1162, 0.5
    %v1164 = vtanh.pop %v1154
    %v1165 = vmul.f32 %v1155, 0.5
    %v1166 = vtanh.pop %v1165
    %v1167 = vadd.f32 %v1166, 1.0
    %v1168 = vmul.f32 %v1167, 0.5
    %v1169 = vmul.f32 %v1163, %v1089
    %v1170 = vmul.f32 %v1159, %v1164
    %v1171 = vadd.f32 %v1169, %v1170
    %v1172 = vtanh.pop %v1171
    %v1173 = vmul.f32 %v1168, %v1172
    %s1174 = smul.u32 6, 4
    %s1175 = smul.addr %s1174, 8
    %s1176 = scalar_lea.vmem [#allocation4], %s1175
    %v1177 = vld [vmem:[%s1176] sm:$0xff]
    %v1178 = vld [vmem:[%s1176 + $0x8] sm:$0xff]
    %v1179 = vld [vmem:[%s1176 + $0x10] sm:$0xff]
    %v1180 = vld [vmem:[%s1176 + $0x18] sm:$0xff]
    %v1181 = vpack.c.bf16 %v1173, %v1173
    %1182 = vmatpush.bf16.msra.mxu0 %v654
    %1183 = vmatpush.bf16.msra.mxu0 %v650
    %1184 = vmatpush.bf16.msra.mxu0 %v646
    %1185 = vmatpush.bf16.msra.mxu0 %v642
    %1186 = vmatpush.bf16.msra.mxu0 %v638
    %1187 = vmatpush.bf16.msra.mxu0 %v634
    %1188 = vmatpush.bf16.msra.mxu0 %v630
    %1189 = vmatpush.bf16.msra.mxu0 %v626
    %1190 = vmatmul.bf16.gmra.mxu0 %v1181
    %v1191 = vpop.f32.mrf.mxu0
    %v1192 = vadd.f32 0.0, %v1191
    %v1193 = vpop.f32.mrf.mxu0
    %1194 = vdwg.mxu0
    %1195 = vmatpush.bf16.msra.mxu0 %v655
    %1196 = vmatpush.bf16.msra.mxu0 %v651
    %1197 = vmatpush.bf16.msra.mxu0 %v647
    %1198 = vmatpush.bf16.msra.mxu0 %v643
    %1199 = vmatpush.bf16.msra.mxu0 %v639
    %1200 = vmatpush.bf16.msra.mxu0 %v635
    %1201 = vmatpush.bf16.msra.mxu0 %v631
    %1202 = vmatpush.bf16.msra.mxu0 %v627
    %1203 = vmatmul.bf16.gmra.mxu0 %v1181
    %v1204 = vpop.f32.mrf.mxu0
    %v1205 = vadd.f32 0.0, %v1204
    %v1206 = vpop.f32.mrf.mxu0
    %1207 = vdwg.mxu0
    %1208 = vmatpush.bf16.msra.mxu0 %v656
    %1209 = vmatpush.bf16.msra.mxu0 %v652
    %1210 = vmatpush.bf16.msra.mxu0 %v648
    %1211 = vmatpush.bf16.msra.mxu0 %v644
    %1212 = vmatpush.bf16.msra.mxu0 %v640
    %1213 = vmatpush.bf16.msra.mxu0 %v636
    %1214 = vmatpush.bf16.msra.mxu0 %v632
    %1215 = vmatpush.bf16.msra.mxu0 %v628
    %1216 = vmatmul.bf16.gmra.mxu0 %v1181
    %v1217 = vpop.f32.mrf.mxu0
    %v1218 = vadd.f32 0.0, %v1217
    %v1219 = vpop.f32.mrf.mxu0
    %1220 = vdwg.mxu0
    %1221 = vmatpush.bf16.msra.mxu0 %v657
    %1222 = vmatpush.bf16.msra.mxu0 %v653
    %1223 = vmatpush.bf16.msra.mxu0 %v649
    %1224 = vmatpush.bf16.msra.mxu0 %v645
    %1225 = vmatpush.bf16.msra.mxu0 %v641
    %1226 = vmatpush.bf16.msra.mxu0 %v637
    %1227 = vmatpush.bf16.msra.mxu0 %v633
    %1228 = vmatpush.bf16.msra.mxu0 %v629
    %1229 = vmatmul.bf16.gmra.mxu0 %v1181
    %v1230 = vpop.f32.mrf.mxu0
    %v1231 = vadd.f32 0.0, %v1230
    %v1232 = vpop.f32.mrf.mxu0
    %1233 = vdwg.mxu0
    %v1234 = vadd.f32 %v1177, %v1192
    %v1235 = vadd.f32 %v1178, %v1205
    %v1236 = vadd.f32 %v1179, %v1218
    %v1237 = vadd.f32 %v1180, %v1231
    %v1238 = vmul.f32 %v1234, 0.5
    %v1239 = vtanh.pop %v1238
    %v1240 = vadd.f32 %v1239, 1.0
    %v1241 = vmul.f32 %v1240, 0.5
    %v1242 = vmul.f32 %v1235, 0.5
    %v1243 = vtanh.pop %v1242
    %v1244 = vadd.f32 %v1243, 1.0
    %v1245 = vmul.f32 %v1244, 0.5
    %v1246 = vtanh.pop %v1236
    %v1247 = vmul.f32 %v1237, 0.5
    %v1248 = vtanh.pop %v1247
    %v1249 = vadd.f32 %v1248, 1.0
    %v1250 = vmul.f32 %v1249, 0.5
    %v1251 = vmul.f32 %v1245, %v1171
    %v1252 = vmul.f32 %v1241, %v1246
    %v1253 = vadd.f32 %v1251, %v1252
    %v1254 = vtanh.pop %v1253
    %v1255 = vmul.f32 %v1250, %v1254
    %s1256 = smul.u32 7, 4
    %s1257 = smul.addr %s1256, 8
    %s1258 = scalar_lea.vmem [#allocation4], %s1257
    %v1259 = vld [vmem:[%s1258] sm:$0xff]
    %v1260 = vld [vmem:[%s1258 + $0x8] sm:$0xff]
    %v1261 = vld [vmem:[%s1258 + $0x10] sm:$0xff]
    %v1262 = vld [vmem:[%s1258 + $0x18] sm:$0xff]
    %v1263 = vpack.c.bf16 %v1255, %v1255
    %1264 = vmatpush.bf16.msra.mxu0 %v654
    %1265 = vmatpush.bf16.msra.mxu0 %v650
    %1266 = vmatpush.bf16.msra.mxu0 %v646
    %1267 = vmatpush.bf16.msra.mxu0 %v642
    %1268 = vmatpush.bf16.msra.mxu0 %v638
    %1269 = vmatpush.bf16.msra.mxu0 %v634
    %1270 = vmatpush.bf16.msra.mxu0 %v630
    %1271 = vmatpush.bf16.msra.mxu0 %v626
    %1272 = vmatmul.bf16.gmra.mxu0 %v1263
    %v1273 = vpop.f32.mrf.mxu0
    %v1274 = vadd.f32 0.0, %v1273
    %v1275 = vpop.f32.mrf.mxu0
    %1276 = vdwg.mxu0
    %1277 = vmatpush.bf16.msra.mxu0 %v655
    %1278 = vmatpush.bf16.msra.mxu0 %v651
    %1279 = vmatpush.bf16.msra.mxu0 %v647
    %1280 = vmatpush.bf16.msra.mxu0 %v643
    %1281 = vmatpush.bf16.msra.mxu0 %v639
    %1282 = vmatpush.bf16.msra.mxu0 %v635
    %1283 = vmatpush.bf16.msra.mxu0 %v631
    %1284 = vmatpush.bf16.msra.mxu0 %v627
    %1285 = vmatmul.bf16.gmra.mxu0 %v1263
    %v1286 = vpop.f32.mrf.mxu0
    %v1287 = vadd.f32 0.0, %v1286
    %v1288 = vpop.f32.mrf.mxu0
    %1289 = vdwg.mxu0
    %1290 = vmatpush.bf16.msra.mxu0 %v656
    %1291 = vmatpush.bf16.msra.mxu0 %v652
    %1292 = vmatpush.bf16.msra.mxu0 %v648
    %1293 = vmatpush.bf16.msra.mxu0 %v644
    %1294 = vmatpush.bf16.msra.mxu0 %v640
    %1295 = vmatpush.bf16.msra.mxu0 %v636
    %1296 = vmatpush.bf16.msra.mxu0 %v632
    %1297 = vmatpush.bf16.msra.mxu0 %v628
    %1298 = vmatmul.bf16.gmra.mxu0 %v1263
    %v1299 = vpop.f32.mrf.mxu0
    %v1300 = vadd.f32 0.0, %v1299
    %v1301 = vpop.f32.mrf.mxu0
    %1302 = vdwg.mxu0
    %1303 = vmatpush.bf16.msra.mxu0 %v657
    %1304 = vmatpush.bf16.msra.mxu0 %v653
    %1305 = vmatpush.bf16.msra.mxu0 %v649
    %1306 = vmatpush.bf16.msra.mxu0 %v645
    %1307 = vmatpush.bf16.msra.mxu0 %v641
    %1308 = vmatpush.bf16.msra.mxu0 %v637
    %1309 = vmatpush.bf16.msra.mxu0 %v633
    %1310 = vmatpush.bf16.msra.mxu0 %v629
    %1311 = vmatmul.bf16.gmra.mxu0 %v1263
    %v1312 = vpop.f32.mrf.mxu0
    %v1313 = vadd.f32 0.0, %v1312
    %v1314 = vpop.f32.mrf.mxu0
    %1315 = vdwg.mxu0
    %v1316 = vadd.f32 %v1259, %v1274
    %v1317 = vadd.f32 %v1260, %v1287
    %v1318 = vadd.f32 %v1261, %v1300
    %v1319 = vadd.f32 %v1262, %v1313
    %v1320 = vmul.f32 %v1316, 0.5
    %v1321 = vtanh.pop %v1320
    %v1322 = vadd.f32 %v1321, 1.0
    %v1323 = vmul.f32 %v1322, 0.5
    %v1324 = vmul.f32 %v1317, 0.5
    %v1325 = vtanh.pop %v1324
    %v1326 = vadd.f32 %v1325, 1.0
    %v1327 = vmul.f32 %v1326, 0.5
    %v1328 = vtanh.pop %v1318
    %v1329 = vmul.f32 %v1319, 0.5
    %v1330 = vtanh.pop %v1329
    %v1331 = vadd.f32 %v1330, 1.0
    %v1332 = vmul.f32 %v1331, 0.5
    %v1333 = vmul.f32 %v1327, %v1253
    %v1334 = vmul.f32 %v1323, %v1328
    %v1335 = vadd.f32 %v1333, %v1334
    %v1336 = vtanh.pop %v1335
    %v1337 = vmul.f32 %v1332, %v1336
    %1338 = vst [vmem:[#allocation2] sm:$0xff] %v1337
    %1339 = vst [vmem:[#allocation3] sm:$0xff] %v1335
    // Predicated region
    $region50: #{tpu_custom_call.1} parent=1 // pred_check
      %p1340 = pneg %p100
    $region51: #{tpu_custom_call.1} parent=1 // pred_check_branch
      %1342 = sbr.rel (%p1340) target = $region53
    $region52: #{tpu_custom_call.1} parent=1 // pred_region
      %v1343 = vld [vmem:[#allocation2] sm:$0xff]
      %v1344 = vpack.c.bf16 %v1343, %v1343
      %v1345 = vld [vmem:[#allocation13] sm:$0xf]
      %v1346 = vld [vmem:[#allocation13 + $0x4] sm:$0xf]
      %v1347 = vld [vmem:[#allocation13 + $0x8] sm:$0xf]
      %v1348 = vld [vmem:[#allocation13 + $0xc] sm:$0xf]
      %v1349 = vld [vmem:[#allocation13 + $0x10] sm:$0xf]
      %v1350 = vld [vmem:[#allocation13 + $0x14] sm:$0xf]
      %v1351 = vld [vmem:[#allocation13 + $0x18] sm:$0xf]
      %v1352 = vld [vmem:[#allocation13 + $0x1c] sm:$0xf]
      %v1353 = vld [vmem:[#allocation13 + $0x20] sm:$0xf]
      %v1354 = vld [vmem:[#allocation13 + $0x24] sm:$0xf]
      %v1355 = vld [vmem:[#allocation13 + $0x28] sm:$0xf]
      %v1356 = vld [vmem:[#allocation13 + $0x2c] sm:$0xf]
      %v1357 = vld [vmem:[#allocation13 + $0x30] sm:$0xf]
      %v1358 = vld [vmem:[#allocation13 + $0x34] sm:$0xf]
      %v1359 = vld [vmem:[#allocation13 + $0x38] sm:$0xf]
      %v1360 = vld [vmem:[#allocation13 + $0x3c] sm:$0xf]
      %v1361 = vld [vmem:[%s5] sm:$0x1]
      %v1363 = vperm.slane %v1361, 0
      %v1381 = vunpack.c.l.b16 %v1345
      %v1382 = vunpack.c.l.b16 %v1346
      %v1383 = vunpack.c.l.b16 %v1347
      %v1384 = vunpack.c.l.b16 %v1348
      %v1385 = vunpack.c.l.b16 %v1349
      %v1386 = vunpack.c.l.b16 %v1350
      %v1387 = vunpack.c.l.b16 %v1351
      %v1388 = vunpack.c.l.b16 %v1352
      %v1389 = vunpack.c.l.b16 %v1353
      %v1390 = vunpack.c.l.b16 %v1354
      %v1391 = vunpack.c.l.b16 %v1355
      %v1392 = vunpack.c.l.b16 %v1356
      %v1393 = vunpack.c.l.b16 %v1357
      %v1394 = vunpack.c.l.b16 %v1358
      %v1395 = vunpack.c.l.b16 %v1359
      %v1396 = vunpack.c.l.b16 %v1360
      %v1397 = vpack.c.b16 %v1382, %v1381
      %v1398 = vpack.c.b16 %v1384, %v1383
      %v1399 = vpack.c.b16 %v1386, %v1385
      %v1400 = vpack.c.b16 %v1388, %v1387
      %v1401 = vpack.c.b16 %v1390, %v1389
      %v1402 = vpack.c.b16 %v1392, %v1391
      %v1403 = vpack.c.b16 %v1394, %v1393
      %v1404 = vpack.c.b16 %v1396, %v1395
      %1413 = vmatpush.bf16.msra.mxu0 %v1404
      %1414 = vmatpush.bf16.msra.mxu0 %v1403
      %1415 = vmatpush.bf16.msra.mxu0 %v1402
      %1416 = vmatpush.bf16.msra.mxu0 %v1401
      %1417 = vmatpush.bf16.msra.mxu0 %v1400
      %1418 = vmatpush.bf16.msra.mxu0 %v1399
      %1419 = vmatpush.bf16.msra.mxu0 %v1398
      %1420 = vmatpush.bf16.msra.mxu0 %v1397
      %1421 = vmatmul.bf16.gmra.mxu0 %v1344
      %v1422 = vpop.f32.mrf.mxu0
      %v1423 = vadd.f32 %v1363, %v1422
      %v1424 = vpop.f32.mrf.mxu0
      %1425 = vdwg.mxu0
      %1426 = vst [vmem:[#allocation14] sm:$0xff] %v1423
    $region53: #{tpu_custom_call.1} parent=1 // pred_fallthru
      _
    // Predicated region
    $region54: #{tpu_custom_call.1} parent=1 // pred_check
      _
    $region55: #{tpu_custom_call.1} parent=1 // pred_check_branch
      %1428 = sbr.rel (0) target = $region57
    $region56: #{tpu_custom_call.1} parent=1 // pred_region
      %1430 = vsyncadd [#allocation7], 0
      %s1432 = sshll.u32 [#allocation14], 4
      %s1433 = int_to_ptr.vmem [resolvable:$true] %s1432
      %s1434 = sshll.u32 %s6, 4
      %s1435 = int_to_ptr.hbm [resolvable:$true] %s1434
      %1437 = dma.vmem_to_hbm [thread:$0]  %s1433, 128, %s1435, [#allocation7]
    $region57: #{tpu_custom_call.1} parent=1 // pred_fallthru
      _
    // Predicated region
    $region58: #{tpu_custom_call.1} parent=1 // pred_check
      _
    $region59: #{tpu_custom_call.1} parent=1 // pred_check_branch
      %1439 = sbr.rel (0) target = $region61
    $region60: #{tpu_custom_call.1} parent=1 // pred_region
      %1441 = dma.done [#allocation7], 128
    $region61: #{tpu_custom_call.1} parent=1 // pred_fallthru
      _
    %1442 = vsyncpa [#allocation6], 1
    %1443 = vsyncpa [#allocation9], 1
    %1444 = vsyncpa [#allocation12], 1
    %1445 = vsyncpa [#allocation7], 1

</llo_original>
